<compile_context>
chip_gen: v5e
topology: v5e:2x2
jax: 0.10.0
libtpu: 0.0.40
codegen_flags: <defaults>
</compile_context>

<pallas_src>
import jax
import jax.numpy as jnp
from jax.experimental import pallas as pl
from jax.experimental.pallas import tpu as pltpu


LATENT_NODES = 8
HIDDEN = 1000
OUT = 1

# padded feature sizes
HID_P = 1024   # lane-aligned hidden width
OUT_P = 8      # small lane pad for the single output column

MAX_TB = 256   # rows per batch tile for large batches


def _round_up(x, m):
    return ((x + m - 1) // m) * m


def _mlp_kernel(x_ref, w1_ref, b1_ref, w2_ref, b2_ref, w3_ref, b3_ref, o_ref):
    # One batch tile per grid step; all weights are VMEM resident.
    x = x_ref[...].astype(jnp.bfloat16)

    # Linear 1 + (dropout = identity, eval) + ReLU
    h1 = jnp.dot(x, w1_ref[...], preferred_element_type=jnp.float32) + b1_ref[...]
    h1 = jnp.maximum(h1, 0.0)

    # Linear 2 + (dropout = identity, eval) + ReLU
    h2 = jnp.dot(h1.astype(jnp.bfloat16), w2_ref[...],
                 preferred_element_type=jnp.float32) + b2_ref[...]
    h2 = jnp.maximum(h2, 0.0)

    # Linear 3 + Sigmoid
    logits = jnp.dot(h2.astype(jnp.bfloat16), w3_ref[...],
                     preferred_element_type=jnp.float32) + b3_ref[...]
    o_ref[...] = 1.0 / (1.0 + jnp.exp(-logits))


def prepare_params(params):
    """Pad + cast parameters ONCE (outside the per-call hot path).

    Weights arrive as (in_features, out_features) -- already transposed
    relative to PyTorch's nn.Linear storage. Weights are cast to bf16;
    biases stay f32. Zero padding is inert through matmul/ReLU.
    """
    w1, b1, w2, b2, w3, b3 = params
    w1_p = jnp.zeros((LATENT_NODES, HID_P), jnp.bfloat16).at[:, :HIDDEN].set(
        w1.astype(jnp.bfloat16))
    b1_p = jnp.zeros((1, HID_P), jnp.float32).at[0, :HIDDEN].set(b1)
    w2_p = jnp.zeros((HID_P, HID_P), jnp.bfloat16).at[:HIDDEN, :HIDDEN].set(
        w2.astype(jnp.bfloat16))
    b2_p = jnp.zeros((1, HID_P), jnp.float32).at[0, :HIDDEN].set(b2)
    w3_p = jnp.zeros((HID_P, OUT_P), jnp.bfloat16).at[:HIDDEN, :OUT].set(
        w3.astype(jnp.bfloat16))
    b3_p = jnp.zeros((1, OUT_P), jnp.float32).at[0, :OUT].set(b3)
    return (w1_p, b1_p, w2_p, b2_p, w3_p, b3_p)


@jax.jit
def discriminator_forward(x, padded_params):
    """x: (B, LATENT_NODES) float32 -> (B, 1) float32."""
    w1_p, b1_p, w2_p, b2_p, w3_p, b3_p = padded_params
    B = x.shape[0]

    # batch tile: MAX_TB rows for large batches, otherwise the (8-aligned) batch
    TB = MAX_TB if B >= MAX_TB else _round_up(max(B, 1), 8)
    B_p = _round_up(max(B, 1), TB)
    n_tiles = B_p // TB

    # only the (tiny) activation is padded per call
    x_p = jnp.zeros((B_p, LATENT_NODES), jnp.float32).at[:B, :].set(x)

    out_p = pl.pallas_call(
        _mlp_kernel,
        out_shape=jax.ShapeDtypeStruct((B_p, OUT_P), jnp.float32),
        grid=(n_tiles,),
        in_specs=[
            pl.BlockSpec((TB, LATENT_NODES), lambda i: (i, 0)),     # x tile
            pl.BlockSpec((LATENT_NODES, HID_P), lambda i: (0, 0)),  # W1 (resident)
            pl.BlockSpec((1, HID_P), lambda i: (0, 0)),             # b1
            pl.BlockSpec((HID_P, HID_P), lambda i: (0, 0)),         # W2 (resident)
            pl.BlockSpec((1, HID_P), lambda i: (0, 0)),             # b2
            pl.BlockSpec((HID_P, OUT_P), lambda i: (0, 0)),         # W3 (resident)
            pl.BlockSpec((1, OUT_P), lambda i: (0, 0)),             # b3
        ],
        out_specs=pl.BlockSpec((TB, OUT_P), lambda i: (i, 0)),
        compiler_params=pltpu.CompilerParams(
            dimension_semantics=("parallel",)),
    )(x_p, w1_p, b1_p, w2_p, b2_p, w3_p, b3_p)

    return out_p[:B, :OUT]


def init_params(key):
    """Deterministic init matching nn.Linear's U(-1/sqrt(fan_in), 1/sqrt(fan_in)).

    Weights are returned already transposed to (in_features, out_features).
    """
    def linear(key, fan_in, fan_out):
        kw, kb = jax.random.split(key)
        bound = 1.0 / jnp.sqrt(fan_in)
        w = jax.random.uniform(kw, (fan_in, fan_out), jnp.float32, -bound, bound)
        b = jax.random.uniform(kb, (fan_out,), jnp.float32, -bound, bound)
        return w, b

    k1, k2, k3 = jax.random.split(key, 3)
    w1, b1 = linear(k1, LATENT_NODES, HIDDEN)
    w2, b2 = linear(k2, HIDDEN, HIDDEN)
    w3, b3 = linear(k3, HIDDEN, OUT)
    return (w1, b1, w2, b2, w3, b3)


def _reference_forward(x, params):
    """Plain-JAX reference with the same bf16-weight / f32-accumulate recipe."""
    w1, b1, w2, b2, w3, b3 = params
    w1b, w2b, w3b = (w.astype(jnp.bfloat16) for w in (w1, w2, w3))
    h1 = jnp.maximum(
        jnp.dot(x.astype(jnp.bfloat16), w1b, preferred_element_type=jnp.float32) + b1, 0.0)
    h2 = jnp.maximum(
        jnp.dot(h1.astype(jnp.bfloat16), w2b, preferred_element_type=jnp.float32) + b2, 0.0)
    logits = jnp.dot(h2.astype(jnp.bfloat16), w3b,
                     preferred_element_type=jnp.float32) + b3
    return 1.0 / (1.0 + jnp.exp(-logits))


if __name__ == "__main__":
    key = jax.random.PRNGKey(0)
    kx, kp = jax.random.split(key)

    batch = 4
    x = jax.random.normal(kx, (batch, LATENT_NODES), jnp.float32)
    params = init_params(kp)

    # pad + cast weights once, outside the hot path
    padded_params = jax.block_until_ready(prepare_params(params))

    out = discriminator_forward(x, padded_params)
    out = jax.block_until_ready(out)

    ref = _reference_forward(x, params)
    assert out.shape == (batch, 1), out.shape
    assert jnp.allclose(out, ref, atol=2e-3, rtol=2e-3), (out, ref)

    print("KERNEL_OK")
</pallas_src>

<mosaic_0001>
module attributes {stable_mosaic.version = 11 : i64} {
  func.func @_mlp_kernel(%arg0: i32, %arg1: memref<8x8xf32, #tpu.memory_space<vmem>>, %arg2: memref<8x1024xbf16, #tpu.memory_space<vmem>>, %arg3: memref<1x1024xf32, #tpu.memory_space<vmem>>, %arg4: memref<1024x1024xbf16, #tpu.memory_space<vmem>>, %arg5: memref<1x1024xf32, #tpu.memory_space<vmem>>, %arg6: memref<1024x8xbf16, #tpu.memory_space<vmem>>, %arg7: memref<1x8xf32, #tpu.memory_space<vmem>>, %arg8: memref<8x8xf32, #tpu.memory_space<vmem>>) attributes {dimension_semantics = [#tpu.dimension_semantics<parallel>], iteration_bounds = array<i64: 1>, scalar_prefetch = 0 : i64, scratch_operands = 0 : i64, tpu.core_type = #tpu.core_type<tc>, window_params = [{transform_indices = @transform_0, window_bounds = array<i64: 8, 8>}, {pipeline_mode = #tpu.pipeline_mode<synchronous>, transform_indices = @transform_1, window_bounds = array<i64: 8, 1024>}, {pipeline_mode = #tpu.pipeline_mode<synchronous>, transform_indices = @transform_2, window_bounds = array<i64: 1, 1024>}, {pipeline_mode = #tpu.pipeline_mode<synchronous>, transform_indices = @transform_3, window_bounds = array<i64: 1024, 1024>}, {pipeline_mode = #tpu.pipeline_mode<synchronous>, transform_indices = @transform_4, window_bounds = array<i64: 1, 1024>}, {pipeline_mode = #tpu.pipeline_mode<synchronous>, transform_indices = @transform_5, window_bounds = array<i64: 1024, 8>}, {pipeline_mode = #tpu.pipeline_mode<synchronous>, transform_indices = @transform_6, window_bounds = array<i64: 1, 8>}, {transform_indices = @transform_7, window_bounds = array<i64: 8, 8>}]} {
    %c0 = arith.constant 0 : index
    %c0_0 = arith.constant 0 : index
    %0 = vector.load %arg1[%c0, %c0_0] : memref<8x8xf32, #tpu.memory_space<vmem>>, vector<8x8xf32>
    %1 = arith.truncf %0 : vector<8x8xf32> to vector<8x8xbf16>
    %c0_1 = arith.constant 0 : index
    %c0_2 = arith.constant 0 : index
    %2 = vector.load %arg2[%c0_1, %c0_2] : memref<8x1024xbf16, #tpu.memory_space<vmem>>, vector<8x1024xbf16>
    %cst = arith.constant dense<0.000000e+00> : vector<8x1024xf32>
    %3 = tpu.matmul %1, %2, %cst {dimension_numbers = #tpu.dot_dimension_numbers<[1], [0], [0], [1], [0, 0, 1, 1], [], []>} : vector<8x8xbf16>, vector<8x1024xbf16>, vector<8x1024xf32> -> vector<8x1024xf32>
    %c0_3 = arith.constant 0 : index
    %c0_4 = arith.constant 0 : index
    %4 = vector.load %arg3[%c0_3, %c0_4] : memref<1x1024xf32, #tpu.memory_space<vmem>>, vector<1x1024xf32>
    %5 = vector.broadcast %4 : vector<1x1024xf32> to vector<8x1024xf32>
    %6 = arith.addf %3, %5 : vector<8x1024xf32>
    %cst_5 = arith.constant 0.000000e+00 : f32
    %7 = vector.broadcast %cst_5 : f32 to vector<8x1024xf32>
    %8 = arith.maximumf %6, %7 : vector<8x1024xf32>
    %9 = arith.truncf %8 : vector<8x1024xf32> to vector<8x1024xbf16>
    %c0_6 = arith.constant 0 : index
    %c0_7 = arith.constant 0 : index
    %10 = vector.load %arg4[%c0_6, %c0_7] : memref<1024x1024xbf16, #tpu.memory_space<vmem>>, vector<1024x1024xbf16>
    %cst_8 = arith.constant dense<0.000000e+00> : vector<8x1024xf32>
    %11 = tpu.matmul %9, %10, %cst_8 {dimension_numbers = #tpu.dot_dimension_numbers<[1], [0], [0], [1], [0, 0, 1, 1], [], []>} : vector<8x1024xbf16>, vector<1024x1024xbf16>, vector<8x1024xf32> -> vector<8x1024xf32>
    %c0_9 = arith.constant 0 : index
    %c0_10 = arith.constant 0 : index
    %12 = vector.load %arg5[%c0_9, %c0_10] : memref<1x1024xf32, #tpu.memory_space<vmem>>, vector<1x1024xf32>
    %13 = vector.broadcast %12 : vector<1x1024xf32> to vector<8x1024xf32>
    %14 = arith.addf %11, %13 : vector<8x1024xf32>
    %cst_11 = arith.constant 0.000000e+00 : f32
    %15 = vector.broadcast %cst_11 : f32 to vector<8x1024xf32>
    %16 = arith.maximumf %14, %15 : vector<8x1024xf32>
    %17 = arith.truncf %16 : vector<8x1024xf32> to vector<8x1024xbf16>
    %c0_12 = arith.constant 0 : index
    %c0_13 = arith.constant 0 : index
    %18 = vector.load %arg6[%c0_12, %c0_13] : memref<1024x8xbf16, #tpu.memory_space<vmem>>, vector<1024x8xbf16>
    %cst_14 = arith.constant dense<0.000000e+00> : vector<8x8xf32>
    %19 = tpu.matmul %17, %18, %cst_14 {dimension_numbers = #tpu.dot_dimension_numbers<[1], [0], [0], [1], [0, 0, 1, 1], [], []>} : vector<8x1024xbf16>, vector<1024x8xbf16>, vector<8x8xf32> -> vector<8x8xf32>
    %c0_15 = arith.constant 0 : index
    %c0_16 = arith.constant 0 : index
    %20 = vector.load %arg7[%c0_15, %c0_16] : memref<1x8xf32, #tpu.memory_space<vmem>>, vector<1x8xf32>
    %21 = vector.broadcast %20 : vector<1x8xf32> to vector<8x8xf32>
    %22 = arith.addf %19, %21 : vector<8x8xf32>
    %cst_17 = arith.constant 0.000000e+00 : f32
    %23 = vector.broadcast %cst_17 : f32 to vector<8x8xf32>
    %24 = arith.subf %23, %22 : vector<8x8xf32>
    %25 = math.exp %24 : vector<8x8xf32>
    %cst_18 = arith.constant 1.000000e+00 : f32
    %26 = vector.broadcast %cst_18 : f32 to vector<8x8xf32>
    %27 = arith.addf %26, %25 : vector<8x8xf32>
    %cst_19 = arith.constant 1.000000e+00 : f32
    %28 = vector.broadcast %cst_19 : f32 to vector<8x8xf32>
    %29 = arith.divf %28, %27 : vector<8x8xf32>
    %c0_20 = arith.constant 0 : index
    %c0_21 = arith.constant 0 : index
    %30 = vector.load %arg8[%c0_20, %c0_21] : memref<8x8xf32, #tpu.memory_space<vmem>>, vector<8x8xf32>
    tpu.vector_store %arg8[%c0_20, %c0_21], %29 {strides = array<i32>} : memref<8x8xf32, #tpu.memory_space<vmem>>, vector<8x8xf32>,
    return
  }
  func.func @transform_0(%arg0: i32) -> (i32, i32) {
    %c0_i32 = arith.constant 0 : i32
    %c0_i32_0 = arith.constant 0 : i32
    return %arg0, %c0_i32 : i32, i32
  }
  func.func @transform_1(%arg0: i32) -> (i32, i32) {
    %c0_i32 = arith.constant 0 : i32
    %c0_i32_0 = arith.constant 0 : i32
    %c0_i32_1 = arith.constant 0 : i32
    return %c0_i32, %c0_i32_0 : i32, i32
  }
  func.func @transform_2(%arg0: i32) -> (i32, i32) {
    %c0_i32 = arith.constant 0 : i32
    %c0_i32_0 = arith.constant 0 : i32
    %c0_i32_1 = arith.constant 0 : i32
    return %c0_i32, %c0_i32_0 : i32, i32
  }
  func.func @transform_3(%arg0: i32) -> (i32, i32) {
    %c0_i32 = arith.constant 0 : i32
    %c0_i32_0 = arith.constant 0 : i32
    %c0_i32_1 = arith.constant 0 : i32
    return %c0_i32, %c0_i32_0 : i32, i32
  }
  func.func @transform_4(%arg0: i32) -> (i32, i32) {
    %c0_i32 = arith.constant 0 : i32
    %c0_i32_0 = arith.constant 0 : i32
    %c0_i32_1 = arith.constant 0 : i32
    return %c0_i32, %c0_i32_0 : i32, i32
  }
  func.func @transform_5(%arg0: i32) -> (i32, i32) {
    %c0_i32 = arith.constant 0 : i32
    %c0_i32_0 = arith.constant 0 : i32
    %c0_i32_1 = arith.constant 0 : i32
    return %c0_i32, %c0_i32_0 : i32, i32
  }
  func.func @transform_6(%arg0: i32) -> (i32, i32) {
    %c0_i32 = arith.constant 0 : i32
    %c0_i32_0 = arith.constant 0 : i32
    %c0_i32_1 = arith.constant 0 : i32
    return %c0_i32, %c0_i32_0 : i32, i32
  }
  func.func @transform_7(%arg0: i32) -> (i32, i32) {
    %c0_i32 = arith.constant 0 : i32
    %c0_i32_0 = arith.constant 0 : i32
    return %arg0, %c0_i32 : i32, i32
  }
}

</mosaic_0001>

<llo_original>
// kernel: discriminator_forward.1
$region0: #{discriminator_forward.1}
  #allocation0 [shape = 'u32[]', space=smem, size = 0x4, offset = 0x4, fixed_abs, tag = 'smem constant byte address 0x4 - core index']
  #allocation1 [shape = 'u32[72,128]{1,0:T(1,128)}', space=vmem, size = 0x9000, scoped, tag = 'internal scratch']
  %s0 = inlined_call_operand.vmem [shape: f32[8,8], index: 0, kind: input, shape index: {}]
  %s1 = inlined_call_operand.hbm [shape: bf16[8,1024], index: 1, kind: input, shape index: {}]
  %s2 = inlined_call_operand.hbm [shape: f32[1,1024], index: 2, kind: input, shape index: {}]
  %s3 = inlined_call_operand.hbm [shape: bf16[1024,1024], index: 3, kind: input, shape index: {}]
  %s4 = inlined_call_operand.hbm [shape: f32[1,1024], index: 4, kind: input, shape index: {}]
  %s5 = inlined_call_operand.vmem [shape: bf16[1024,8], index: 5, kind: input, shape index: {}]
  %s6 = inlined_call_operand.hbm [shape: f32[1,8], index: 6, kind: input, shape index: {}]
  %s7 = inlined_call_operand.vmem [shape: f32[8,8], index: 7, kind: output, shape index: {}]
  %s8 = sld [smem:[#allocation0]]
  $region58: #{discriminator_forward.1} parent=0
    _
  %s10 = ssub.s32 1, %s8
  %s11 = scalar_select 0, %s10, %s8
  $region1: #{discriminator_forward.1} parent=0
    #allocation2 [shape = 'u8[16384]{0}', space=vmem, size = 0x4000, scoped, tag = 'input window, operand 1, single buffered']
    #allocation3 [shape = 's32[1]{0}', space=sflag, size = 0x4, scoped, tag = 'scoped memory for discriminator_forward.1']
    #allocation4 [shape = 'u8[4096]{0}', space=vmem, size = 0x1000, scoped, tag = 'input window, operand 2, single buffered']
    #allocation5 [shape = 's32[1]{0}', space=sflag, size = 0x4, scoped, tag = 'scoped memory for discriminator_forward.1']
    #allocation6 [shape = 'u8[2097152]{0}', space=vmem, size = 0x200000, scoped, tag = 'input window, operand 3, single buffered']
    #allocation7 [shape = 'u8[4096]{0}', space=vmem, size = 0x1000, scoped, tag = 'input window, operand 4, single buffered']
    #allocation8 [shape = 's32[1]{0}', space=sflag, size = 0x4, scoped, tag = 'scoped memory for discriminator_forward.1']
    #allocation9 [shape = 'u8[512]{0}', space=vmem, size = 0x400, scoped, tag = 'input window, operand 6, single buffered']
    %12 = vsyncpa [#allocation3], 0
    %13 = vsyncpa [#allocation5], 0
    %14 = vsyncpa [#allocation8], 0
    // Predicated region
    $region2: #{discriminator_forward.1} parent=1 // pred_check
      _
    $region3: #{discriminator_forward.1} parent=1 // pred_check_branch
      %16 = sbr.rel (0) target = $region5
    $region4: #{discriminator_forward.1} parent=1 // pred_region
      _
    $region5: #{discriminator_forward.1} parent=1 // pred_fallthru
      _
    // Predicated region
    $region6: #{discriminator_forward.1} parent=1 // pred_check
      _
    $region7: #{discriminator_forward.1} parent=1 // pred_check_branch
      %18 = sbr.rel (0) target = $region9
    $region8: #{discriminator_forward.1} parent=1 // pred_region
      %20 = vsyncadd [#allocation3], 0
      %s22 = sshll.u32 %s1, 4
      %s23 = int_to_ptr.hbm [resolvable:$true] %s22
      %s24 = sshll.u32 [#allocation2], 4
      %s25 = int_to_ptr.vmem [resolvable:$true] %s24
      %27 = dma.hbm_to_vmem [thread:$0]  %s23, 512, %s25, [#allocation3]
    $region9: #{discriminator_forward.1} parent=1 // pred_fallthru
      _
    // Predicated region
    $region10: #{discriminator_forward.1} parent=1 // pred_check
      _
    $region11: #{discriminator_forward.1} parent=1 // pred_check_branch
      %29 = sbr.rel (0) target = $region13
    $region12: #{discriminator_forward.1} parent=1 // pred_region
      %31 = vsyncadd [#allocation5], 0
      %s33 = sshll.u32 %s2, 4
      %s34 = int_to_ptr.hbm [resolvable:$true] %s33
      %s35 = sshll.u32 [#allocation4], 4
      %s36 = int_to_ptr.vmem [resolvable:$true] %s35
      %38 = dma.hbm_to_vmem [thread:$0]  %s34, 128, %s36, [#allocation5]
    $region13: #{discriminator_forward.1} parent=1 // pred_fallthru
      _
    // Predicated region
    $region14: #{discriminator_forward.1} parent=1 // pred_check
      _
    $region15: #{discriminator_forward.1} parent=1 // pred_check_branch
      %40 = sbr.rel (0) target = $region17
    $region16: #{discriminator_forward.1} parent=1 // pred_region
      %42 = vsyncadd [#allocation5], 0
      %s43 = sshll.u32 %s3, 4
      %s44 = int_to_ptr.hbm [resolvable:$true] %s43
      %s45 = sshll.u32 [#allocation6], 4
      %s46 = int_to_ptr.vmem [resolvable:$true] %s45
      %51 = dma.hbm_to_vmem [thread:$0]  %s44, 65536, %s46, [#allocation5], 512, 512, 32
    $region17: #{discriminator_forward.1} parent=1 // pred_fallthru
      _
    // Predicated region
    $region18: #{discriminator_forward.1} parent=1 // pred_check
      _
    $region19: #{discriminator_forward.1} parent=1 // pred_check_branch
      %53 = sbr.rel (0) target = $region21
    $region20: #{discriminator_forward.1} parent=1 // pred_region
      %55 = vsyncadd [#allocation8], 0
      %s57 = sshll.u32 %s4, 4
      %s58 = int_to_ptr.hbm [resolvable:$true] %s57
      %s59 = sshll.u32 [#allocation7], 4
      %s60 = int_to_ptr.vmem [resolvable:$true] %s59
      %62 = dma.hbm_to_vmem [thread:$0]  %s58, 128, %s60, [#allocation8]
    $region21: #{discriminator_forward.1} parent=1 // pred_fallthru
      _
    // Predicated region
    $region22: #{discriminator_forward.1} parent=1 // pred_check
      _
    $region23: #{discriminator_forward.1} parent=1 // pred_check_branch
      %64 = sbr.rel (0) target = $region25
    $region24: #{discriminator_forward.1} parent=1 // pred_region
      _
    $region25: #{discriminator_forward.1} parent=1 // pred_fallthru
      _
    // Predicated region
    $region26: #{discriminator_forward.1} parent=1 // pred_check
      _
    $region27: #{discriminator_forward.1} parent=1 // pred_check_branch
      %66 = sbr.rel (0) target = $region29
    $region28: #{discriminator_forward.1} parent=1 // pred_region
      %68 = vsyncadd [#allocation8], 0
      %s70 = sshll.u32 %s6, 4
      %s71 = int_to_ptr.hbm [resolvable:$true] %s70
      %s72 = sshll.u32 [#allocation9], 4
      %s73 = int_to_ptr.vmem [resolvable:$true] %s72
      %75 = dma.hbm_to_vmem [thread:$0]  %s71, 16, %s73, [#allocation8]
    $region29: #{discriminator_forward.1} parent=1 // pred_fallthru
      _
    // Predicated region
    $region30: #{discriminator_forward.1} parent=1 // pred_check
      _
    $region31: #{discriminator_forward.1} parent=1 // pred_check_branch
      %77 = sbr.rel (0) target = $region33
    $region32: #{discriminator_forward.1} parent=1 // pred_region
      %79 = dma.done [#allocation3], 512
    $region33: #{discriminator_forward.1} parent=1 // pred_fallthru
      _
    // Predicated region
    $region34: #{discriminator_forward.1} parent=1 // pred_check
      _
    $region35: #{discriminator_forward.1} parent=1 // pred_check_branch
      %81 = sbr.rel (0) target = $region37
    $region36: #{discriminator_forward.1} parent=1 // pred_region
      %83 = dma.done [#allocation5], 128
    $region37: #{discriminator_forward.1} parent=1 // pred_fallthru
      _
    // Predicated region
    $region38: #{discriminator_forward.1} parent=1 // pred_check
      _
    $region39: #{discriminator_forward.1} parent=1 // pred_check_branch
      %85 = sbr.rel (0) target = $region41
    $region40: #{discriminator_forward.1} parent=1 // pred_region
      %87 = dma.done [#allocation5], 65536
    $region41: #{discriminator_forward.1} parent=1 // pred_fallthru
      _
    // Predicated region
    $region42: #{discriminator_forward.1} parent=1 // pred_check
      _
    $region43: #{discriminator_forward.1} parent=1 // pred_check_branch
      %89 = sbr.rel (0) target = $region45
    $region44: #{discriminator_forward.1} parent=1 // pred_region
      %91 = dma.done [#allocation8], 128
    $region45: #{discriminator_forward.1} parent=1 // pred_fallthru
      _
    // Predicated region
    $region46: #{discriminator_forward.1} parent=1 // pred_check
      _
    $region47: #{discriminator_forward.1} parent=1 // pred_check_branch
      %93 = sbr.rel (0) target = $region49
    $region48: #{discriminator_forward.1} parent=1 // pred_region
      %95 = dma.done [#allocation8], 16
    $region49: #{discriminator_forward.1} parent=1 // pred_fallthru
      _
    %v97 = vld [vmem:[%s0] sm:$0xff]
    %v98 = vpack.c.bf16 %v97, %v97
    %v99 = vld [vmem:[#allocation2] sm:$0xff]
    %v100 = vld [vmem:[#allocation2 + $0x8] sm:$0xff]
    %v101 = vld [vmem:[#allocation2 + $0x10] sm:$0xff]
    %v102 = vld [vmem:[#allocation2 + $0x18] sm:$0xff]
    %v103 = vld [vmem:[#allocation4] sm:$0xff]
    %v105 = vperm.slane %v103, 0
    %v106 = vperm.slane %v103, 1
    %v107 = vperm.slane %v103, 2
    %v108 = vperm.slane %v103, 3
    %v109 = vperm.slane %v103, 4
    %v110 = vperm.slane %v103, 5
    %v111 = vperm.slane %v103, 6
    %v112 = vperm.slane %v103, 7
    %v125 = vunpack.c.l.b16 %v99
    %v126 = vunpack.c.h.b16 %v99
    %v127 = vunpack.c.l.b16 %v100
    %v128 = vunpack.c.h.b16 %v100
    %v129 = vunpack.c.l.b16 %v101
    %v130 = vunpack.c.h.b16 %v101
    %v131 = vunpack.c.l.b16 %v102
    %v132 = vunpack.c.h.b16 %v102
    %v133 = vpack.c.b16 %v125, %v125
    %v134 = vpack.c.b16 %v126, %v126
    %v135 = vpack.c.b16 %v127, %v127
    %v136 = vpack.c.b16 %v128, %v128
    %v137 = vpack.c.b16 %v129, %v129
    %v138 = vpack.c.b16 %v130, %v130
    %v139 = vpack.c.b16 %v131, %v131
    %v140 = vpack.c.b16 %v132, %v132
    %vm141 = vcmask 64512
    %v143 = vsel %vm141, %v98, 0
    %vm145 = vcmask 1043456
    %v147 = vsel %vm145, %v133, 0
    %v150 = vsel %vm145, %v134, 0
    %v153 = vsel %vm145, %v135, 0
    %v156 = vsel %vm145, %v136, 0
    %v159 = vsel %vm145, %v137, 0
    %v162 = vsel %vm145, %v138, 0
    %v165 = vsel %vm145, %v139, 0
    %v168 = vsel %vm145, %v140, 0
    %170 = vmatpush.bf16.msra.mxu0 0
    %171 = vmatpush.bf16.msra.mxu0 0
    %172 = vmatpush.bf16.msra.mxu0 0
    %173 = vmatpush.bf16.msra.mxu0 0
    %174 = vmatpush.bf16.msra.mxu0 0
    %175 = vmatpush.bf16.msra.mxu0 0
    %176 = vmatpush.bf16.msra.mxu0 0
    %177 = vmatpush.bf16.msra.mxu0 %v147
    %178 = vmatmul.bf16.gmra.mxu0 %v143
    %v179 = vpop.f32.mrf.mxu0
    %v180 = vadd.f32 %v105, %v179
    %v181 = vpop.f32.mrf.mxu0
    %182 = vdwg.mxu0
    %183 = vmatpush.bf16.msra.mxu0 0
    %184 = vmatpush.bf16.msra.mxu0 0
    %185 = vmatpush.bf16.msra.mxu0 0
    %186 = vmatpush.bf16.msra.mxu0 0
    %187 = vmatpush.bf16.msra.mxu0 0
    %188 = vmatpush.bf16.msra.mxu0 0
    %189 = vmatpush.bf16.msra.mxu0 0
    %190 = vmatpush.bf16.msra.mxu0 %v150
    %191 = vmatmul.bf16.gmra.mxu0 %v143
    %v192 = vpop.f32.mrf.mxu0
    %v193 = vadd.f32 %v106, %v192
    %v194 = vpop.f32.mrf.mxu0
    %195 = vdwg.mxu0
    %196 = vmatpush.bf16.msra.mxu0 0
    %197 = vmatpush.bf16.msra.mxu0 0
    %198 = vmatpush.bf16.msra.mxu0 0
    %199 = vmatpush.bf16.msra.mxu0 0
    %200 = vmatpush.bf16.msra.mxu0 0
    %201 = vmatpush.bf16.msra.mxu0 0
    %202 = vmatpush.bf16.msra.mxu0 0
    %203 = vmatpush.bf16.msra.mxu0 %v153
    %204 = vmatmul.bf16.gmra.mxu0 %v143
    %v205 = vpop.f32.mrf.mxu0
    %v206 = vadd.f32 %v107, %v205
    %v207 = vpop.f32.mrf.mxu0
    %208 = vdwg.mxu0
    %209 = vmatpush.bf16.msra.mxu0 0
    %210 = vmatpush.bf16.msra.mxu0 0
    %211 = vmatpush.bf16.msra.mxu0 0
    %212 = vmatpush.bf16.msra.mxu0 0
    %213 = vmatpush.bf16.msra.mxu0 0
    %214 = vmatpush.bf16.msra.mxu0 0
    %215 = vmatpush.bf16.msra.mxu0 0
    %216 = vmatpush.bf16.msra.mxu0 %v156
    %217 = vmatmul.bf16.gmra.mxu0 %v143
    %v218 = vpop.f32.mrf.mxu0
    %v219 = vadd.f32 %v108, %v218
    %v220 = vpop.f32.mrf.mxu0
    %221 = vdwg.mxu0
    %222 = vmatpush.bf16.msra.mxu0 0
    %223 = vmatpush.bf16.msra.mxu0 0
    %224 = vmatpush.bf16.msra.mxu0 0
    %225 = vmatpush.bf16.msra.mxu0 0
    %226 = vmatpush.bf16.msra.mxu0 0
    %227 = vmatpush.bf16.msra.mxu0 0
    %228 = vmatpush.bf16.msra.mxu0 0
    %229 = vmatpush.bf16.msra.mxu0 %v159
    %230 = vmatmul.bf16.gmra.mxu0 %v143
    %v231 = vpop.f32.mrf.mxu0
    %v232 = vadd.f32 %v109, %v231
    %v233 = vpop.f32.mrf.mxu0
    %234 = vdwg.mxu0
    %235 = vmatpush.bf16.msra.mxu0 0
    %236 = vmatpush.bf16.msra.mxu0 0
    %237 = vmatpush.bf16.msra.mxu0 0
    %238 = vmatpush.bf16.msra.mxu0 0
    %239 = vmatpush.bf16.msra.mxu0 0
    %240 = vmatpush.bf16.msra.mxu0 0
    %241 = vmatpush.bf16.msra.mxu0 0
    %242 = vmatpush.bf16.msra.mxu0 %v162
    %243 = vmatmul.bf16.gmra.mxu0 %v143
    %v244 = vpop.f32.mrf.mxu0
    %v245 = vadd.f32 %v110, %v244
    %v246 = vpop.f32.mrf.mxu0
    %247 = vdwg.mxu0
    %248 = vmatpush.bf16.msra.mxu0 0
    %249 = vmatpush.bf16.msra.mxu0 0
    %250 = vmatpush.bf16.msra.mxu0 0
    %251 = vmatpush.bf16.msra.mxu0 0
    %252 = vmatpush.bf16.msra.mxu0 0
    %253 = vmatpush.bf16.msra.mxu0 0
    %254 = vmatpush.bf16.msra.mxu0 0
    %255 = vmatpush.bf16.msra.mxu0 %v165
    %256 = vmatmul.bf16.gmra.mxu0 %v143
    %v257 = vpop.f32.mrf.mxu0
    %v258 = vadd.f32 %v111, %v257
    %v259 = vpop.f32.mrf.mxu0
    %260 = vdwg.mxu0
    %261 = vmatpush.bf16.msra.mxu0 0
    %262 = vmatpush.bf16.msra.mxu0 0
    %263 = vmatpush.bf16.msra.mxu0 0
    %264 = vmatpush.bf16.msra.mxu0 0
    %265 = vmatpush.bf16.msra.mxu0 0
    %266 = vmatpush.bf16.msra.mxu0 0
    %267 = vmatpush.bf16.msra.mxu0 0
    %268 = vmatpush.bf16.msra.mxu0 %v168
    %269 = vmatmul.bf16.gmra.mxu0 %v143
    %v270 = vpop.f32.mrf.mxu0
    %v271 = vadd.f32 %v112, %v270
    %v272 = vpop.f32.mrf.mxu0
    %273 = vdwg.mxu0
    %v274 = vmax.f32 %v180, 0.0
    %v275 = vmax.f32 %v193, 0.0
    %v276 = vmax.f32 %v206, 0.0
    %v277 = vmax.f32 %v219, 0.0
    %v278 = vmax.f32 %v232, 0.0
    %v279 = vmax.f32 %v245, 0.0
    %v280 = vmax.f32 %v258, 0.0
    %v281 = vmax.f32 %v271, 0.0
    %v282 = vpack.c.bf16 %v274, %v274
    %v283 = vpack.c.bf16 %v275, %v275
    %v284 = vpack.c.bf16 %v276, %v276
    %v285 = vpack.c.bf16 %v277, %v277
    %v286 = vpack.c.bf16 %v278, %v278
    %v287 = vpack.c.bf16 %v279, %v279
    %v288 = vpack.c.bf16 %v280, %v280
    %v289 = vpack.c.bf16 %v281, %v281
    %v290 = vld [vmem:[#allocation6] sm:$0xff]
    %v291 = vld [vmem:[#allocation6 + $0x8] sm:$0xff]
    %v292 = vld [vmem:[#allocation6 + $0x10] sm:$0xff]
    %v293 = vld [vmem:[#allocation6 + $0x18] sm:$0xff]
    %v294 = vld [vmem:[#allocation6 + $0x20] sm:$0xff]
    %v295 = vld [vmem:[#allocation6 + $0x28] sm:$0xff]
    %v296 = vld [vmem:[#allocation6 + $0x30] sm:$0xff]
    %v297 = vld [vmem:[#allocation6 + $0x38] sm:$0xff]
    %v298 = vld [vmem:[#allocation6 + $0x40] sm:$0xff]
    %v299 = vld [vmem:[#allocation6 + $0x48] sm:$0xff]
    %v300 = vld [vmem:[#allocation6 + $0x50] sm:$0xff]
    %v301 = vld [vmem:[#allocation6 + $0x58] sm:$0xff]
    %v302 = vld [vmem:[#allocation6 + $0x60] sm:$0xff]
    %v303 = vld [vmem:[#allocation6 + $0x68] sm:$0xff]
    %v304 = vld [vmem:[#allocation6 + $0x70] sm:$0xff]
    %v305 = vld [vmem:[#allocation6 + $0x78] sm:$0xff]
    %v306 = vld [vmem:[#allocation6 + $0x80] sm:$0xff]
    %v307 = vld [vmem:[#allocation6 + $0x88] sm:$0xff]
    %v308 = vld [vmem:[#allocation6 + $0x90] sm:$0xff]
    %v309 = vld [vmem:[#allocation6 + $0x98] sm:$0xff]
    %v310 = vld [vmem:[#allocation6 + $0xa0] sm:$0xff]
    %v311 = vld [vmem:[#allocation6 + $0xa8] sm:$0xff]
    %v312 = vld [vmem:[#allocation6 + $0xb0] sm:$0xff]
    %v313 = vld [vmem:[#allocation6 + $0xb8] sm:$0xff]
    %v314 = vld [vmem:[#allocation6 + $0xc0] sm:$0xff]
    %v315 = vld [vmem:[#allocation6 + $0xc8] sm:$0xff]
    %v316 = vld [vmem:[#allocation6 + $0xd0] sm:$0xff]
    %v317 = vld [vmem:[#allocation6 + $0xd8] sm:$0xff]
    %v318 = vld [vmem:[#allocation6 + $0xe0] sm:$0xff]
    %v319 = vld [vmem:[#allocation6 + $0xe8] sm:$0xff]
    %v320 = vld [vmem:[#allocation6 + $0xf0] sm:$0xff]
    %v321 = vld [vmem:[#allocation6 + $0xf8] sm:$0xff]
    %v322 = vld [vmem:[#allocation6 + $0x100] sm:$0xff]
    %v323 = vld [vmem:[#allocation6 + $0x108] sm:$0xff]
    %v324 = vld [vmem:[#allocation6 + $0x110] sm:$0xff]
    %v325 = vld [vmem:[#allocation6 + $0x118] sm:$0xff]
    %v326 = vld [vmem:[#allocation6 + $0x120] sm:$0xff]
    %v327 = vld [vmem:[#allocation6 + $0x128] sm:$0xff]
    %v328 = vld [vmem:[#allocation6 + $0x130] sm:$0xff]
    %v329 = vld [vmem:[#allocation6 + $0x138] sm:$0xff]
    %v330 = vld [vmem:[#allocation6 + $0x140] sm:$0xff]
    %v331 = vld [vmem:[#allocation6 + $0x148] sm:$0xff]
    %v332 = vld [vmem:[#allocation6 + $0x150] sm:$0xff]
    %v333 = vld [vmem:[#allocation6 + $0x158] sm:$0xff]
    %v334 = vld [vmem:[#allocation6 + $0x160] sm:$0xff]
    %v335 = vld [vmem:[#allocation6 + $0x168] sm:$0xff]
    %v336 = vld [vmem:[#allocation6 + $0x170] sm:$0xff]
    %v337 = vld [vmem:[#allocation6 + $0x178] sm:$0xff]
    %v338 = vld [vmem:[#allocation6 + $0x180] sm:$0xff]
    %v339 = vld [vmem:[#allocation6 + $0x188] sm:$0xff]
    %v340 = vld [vmem:[#allocation6 + $0x190] sm:$0xff]
    %v341 = vld [vmem:[#allocation6 + $0x198] sm:$0xff]
    %v342 = vld [vmem:[#allocation6 + $0x1a0] sm:$0xff]
    %v343 = vld [vmem:[#allocation6 + $0x1a8] sm:$0xff]
    %v344 = vld [vmem:[#allocation6 + $0x1b0] sm:$0xff]
    %v345 = vld [vmem:[#allocation6 + $0x1b8] sm:$0xff]
    %v346 = vld [vmem:[#allocation6 + $0x1c0] sm:$0xff]
    %v347 = vld [vmem:[#allocation6 + $0x1c8] sm:$0xff]
    %v348 = vld [vmem:[#allocation6 + $0x1d0] sm:$0xff]
    %v349 = vld [vmem:[#allocation6 + $0x1d8] sm:$0xff]
    %v350 = vld [vmem:[#allocation6 + $0x1e0] sm:$0xff]
    %v351 = vld [vmem:[#allocation6 + $0x1e8] sm:$0xff]
    %v352 = vld [vmem:[#allocation6 + $0x1f0] sm:$0xff]
    %v353 = vld [vmem:[#allocation6 + $0x1f8] sm:$0xff]
    %v354 = vld [vmem:[#allocation6 + $0x200] sm:$0xff]
    %v355 = vld [vmem:[#allocation6 + $0x208] sm:$0xff]
    %v356 = vld [vmem:[#allocation6 + $0x210] sm:$0xff]
    %v357 = vld [vmem:[#allocation6 + $0x218] sm:$0xff]
    %v358 = vld [vmem:[#allocation6 + $0x220] sm:$0xff]
    %v359 = vld [vmem:[#allocation6 + $0x228] sm:$0xff]
    %v360 = vld [vmem:[#allocation6 + $0x230] sm:$0xff]
    %v361 = vld [vmem:[#allocation6 + $0x238] sm:$0xff]
    %v362 = vld [vmem:[#allocation6 + $0x240] sm:$0xff]
    %v363 = vld [vmem:[#allocation6 + $0x248] sm:$0xff]
    %v364 = vld [vmem:[#allocation6 + $0x250] sm:$0xff]
    %v365 = vld [vmem:[#allocation6 + $0x258] sm:$0xff]
    %v366 = vld [vmem:[#allocation6 + $0x260] sm:$0xff]
    %v367 = vld [vmem:[#allocation6 + $0x268] sm:$0xff]
    %v368 = vld [vmem:[#allocation6 + $0x270] sm:$0xff]
    %v369 = vld [vmem:[#allocation6 + $0x278] sm:$0xff]
    %v370 = vld [vmem:[#allocation6 + $0x280] sm:$0xff]
    %v371 = vld [vmem:[#allocation6 + $0x288] sm:$0xff]
    %v372 = vld [vmem:[#allocation6 + $0x290] sm:$0xff]
    %v373 = vld [vmem:[#allocation6 + $0x298] sm:$0xff]
    %v374 = vld [vmem:[#allocation6 + $0x2a0] sm:$0xff]
    %v375 = vld [vmem:[#allocation6 + $0x2a8] sm:$0xff]
    %v376 = vld [vmem:[#allocation6 + $0x2b0] sm:$0xff]
    %v377 = vld [vmem:[#allocation6 + $0x2b8] sm:$0xff]
    %v378 = vld [vmem:[#allocation6 + $0x2c0] sm:$0xff]
    %v379 = vld [vmem:[#allocation6 + $0x2c8] sm:$0xff]
    %v380 = vld [vmem:[#allocation6 + $0x2d0] sm:$0xff]
    %v381 = vld [vmem:[#allocation6 + $0x2d8] sm:$0xff]
    %v382 = vld [vmem:[#allocation6 + $0x2e0] sm:$0xff]
    %v383 = vld [vmem:[#allocation6 + $0x2e8] sm:$0xff]
    %v384 = vld [vmem:[#allocation6 + $0x2f0] sm:$0xff]
    %v385 = vld [vmem:[#allocation6 + $0x2f8] sm:$0xff]
    %v386 = vld [vmem:[#allocation6 + $0x300] sm:$0xff]
    %v387 = vld [vmem:[#allocation6 + $0x308] sm:$0xff]
    %v388 = vld [vmem:[#allocation6 + $0x310] sm:$0xff]
    %v389 = vld [vmem:[#allocation6 + $0x318] sm:$0xff]
    %v390 = vld [vmem:[#allocation6 + $0x320] sm:$0xff]
    %v391 = vld [vmem:[#allocation6 + $0x328] sm:$0xff]
    %v392 = vld [vmem:[#allocation6 + $0x330] sm:$0xff]
    %v393 = vld [vmem:[#allocation6 + $0x338] sm:$0xff]
    %v394 = vld [vmem:[#allocation6 + $0x340] sm:$0xff]
    %v395 = vld [vmem:[#allocation6 + $0x348] sm:$0xff]
    %v396 = vld [vmem:[#allocation6 + $0x350] sm:$0xff]
    %v397 = vld [vmem:[#allocation6 + $0x358] sm:$0xff]
    %v398 = vld [vmem:[#allocation6 + $0x360] sm:$0xff]
    %v399 = vld [vmem:[#allocation6 + $0x368] sm:$0xff]
    %v400 = vld [vmem:[#allocation6 + $0x370] sm:$0xff]
    %v401 = vld [vmem:[#allocation6 + $0x378] sm:$0xff]
    %v402 = vld [vmem:[#allocation6 + $0x380] sm:$0xff]
    %v403 = vld [vmem:[#allocation6 + $0x388] sm:$0xff]
    %v404 = vld [vmem:[#allocation6 + $0x390] sm:$0xff]
    %v405 = vld [vmem:[#allocation6 + $0x398] sm:$0xff]
    %v406 = vld [vmem:[#allocation6 + $0x3a0] sm:$0xff]
    %v407 = vld [vmem:[#allocation6 + $0x3a8] sm:$0xff]
    %v408 = vld [vmem:[#allocation6 + $0x3b0] sm:$0xff]
    %v409 = vld [vmem:[#allocation6 + $0x3b8] sm:$0xff]
    %v410 = vld [vmem:[#allocation6 + $0x3c0] sm:$0xff]
    %v411 = vld [vmem:[#allocation6 + $0x3c8] sm:$0xff]
    %v412 = vld [vmem:[#allocation6 + $0x3d0] sm:$0xff]
    %v413 = vld [vmem:[#allocation6 + $0x3d8] sm:$0xff]
    %v414 = vld [vmem:[#allocation6 + $0x3e0] sm:$0xff]
    %v415 = vld [vmem:[#allocation6 + $0x3e8] sm:$0xff]
    %v416 = vld [vmem:[#allocation6 + $0x3f0] sm:$0xff]
    %v417 = vld [vmem:[#allocation6 + $0x3f8] sm:$0xff]
    %v418 = vld [vmem:[#allocation6 + $0x400] sm:$0xff]
    %v419 = vld [vmem:[#allocation6 + $0x408] sm:$0xff]
    %v420 = vld [vmem:[#allocation6 + $0x410] sm:$0xff]
    %v421 = vld [vmem:[#allocation6 + $0x418] sm:$0xff]
    %v422 = vld [vmem:[#allocation6 + $0x420] sm:$0xff]
    %v423 = vld [vmem:[#allocation6 + $0x428] sm:$0xff]
    %v424 = vld [vmem:[#allocation6 + $0x430] sm:$0xff]
    %v425 = vld [vmem:[#allocation6 + $0x438] sm:$0xff]
    %v426 = vld [vmem:[#allocation6 + $0x440] sm:$0xff]
    %v427 = vld [vmem:[#allocation6 + $0x448] sm:$0xff]
    %v428 = vld [vmem:[#allocation6 + $0x450] sm:$0xff]
    %v429 = vld [vmem:[#allocation6 + $0x458] sm:$0xff]
    %v430 = vld [vmem:[#allocation6 + $0x460] sm:$0xff]
    %v431 = vld [vmem:[#allocation6 + $0x468] sm:$0xff]
    %v432 = vld [vmem:[#allocation6 + $0x470] sm:$0xff]
    %v433 = vld [vmem:[#allocation6 + $0x478] sm:$0xff]
    %v434 = vld [vmem:[#allocation6 + $0x480] sm:$0xff]
    %v435 = vld [vmem:[#allocation6 + $0x488] sm:$0xff]
    %v436 = vld [vmem:[#allocation6 + $0x490] sm:$0xff]
    %v437 = vld [vmem:[#allocation6 + $0x498] sm:$0xff]
    %v438 = vld [vmem:[#allocation6 + $0x4a0] sm:$0xff]
    %v439 = vld [vmem:[#allocation6 + $0x4a8] sm:$0xff]
    %v440 = vld [vmem:[#allocation6 + $0x4b0] sm:$0xff]
    %v441 = vld [vmem:[#allocation6 + $0x4b8] sm:$0xff]
    %v442 = vld [vmem:[#allocation6 + $0x4c0] sm:$0xff]
    %v443 = vld [vmem:[#allocation6 + $0x4c8] sm:$0xff]
    %v444 = vld [vmem:[#allocation6 + $0x4d0] sm:$0xff]
    %v445 = vld [vmem:[#allocation6 + $0x4d8] sm:$0xff]
    %v446 = vld [vmem:[#allocation6 + $0x4e0] sm:$0xff]
    %v447 = vld [vmem:[#allocation6 + $0x4e8] sm:$0xff]
    %v448 = vld [vmem:[#allocation6 + $0x4f0] sm:$0xff]
    %v449 = vld [vmem:[#allocation6 + $0x4f8] sm:$0xff]
    %v450 = vld [vmem:[#allocation6 + $0x500] sm:$0xff]
    %v451 = vld [vmem:[#allocation6 + $0x508] sm:$0xff]
    %v452 = vld [vmem:[#allocation6 + $0x510] sm:$0xff]
    %v453 = vld [vmem:[#allocation6 + $0x518] sm:$0xff]
    %v454 = vld [vmem:[#allocation6 + $0x520] sm:$0xff]
    %v455 = vld [vmem:[#allocation6 + $0x528] sm:$0xff]
    %v456 = vld [vmem:[#allocation6 + $0x530] sm:$0xff]
    %v457 = vld [vmem:[#allocation6 + $0x538] sm:$0xff]
    %v458 = vld [vmem:[#allocation6 + $0x540] sm:$0xff]
    %v459 = vld [vmem:[#allocation6 + $0x548] sm:$0xff]
    %v460 = vld [vmem:[#allocation6 + $0x550] sm:$0xff]
    %v461 = vld [vmem:[#allocation6 + $0x558] sm:$0xff]
    %v462 = vld [vmem:[#allocation6 + $0x560] sm:$0xff]
    %v463 = vld [vmem:[#allocation6 + $0x568] sm:$0xff]
    %v464 = vld [vmem:[#allocation6 + $0x570] sm:$0xff]
    %v465 = vld [vmem:[#allocation6 + $0x578] sm:$0xff]
    %v466 = vld [vmem:[#allocation6 + $0x580] sm:$0xff]
    %v467 = vld [vmem:[#allocation6 + $0x588] sm:$0xff]
    %v468 = vld [vmem:[#allocation6 + $0x590] sm:$0xff]
    %v469 = vld [vmem:[#allocation6 + $0x598] sm:$0xff]
    %v470 = vld [vmem:[#allocation6 + $0x5a0] sm:$0xff]
    %v471 = vld [vmem:[#allocation6 + $0x5a8] sm:$0xff]
    %v472 = vld [vmem:[#allocation6 + $0x5b0] sm:$0xff]
    %v473 = vld [vmem:[#allocation6 + $0x5b8] sm:$0xff]
    %v474 = vld [vmem:[#allocation6 + $0x5c0] sm:$0xff]
    %v475 = vld [vmem:[#allocation6 + $0x5c8] sm:$0xff]
    %v476 = vld [vmem:[#allocation6 + $0x5d0] sm:$0xff]
    %v477 = vld [vmem:[#allocation6 + $0x5d8] sm:$0xff]
    %v478 = vld [vmem:[#allocation6 + $0x5e0] sm:$0xff]
    %v479 = vld [vmem:[#allocation6 + $0x5e8] sm:$0xff]
    %v480 = vld [vmem:[#allocation6 + $0x5f0] sm:$0xff]
    %v481 = vld [vmem:[#allocation6 + $0x5f8] sm:$0xff]
    %v482 = vld [vmem:[#allocation6 + $0x600] sm:$0xff]
    %v483 = vld [vmem:[#allocation6 + $0x608] sm:$0xff]
    %v484 = vld [vmem:[#allocation6 + $0x610] sm:$0xff]
    %v485 = vld [vmem:[#allocation6 + $0x618] sm:$0xff]
    %v486 = vld [vmem:[#allocation6 + $0x620] sm:$0xff]
    %v487 = vld [vmem:[#allocation6 + $0x628] sm:$0xff]
    %v488 = vld [vmem:[#allocation6 + $0x630] sm:$0xff]
    %v489 = vld [vmem:[#allocation6 + $0x638] sm:$0xff]
    %v490 = vld [vmem:[#allocation6 + $0x640] sm:$0xff]
    %v491 = vld [vmem:[#allocation6 + $0x648] sm:$0xff]
    %v492 = vld [vmem:[#allocation6 + $0x650] sm:$0xff]
    %v493 = vld [vmem:[#allocation6 + $0x658] sm:$0xff]
    %v494 = vld [vmem:[#allocation6 + $0x660] sm:$0xff]
    %v495 = vld [vmem:[#allocation6 + $0x668] sm:$0xff]
    %v496 = vld [vmem:[#allocation6 + $0x670] sm:$0xff]
    %v497 = vld [vmem:[#allocation6 + $0x678] sm:$0xff]
    %v498 = vld [vmem:[#allocation6 + $0x680] sm:$0xff]
    %v499 = vld [vmem:[#allocation6 + $0x688] sm:$0xff]
    %v500 = vld [vmem:[#allocation6 + $0x690] sm:$0xff]
    %v501 = vld [vmem:[#allocation6 + $0x698] sm:$0xff]
    %v502 = vld [vmem:[#allocation6 + $0x6a0] sm:$0xff]
    %v503 = vld [vmem:[#allocation6 + $0x6a8] sm:$0xff]
    %v504 = vld [vmem:[#allocation6 + $0x6b0] sm:$0xff]
    %v505 = vld [vmem:[#allocation6 + $0x6b8] sm:$0xff]
    %v506 = vld [vmem:[#allocation6 + $0x6c0] sm:$0xff]
    %v507 = vld [vmem:[#allocation6 + $0x6c8] sm:$0xff]
    %v508 = vld [vmem:[#allocation6 + $0x6d0] sm:$0xff]
    %v509 = vld [vmem:[#allocation6 + $0x6d8] sm:$0xff]
    %v510 = vld [vmem:[#allocation6 + $0x6e0] sm:$0xff]
    %v511 = vld [vmem:[#allocation6 + $0x6e8] sm:$0xff]
    %v512 = vld [vmem:[#allocation6 + $0x6f0] sm:$0xff]
    %v513 = vld [vmem:[#allocation6 + $0x6f8] sm:$0xff]
    %v514 = vld [vmem:[#allocation6 + $0x700] sm:$0xff]
    %v515 = vld [vmem:[#allocation6 + $0x708] sm:$0xff]
    %v516 = vld [vmem:[#allocation6 + $0x710] sm:$0xff]
    %v517 = vld [vmem:[#allocation6 + $0x718] sm:$0xff]
    %v518 = vld [vmem:[#allocation6 + $0x720] sm:$0xff]
    %v519 = vld [vmem:[#allocation6 + $0x728] sm:$0xff]
    %v520 = vld [vmem:[#allocation6 + $0x730] sm:$0xff]
    %v521 = vld [vmem:[#allocation6 + $0x738] sm:$0xff]
    %v522 = vld [vmem:[#allocation6 + $0x740] sm:$0xff]
    %v523 = vld [vmem:[#allocation6 + $0x748] sm:$0xff]
    %v524 = vld [vmem:[#allocation6 + $0x750] sm:$0xff]
    %v525 = vld [vmem:[#allocation6 + $0x758] sm:$0xff]
    %v526 = vld [vmem:[#allocation6 + $0x760] sm:$0xff]
    %v527 = vld [vmem:[#allocation6 + $0x768] sm:$0xff]
    %v528 = vld [vmem:[#allocation6 + $0x770] sm:$0xff]
    %v529 = vld [vmem:[#allocation6 + $0x778] sm:$0xff]
    %v530 = vld [vmem:[#allocation6 + $0x780] sm:$0xff]
    %v531 = vld [vmem:[#allocation6 + $0x788] sm:$0xff]
    %v532 = vld [vmem:[#allocation6 + $0x790] sm:$0xff]
    %v533 = vld [vmem:[#allocation6 + $0x798] sm:$0xff]
    %v534 = vld [vmem:[#allocation6 + $0x7a0] sm:$0xff]
    %v535 = vld [vmem:[#allocation6 + $0x7a8] sm:$0xff]
    %v536 = vld [vmem:[#allocation6 + $0x7b0] sm:$0xff]
    %v537 = vld [vmem:[#allocation6 + $0x7b8] sm:$0xff]
    %v538 = vld [vmem:[#allocation6 + $0x7c0] sm:$0xff]
    %v539 = vld [vmem:[#allocation6 + $0x7c8] sm:$0xff]
    %v540 = vld [vmem:[#allocation6 + $0x7d0] sm:$0xff]
    %v541 = vld [vmem:[#allocation6 + $0x7d8] sm:$0xff]
    %v542 = vld [vmem:[#allocation6 + $0x7e0] sm:$0xff]
    %v543 = vld [vmem:[#allocation6 + $0x7e8] sm:$0xff]
    %v544 = vld [vmem:[#allocation6 + $0x7f0] sm:$0xff]
    %v545 = vld [vmem:[#allocation6 + $0x7f8] sm:$0xff]
    %v546 = vld [vmem:[#allocation6 + $0x800] sm:$0xff]
    %v547 = vld [vmem:[#allocation6 + $0x808] sm:$0xff]
    %v548 = vld [vmem:[#allocation6 + $0x810] sm:$0xff]
    %v549 = vld [vmem:[#allocation6 + $0x818] sm:$0xff]
    %v550 = vld [vmem:[#allocation6 + $0x820] sm:$0xff]
    %v551 = vld [vmem:[#allocation6 + $0x828] sm:$0xff]
    %v552 = vld [vmem:[#allocation6 + $0x830] sm:$0xff]
    %v553 = vld [vmem:[#allocation6 + $0x838] sm:$0xff]
    %v554 = vld [vmem:[#allocation6 + $0x840] sm:$0xff]
    %v555 = vld [vmem:[#allocation6 + $0x848] sm:$0xff]
    %v556 = vld [vmem:[#allocation6 + $0x850] sm:$0xff]
    %v557 = vld [vmem:[#allocation6 + $0x858] sm:$0xff]
    %v558 = vld [vmem:[#allocation6 + $0x860] sm:$0xff]
    %v559 = vld [vmem:[#allocation6 + $0x868] sm:$0xff]
    %v560 = vld [vmem:[#allocation6 + $0x870] sm:$0xff]
    %v561 = vld [vmem:[#allocation6 + $0x878] sm:$0xff]
    %v562 = vld [vmem:[#allocation6 + $0x880] sm:$0xff]
    %v563 = vld [vmem:[#allocation6 + $0x888] sm:$0xff]
    %v564 = vld [vmem:[#allocation6 + $0x890] sm:$0xff]
    %v565 = vld [vmem:[#allocation6 + $0x898] sm:$0xff]
    %v566 = vld [vmem:[#allocation6 + $0x8a0] sm:$0xff]
    %v567 = vld [vmem:[#allocation6 + $0x8a8] sm:$0xff]
    %v568 = vld [vmem:[#allocation6 + $0x8b0] sm:$0xff]
    %v569 = vld [vmem:[#allocation6 + $0x8b8] sm:$0xff]
    %v570 = vld [vmem:[#allocation6 + $0x8c0] sm:$0xff]
    %v571 = vld [vmem:[#allocation6 + $0x8c8] sm:$0xff]
    %v572 = vld [vmem:[#allocation6 + $0x8d0] sm:$0xff]
    %v573 = vld [vmem:[#allocation6 + $0x8d8] sm:$0xff]
    %v574 = vld [vmem:[#allocation6 + $0x8e0] sm:$0xff]
    %v575 = vld [vmem:[#allocation6 + $0x8e8] sm:$0xff]
    %v576 = vld [vmem:[#allocation6 + $0x8f0] sm:$0xff]
    %v577 = vld [vmem:[#allocation6 + $0x8f8] sm:$0xff]
    %v578 = vld [vmem:[#allocation6 + $0x900] sm:$0xff]
    %v579 = vld [vmem:[#allocation6 + $0x908] sm:$0xff]
    %v580 = vld [vmem:[#allocation6 + $0x910] sm:$0xff]
    %v581 = vld [vmem:[#allocation6 + $0x918] sm:$0xff]
    %v582 = vld [vmem:[#allocation6 + $0x920] sm:$0xff]
    %v583 = vld [vmem:[#allocation6 + $0x928] sm:$0xff]
    %v584 = vld [vmem:[#allocation6 + $0x930] sm:$0xff]
    %v585 = vld [vmem:[#allocation6 + $0x938] sm:$0xff]
    %v586 = vld [vmem:[#allocation6 + $0x940] sm:$0xff]
    %v587 = vld [vmem:[#allocation6 + $0x948] sm:$0xff]
    %v588 = vld [vmem:[#allocation6 + $0x950] sm:$0xff]
    %v589 = vld [vmem:[#allocation6 + $0x958] sm:$0xff]
    %v590 = vld [vmem:[#allocation6 + $0x960] sm:$0xff]
    %v591 = vld [vmem:[#allocation6 + $0x968] sm:$0xff]
    %v592 = vld [vmem:[#allocation6 + $0x970] sm:$0xff]
    %v593 = vld [vmem:[#allocation6 + $0x978] sm:$0xff]
    %v594 = vld [vmem:[#allocation6 + $0x980] sm:$0xff]
    %v595 = vld [vmem:[#allocation6 + $0x988] sm:$0xff]
    %v596 = vld [vmem:[#allocation6 + $0x990] sm:$0xff]
    %v597 = vld [vmem:[#allocation6 + $0x998] sm:$0xff]
    %v598 = vld [vmem:[#allocation6 + $0x9a0] sm:$0xff]
    %v599 = vld [vmem:[#allocation6 + $0x9a8] sm:$0xff]
    %v600 = vld [vmem:[#allocation6 + $0x9b0] sm:$0xff]
    %v601 = vld [vmem:[#allocation6 + $0x9b8] sm:$0xff]
    %v602 = vld [vmem:[#allocation6 + $0x9c0] sm:$0xff]
    %v603 = vld [vmem:[#allocation6 + $0x9c8] sm:$0xff]
    %v604 = vld [vmem:[#allocation6 + $0x9d0] sm:$0xff]
    %v605 = vld [vmem:[#allocation6 + $0x9d8] sm:$0xff]
    %v606 = vld [vmem:[#allocation6 + $0x9e0] sm:$0xff]
    %v607 = vld [vmem:[#allocation6 + $0x9e8] sm:$0xff]
    %v608 = vld [vmem:[#allocation6 + $0x9f0] sm:$0xff]
    %v609 = vld [vmem:[#allocation6 + $0x9f8] sm:$0xff]
    %v610 = vld [vmem:[#allocation6 + $0xa00] sm:$0xff]
    %v611 = vld [vmem:[#allocation6 + $0xa08] sm:$0xff]
    %v612 = vld [vmem:[#allocation6 + $0xa10] sm:$0xff]
    %v613 = vld [vmem:[#allocation6 + $0xa18] sm:$0xff]
    %v614 = vld [vmem:[#allocation6 + $0xa20] sm:$0xff]
    %v615 = vld [vmem:[#allocation6 + $0xa28] sm:$0xff]
    %v616 = vld [vmem:[#allocation6 + $0xa30] sm:$0xff]
    %v617 = vld [vmem:[#allocation6 + $0xa38] sm:$0xff]
    %v618 = vld [vmem:[#allocation6 + $0xa40] sm:$0xff]
    %v619 = vld [vmem:[#allocation6 + $0xa48] sm:$0xff]
    %v620 = vld [vmem:[#allocation6 + $0xa50] sm:$0xff]
    %v621 = vld [vmem:[#allocation6 + $0xa58] sm:$0xff]
    %v622 = vld [vmem:[#allocation6 + $0xa60] sm:$0xff]
    %v623 = vld [vmem:[#allocation6 + $0xa68] sm:$0xff]
    %v624 = vld [vmem:[#allocation6 + $0xa70] sm:$0xff]
    %v625 = vld [vmem:[#allocation6 + $0xa78] sm:$0xff]
    %v626 = vld [vmem:[#allocation6 + $0xa80] sm:$0xff]
    %v627 = vld [vmem:[#allocation6 + $0xa88] sm:$0xff]
    %v628 = vld [vmem:[#allocation6 + $0xa90] sm:$0xff]
    %v629 = vld [vmem:[#allocation6 + $0xa98] sm:$0xff]
    %v630 = vld [vmem:[#allocation6 + $0xaa0] sm:$0xff]
    %v631 = vld [vmem:[#allocation6 + $0xaa8] sm:$0xff]
    %v632 = vld [vmem:[#allocation6 + $0xab0] sm:$0xff]
    %v633 = vld [vmem:[#allocation6 + $0xab8] sm:$0xff]
    %v634 = vld [vmem:[#allocation6 + $0xac0] sm:$0xff]
    %v635 = vld [vmem:[#allocation6 + $0xac8] sm:$0xff]
    %v636 = vld [vmem:[#allocation6 + $0xad0] sm:$0xff]
    %v637 = vld [vmem:[#allocation6 + $0xad8] sm:$0xff]
    %v638 = vld [vmem:[#allocation6 + $0xae0] sm:$0xff]
    %v639 = vld [vmem:[#allocation6 + $0xae8] sm:$0xff]
    %v640 = vld [vmem:[#allocation6 + $0xaf0] sm:$0xff]
    %v641 = vld [vmem:[#allocation6 + $0xaf8] sm:$0xff]
    %v642 = vld [vmem:[#allocation6 + $0xb00] sm:$0xff]
    %v643 = vld [vmem:[#allocation6 + $0xb08] sm:$0xff]
    %v644 = vld [vmem:[#allocation6 + $0xb10] sm:$0xff]
    %v645 = vld [vmem:[#allocation6 + $0xb18] sm:$0xff]
    %v646 = vld [vmem:[#allocation6 + $0xb20] sm:$0xff]
    %v647 = vld [vmem:[#allocation6 + $0xb28] sm:$0xff]
    %v648 = vld [vmem:[#allocation6 + $0xb30] sm:$0xff]
    %v649 = vld [vmem:[#allocation6 + $0xb38] sm:$0xff]
    %v650 = vld [vmem:[#allocation6 + $0xb40] sm:$0xff]
    %v651 = vld [vmem:[#allocation6 + $0xb48] sm:$0xff]
    %v652 = vld [vmem:[#allocation6 + $0xb50] sm:$0xff]
    %v653 = vld [vmem:[#allocation6 + $0xb58] sm:$0xff]
    %v654 = vld [vmem:[#allocation6 + $0xb60] sm:$0xff]
    %v655 = vld [vmem:[#allocation6 + $0xb68] sm:$0xff]
    %v656 = vld [vmem:[#allocation6 + $0xb70] sm:$0xff]
    %v657 = vld [vmem:[#allocation6 + $0xb78] sm:$0xff]
    %v658 = vld [vmem:[#allocation6 + $0xb80] sm:$0xff]
    %v659 = vld [vmem:[#allocation6 + $0xb88] sm:$0xff]
    %v660 = vld [vmem:[#allocation6 + $0xb90] sm:$0xff]
    %v661 = vld [vmem:[#allocation6 + $0xb98] sm:$0xff]
    %v662 = vld [vmem:[#allocation6 + $0xba0] sm:$0xff]
    %v663 = vld [vmem:[#allocation6 + $0xba8] sm:$0xff]
    %v664 = vld [vmem:[#allocation6 + $0xbb0] sm:$0xff]
    %v665 = vld [vmem:[#allocation6 + $0xbb8] sm:$0xff]
    %v666 = vld [vmem:[#allocation6 + $0xbc0] sm:$0xff]
    %v667 = vld [vmem:[#allocation6 + $0xbc8] sm:$0xff]
    %v668 = vld [vmem:[#allocation6 + $0xbd0] sm:$0xff]
    %v669 = vld [vmem:[#allocation6 + $0xbd8] sm:$0xff]
    %v670 = vld [vmem:[#allocation6 + $0xbe0] sm:$0xff]
    %v671 = vld [vmem:[#allocation6 + $0xbe8] sm:$0xff]
    %v672 = vld [vmem:[#allocation6 + $0xbf0] sm:$0xff]
    %v673 = vld [vmem:[#allocation6 + $0xbf8] sm:$0xff]
    %v674 = vld [vmem:[#allocation6 + $0xc00] sm:$0xff]
    %v675 = vld [vmem:[#allocation6 + $0xc08] sm:$0xff]
    %v676 = vld [vmem:[#allocation6 + $0xc10] sm:$0xff]
    %v677 = vld [vmem:[#allocation6 + $0xc18] sm:$0xff]
    %v678 = vld [vmem:[#allocation6 + $0xc20] sm:$0xff]
    %v679 = vld [vmem:[#allocation6 + $0xc28] sm:$0xff]
    %v680 = vld [vmem:[#allocation6 + $0xc30] sm:$0xff]
    %v681 = vld [vmem:[#allocation6 + $0xc38] sm:$0xff]
    %v682 = vld [vmem:[#allocation6 + $0xc40] sm:$0xff]
    %v683 = vld [vmem:[#allocation6 + $0xc48] sm:$0xff]
    %v684 = vld [vmem:[#allocation6 + $0xc50] sm:$0xff]
    %v685 = vld [vmem:[#allocation6 + $0xc58] sm:$0xff]
    %v686 = vld [vmem:[#allocation6 + $0xc60] sm:$0xff]
    %v687 = vld [vmem:[#allocation6 + $0xc68] sm:$0xff]
    %v688 = vld [vmem:[#allocation6 + $0xc70] sm:$0xff]
    %v689 = vld [vmem:[#allocation6 + $0xc78] sm:$0xff]
    %v690 = vld [vmem:[#allocation6 + $0xc80] sm:$0xff]
    %v691 = vld [vmem:[#allocation6 + $0xc88] sm:$0xff]
    %v692 = vld [vmem:[#allocation6 + $0xc90] sm:$0xff]
    %v693 = vld [vmem:[#allocation6 + $0xc98] sm:$0xff]
    %v694 = vld [vmem:[#allocation6 + $0xca0] sm:$0xff]
    %v695 = vld [vmem:[#allocation6 + $0xca8] sm:$0xff]
    %v696 = vld [vmem:[#allocation6 + $0xcb0] sm:$0xff]
    %v697 = vld [vmem:[#allocation6 + $0xcb8] sm:$0xff]
    %v698 = vld [vmem:[#allocation6 + $0xcc0] sm:$0xff]
    %v699 = vld [vmem:[#allocation6 + $0xcc8] sm:$0xff]
    %v700 = vld [vmem:[#allocation6 + $0xcd0] sm:$0xff]
    %v701 = vld [vmem:[#allocation6 + $0xcd8] sm:$0xff]
    %v702 = vld [vmem:[#allocation6 + $0xce0] sm:$0xff]
    %v703 = vld [vmem:[#allocation6 + $0xce8] sm:$0xff]
    %v704 = vld [vmem:[#allocation6 + $0xcf0] sm:$0xff]
    %v705 = vld [vmem:[#allocation6 + $0xcf8] sm:$0xff]
    %v706 = vld [vmem:[#allocation6 + $0xd00] sm:$0xff]
    %v707 = vld [vmem:[#allocation6 + $0xd08] sm:$0xff]
    %v708 = vld [vmem:[#allocation6 + $0xd10] sm:$0xff]
    %v709 = vld [vmem:[#allocation6 + $0xd18] sm:$0xff]
    %v710 = vld [vmem:[#allocation6 + $0xd20] sm:$0xff]
    %v711 = vld [vmem:[#allocation6 + $0xd28] sm:$0xff]
    %v712 = vld [vmem:[#allocation6 + $0xd30] sm:$0xff]
    %v713 = vld [vmem:[#allocation6 + $0xd38] sm:$0xff]
    %v714 = vld [vmem:[#allocation6 + $0xd40] sm:$0xff]
    %v715 = vld [vmem:[#allocation6 + $0xd48] sm:$0xff]
    %v716 = vld [vmem:[#allocation6 + $0xd50] sm:$0xff]
    %v717 = vld [vmem:[#allocation6 + $0xd58] sm:$0xff]
    %v718 = vld [vmem:[#allocation6 + $0xd60] sm:$0xff]
    %v719 = vld [vmem:[#allocation6 + $0xd68] sm:$0xff]
    %v720 = vld [vmem:[#allocation6 + $0xd70] sm:$0xff]
    %v721 = vld [vmem:[#allocation6 + $0xd78] sm:$0xff]
    %v722 = vld [vmem:[#allocation6 + $0xd80] sm:$0xff]
    %v723 = vld [vmem:[#allocation6 + $0xd88] sm:$0xff]
    %v724 = vld [vmem:[#allocation6 + $0xd90] sm:$0xff]
    %v725 = vld [vmem:[#allocation6 + $0xd98] sm:$0xff]
    %v726 = vld [vmem:[#allocation6 + $0xda0] sm:$0xff]
    %v727 = vld [vmem:[#allocation6 + $0xda8] sm:$0xff]
    %v728 = vld [vmem:[#allocation6 + $0xdb0] sm:$0xff]
    %v729 = vld [vmem:[#allocation6 + $0xdb8] sm:$0xff]
    %v730 = vld [vmem:[#allocation6 + $0xdc0] sm:$0xff]
    %v731 = vld [vmem:[#allocation6 + $0xdc8] sm:$0xff]
    %v732 = vld [vmem:[#allocation6 + $0xdd0] sm:$0xff]
    %v733 = vld [vmem:[#allocation6 + $0xdd8] sm:$0xff]
    %v734 = vld [vmem:[#allocation6 + $0xde0] sm:$0xff]
    %v735 = vld [vmem:[#allocation6 + $0xde8] sm:$0xff]
    %v736 = vld [vmem:[#allocation6 + $0xdf0] sm:$0xff]
    %v737 = vld [vmem:[#allocation6 + $0xdf8] sm:$0xff]
    %v738 = vld [vmem:[#allocation6 + $0xe00] sm:$0xff]
    %v739 = vld [vmem:[#allocation6 + $0xe08] sm:$0xff]
    %v740 = vld [vmem:[#allocation6 + $0xe10] sm:$0xff]
    %v741 = vld [vmem:[#allocation6 + $0xe18] sm:$0xff]
    %v742 = vld [vmem:[#allocation6 + $0xe20] sm:$0xff]
    %v743 = vld [vmem:[#allocation6 + $0xe28] sm:$0xff]
    %v744 = vld [vmem:[#allocation6 + $0xe30] sm:$0xff]
    %v745 = vld [vmem:[#allocation6 + $0xe38] sm:$0xff]
    %v746 = vld [vmem:[#allocation6 + $0xe40] sm:$0xff]
    %v747 = vld [vmem:[#allocation6 + $0xe48] sm:$0xff]
    %v748 = vld [vmem:[#allocation6 + $0xe50] sm:$0xff]
    %v749 = vld [vmem:[#allocation6 + $0xe58] sm:$0xff]
    %v750 = vld [vmem:[#allocation6 + $0xe60] sm:$0xff]
    %v751 = vld [vmem:[#allocation6 + $0xe68] sm:$0xff]
    %v752 = vld [vmem:[#allocation6 + $0xe70] sm:$0xff]
    %v753 = vld [vmem:[#allocation6 + $0xe78] sm:$0xff]
    %v754 = vld [vmem:[#allocation6 + $0xe80] sm:$0xff]
    %v755 = vld [vmem:[#allocation6 + $0xe88] sm:$0xff]
    %v756 = vld [vmem:[#allocation6 + $0xe90] sm:$0xff]
    %v757 = vld [vmem:[#allocation6 + $0xe98] sm:$0xff]
    %v758 = vld [vmem:[#allocation6 + $0xea0] sm:$0xff]
    %v759 = vld [vmem:[#allocation6 + $0xea8] sm:$0xff]
    %v760 = vld [vmem:[#allocation6 + $0xeb0] sm:$0xff]
    %v761 = vld [vmem:[#allocation6 + $0xeb8] sm:$0xff]
    %v762 = vld [vmem:[#allocation6 + $0xec0] sm:$0xff]
    %v763 = vld [vmem:[#allocation6 + $0xec8] sm:$0xff]
    %v764 = vld [vmem:[#allocation6 + $0xed0] sm:$0xff]
    %v765 = vld [vmem:[#allocation6 + $0xed8] sm:$0xff]
    %v766 = vld [vmem:[#allocation6 + $0xee0] sm:$0xff]
    %v767 = vld [vmem:[#allocation6 + $0xee8] sm:$0xff]
    %v768 = vld [vmem:[#allocation6 + $0xef0] sm:$0xff]
    %v769 = vld [vmem:[#allocation6 + $0xef8] sm:$0xff]
    %v770 = vld [vmem:[#allocation6 + $0xf00] sm:$0xff]
    %v771 = vld [vmem:[#allocation6 + $0xf08] sm:$0xff]
    %v772 = vld [vmem:[#allocation6 + $0xf10] sm:$0xff]
    %v773 = vld [vmem:[#allocation6 + $0xf18] sm:$0xff]
    %v774 = vld [vmem:[#allocation6 + $0xf20] sm:$0xff]
    %v775 = vld [vmem:[#allocation6 + $0xf28] sm:$0xff]
    %v776 = vld [vmem:[#allocation6 + $0xf30] sm:$0xff]
    %v777 = vld [vmem:[#allocation6 + $0xf38] sm:$0xff]
    %v778 = vld [vmem:[#allocation6 + $0xf40] sm:$0xff]
    %v779 = vld [vmem:[#allocation6 + $0xf48] sm:$0xff]
    %v780 = vld [vmem:[#allocation6 + $0xf50] sm:$0xff]
    %v781 = vld [vmem:[#allocation6 + $0xf58] sm:$0xff]
    %v782 = vld [vmem:[#allocation6 + $0xf60] sm:$0xff]
    %v783 = vld [vmem:[#allocation6 + $0xf68] sm:$0xff]
    %v784 = vld [vmem:[#allocation6 + $0xf70] sm:$0xff]
    %v785 = vld [vmem:[#allocation6 + $0xf78] sm:$0xff]
    %v786 = vld [vmem:[#allocation6 + $0xf80] sm:$0xff]
    %v787 = vld [vmem:[#allocation6 + $0xf88] sm:$0xff]
    %v788 = vld [vmem:[#allocation6 + $0xf90] sm:$0xff]
    %v789 = vld [vmem:[#allocation6 + $0xf98] sm:$0xff]
    %v790 = vld [vmem:[#allocation6 + $0xfa0] sm:$0xff]
    %v791 = vld [vmem:[#allocation6 + $0xfa8] sm:$0xff]
    %v792 = vld [vmem:[#allocation6 + $0xfb0] sm:$0xff]
    %v793 = vld [vmem:[#allocation6 + $0xfb8] sm:$0xff]
    %v794 = vld [vmem:[#allocation6 + $0xfc0] sm:$0xff]
    %v795 = vld [vmem:[#allocation6 + $0xfc8] sm:$0xff]
    %v796 = vld [vmem:[#allocation6 + $0xfd0] sm:$0xff]
    %v797 = vld [vmem:[#allocation6 + $0xfd8] sm:$0xff]
    %v798 = vld [vmem:[#allocation6 + $0xfe0] sm:$0xff]
    %v799 = vld [vmem:[#allocation6 + $0xfe8] sm:$0xff]
    %v800 = vld [vmem:[#allocation6 + $0xff0] sm:$0xff]
    %v801 = vld [vmem:[#allocation6 + $0xff8] sm:$0xff]
    %v802 = vld [vmem:[#allocation7] sm:$0xff]
    %v804 = vperm.slane %v802, 0
    %v805 = vperm.slane %v802, 1
    %v806 = vperm.slane %v802, 2
    %v807 = vperm.slane %v802, 3
    %v808 = vperm.slane %v802, 4
    %v809 = vperm.slane %v802, 5
    %v810 = vperm.slane %v802, 6
    %v811 = vperm.slane %v802, 7
    %v1332 = vunpack.c.l.b16 %v290
    %v1333 = vunpack.c.h.b16 %v290
    %v1334 = vunpack.c.l.b16 %v291
    %v1335 = vunpack.c.h.b16 %v291
    %v1336 = vunpack.c.l.b16 %v292
    %v1337 = vunpack.c.h.b16 %v292
    %v1338 = vunpack.c.l.b16 %v293
    %v1339 = vunpack.c.h.b16 %v293
    %v1340 = vunpack.c.l.b16 %v294
    %v1341 = vunpack.c.h.b16 %v294
    %v1342 = vunpack.c.l.b16 %v295
    %v1343 = vunpack.c.h.b16 %v295
    %v1344 = vunpack.c.l.b16 %v296
    %v1345 = vunpack.c.h.b16 %v296
    %v1346 = vunpack.c.l.b16 %v297
    %v1347 = vunpack.c.h.b16 %v297
    %v1348 = vunpack.c.l.b16 %v298
    %v1349 = vunpack.c.h.b16 %v298
    %v1350 = vunpack.c.l.b16 %v299
    %v1351 = vunpack.c.h.b16 %v299
    %v1352 = vunpack.c.l.b16 %v300
    %v1353 = vunpack.c.h.b16 %v300
    %v1354 = vunpack.c.l.b16 %v301
    %v1355 = vunpack.c.h.b16 %v301
    %v1356 = vunpack.c.l.b16 %v302
    %v1357 = vunpack.c.h.b16 %v302
    %v1358 = vunpack.c.l.b16 %v303
    %v1359 = vunpack.c.h.b16 %v303
    %v1360 = vunpack.c.l.b16 %v304
    %v1361 = vunpack.c.h.b16 %v304
    %v1362 = vunpack.c.l.b16 %v305
    %v1363 = vunpack.c.h.b16 %v305
    %v1364 = vunpack.c.l.b16 %v306
    %v1365 = vunpack.c.h.b16 %v306
    %v1366 = vunpack.c.l.b16 %v307
    %v1367 = vunpack.c.h.b16 %v307
    %v1368 = vunpack.c.l.b16 %v308
    %v1369 = vunpack.c.h.b16 %v308
    %v1370 = vunpack.c.l.b16 %v309
    %v1371 = vunpack.c.h.b16 %v309
    %v1372 = vunpack.c.l.b16 %v310
    %v1373 = vunpack.c.h.b16 %v310
    %v1374 = vunpack.c.l.b16 %v311
    %v1375 = vunpack.c.h.b16 %v311
    %v1376 = vunpack.c.l.b16 %v312
    %v1377 = vunpack.c.h.b16 %v312
    %v1378 = vunpack.c.l.b16 %v313
    %v1379 = vunpack.c.h.b16 %v313
    %v1380 = vunpack.c.l.b16 %v314
    %v1381 = vunpack.c.h.b16 %v314
    %v1382 = vunpack.c.l.b16 %v315
    %v1383 = vunpack.c.h.b16 %v315
    %v1384 = vunpack.c.l.b16 %v316
    %v1385 = vunpack.c.h.b16 %v316
    %v1386 = vunpack.c.l.b16 %v317
    %v1387 = vunpack.c.h.b16 %v317
    %v1388 = vunpack.c.l.b16 %v318
    %v1389 = vunpack.c.h.b16 %v318
    %v1390 = vunpack.c.l.b16 %v319
    %v1391 = vunpack.c.h.b16 %v319
    %v1392 = vunpack.c.l.b16 %v320
    %v1393 = vunpack.c.h.b16 %v320
    %v1394 = vunpack.c.l.b16 %v321
    %v1395 = vunpack.c.h.b16 %v321
    %v1396 = vunpack.c.l.b16 %v322
    %v1397 = vunpack.c.h.b16 %v322
    %v1398 = vunpack.c.l.b16 %v323
    %v1399 = vunpack.c.h.b16 %v323
    %v1400 = vunpack.c.l.b16 %v324
    %v1401 = vunpack.c.h.b16 %v324
    %v1402 = vunpack.c.l.b16 %v325
    %v1403 = vunpack.c.h.b16 %v325
    %v1404 = vunpack.c.l.b16 %v326
    %v1405 = vunpack.c.h.b16 %v326
    %v1406 = vunpack.c.l.b16 %v327
    %v1407 = vunpack.c.h.b16 %v327
    %v1408 = vunpack.c.l.b16 %v328
    %v1409 = vunpack.c.h.b16 %v328
    %v1410 = vunpack.c.l.b16 %v329
    %v1411 = vunpack.c.h.b16 %v329
    %v1412 = vunpack.c.l.b16 %v330
    %v1413 = vunpack.c.h.b16 %v330
    %v1414 = vunpack.c.l.b16 %v331
    %v1415 = vunpack.c.h.b16 %v331
    %v1416 = vunpack.c.l.b16 %v332
    %v1417 = vunpack.c.h.b16 %v332
    %v1418 = vunpack.c.l.b16 %v333
    %v1419 = vunpack.c.h.b16 %v333
    %v1420 = vunpack.c.l.b16 %v334
    %v1421 = vunpack.c.h.b16 %v334
    %v1422 = vunpack.c.l.b16 %v335
    %v1423 = vunpack.c.h.b16 %v335
    %v1424 = vunpack.c.l.b16 %v336
    %v1425 = vunpack.c.h.b16 %v336
    %v1426 = vunpack.c.l.b16 %v337
    %v1427 = vunpack.c.h.b16 %v337
    %v1428 = vunpack.c.l.b16 %v338
    %v1429 = vunpack.c.h.b16 %v338
    %v1430 = vunpack.c.l.b16 %v339
    %v1431 = vunpack.c.h.b16 %v339
    %v1432 = vunpack.c.l.b16 %v340
    %v1433 = vunpack.c.h.b16 %v340
    %v1434 = vunpack.c.l.b16 %v341
    %v1435 = vunpack.c.h.b16 %v341
    %v1436 = vunpack.c.l.b16 %v342
    %v1437 = vunpack.c.h.b16 %v342
    %v1438 = vunpack.c.l.b16 %v343
    %v1439 = vunpack.c.h.b16 %v343
    %v1440 = vunpack.c.l.b16 %v344
    %v1441 = vunpack.c.h.b16 %v344
    %v1442 = vunpack.c.l.b16 %v345
    %v1443 = vunpack.c.h.b16 %v345
    %v1444 = vunpack.c.l.b16 %v346
    %v1445 = vunpack.c.h.b16 %v346
    %v1446 = vunpack.c.l.b16 %v347
    %v1447 = vunpack.c.h.b16 %v347
    %v1448 = vunpack.c.l.b16 %v348
    %v1449 = vunpack.c.h.b16 %v348
    %v1450 = vunpack.c.l.b16 %v349
    %v1451 = vunpack.c.h.b16 %v349
    %v1452 = vunpack.c.l.b16 %v350
    %v1453 = vunpack.c.h.b16 %v350
    %v1454 = vunpack.c.l.b16 %v351
    %v1455 = vunpack.c.h.b16 %v351
    %v1456 = vunpack.c.l.b16 %v352
    %v1457 = vunpack.c.h.b16 %v352
    %v1458 = vunpack.c.l.b16 %v353
    %v1459 = vunpack.c.h.b16 %v353
    %v1460 = vunpack.c.l.b16 %v354
    %v1461 = vunpack.c.h.b16 %v354
    %v1462 = vunpack.c.l.b16 %v355
    %v1463 = vunpack.c.h.b16 %v355
    %v1464 = vunpack.c.l.b16 %v356
    %v1465 = vunpack.c.h.b16 %v356
    %v1466 = vunpack.c.l.b16 %v357
    %v1467 = vunpack.c.h.b16 %v357
    %v1468 = vunpack.c.l.b16 %v358
    %v1469 = vunpack.c.h.b16 %v358
    %v1470 = vunpack.c.l.b16 %v359
    %v1471 = vunpack.c.h.b16 %v359
    %v1472 = vunpack.c.l.b16 %v360
    %v1473 = vunpack.c.h.b16 %v360
    %v1474 = vunpack.c.l.b16 %v361
    %v1475 = vunpack.c.h.b16 %v361
    %v1476 = vunpack.c.l.b16 %v362
    %v1477 = vunpack.c.h.b16 %v362
    %v1478 = vunpack.c.l.b16 %v363
    %v1479 = vunpack.c.h.b16 %v363
    %v1480 = vunpack.c.l.b16 %v364
    %v1481 = vunpack.c.h.b16 %v364
    %v1482 = vunpack.c.l.b16 %v365
    %v1483 = vunpack.c.h.b16 %v365
    %v1484 = vunpack.c.l.b16 %v366
    %v1485 = vunpack.c.h.b16 %v366
    %v1486 = vunpack.c.l.b16 %v367
    %v1487 = vunpack.c.h.b16 %v367
    %v1488 = vunpack.c.l.b16 %v368
    %v1489 = vunpack.c.h.b16 %v368
    %v1490 = vunpack.c.l.b16 %v369
    %v1491 = vunpack.c.h.b16 %v369
    %v1492 = vunpack.c.l.b16 %v370
    %v1493 = vunpack.c.h.b16 %v370
    %v1494 = vunpack.c.l.b16 %v371
    %v1495 = vunpack.c.h.b16 %v371
    %v1496 = vunpack.c.l.b16 %v372
    %v1497 = vunpack.c.h.b16 %v372
    %v1498 = vunpack.c.l.b16 %v373
    %v1499 = vunpack.c.h.b16 %v373
    %v1500 = vunpack.c.l.b16 %v374
    %v1501 = vunpack.c.h.b16 %v374
    %v1502 = vunpack.c.l.b16 %v375
    %v1503 = vunpack.c.h.b16 %v375
    %v1504 = vunpack.c.l.b16 %v376
    %v1505 = vunpack.c.h.b16 %v376
    %v1506 = vunpack.c.l.b16 %v377
    %v1507 = vunpack.c.h.b16 %v377
    %v1508 = vunpack.c.l.b16 %v378
    %v1509 = vunpack.c.h.b16 %v378
    %v1510 = vunpack.c.l.b16 %v379
    %v1511 = vunpack.c.h.b16 %v379
    %v1512 = vunpack.c.l.b16 %v380
    %v1513 = vunpack.c.h.b16 %v380
    %v1514 = vunpack.c.l.b16 %v381
    %v1515 = vunpack.c.h.b16 %v381
    %v1516 = vunpack.c.l.b16 %v382
    %v1517 = vunpack.c.h.b16 %v382
    %v1518 = vunpack.c.l.b16 %v383
    %v1519 = vunpack.c.h.b16 %v383
    %v1520 = vunpack.c.l.b16 %v384
    %v1521 = vunpack.c.h.b16 %v384
    %v1522 = vunpack.c.l.b16 %v385
    %v1523 = vunpack.c.h.b16 %v385
    %v1524 = vunpack.c.l.b16 %v386
    %v1525 = vunpack.c.h.b16 %v386
    %v1526 = vunpack.c.l.b16 %v387
    %v1527 = vunpack.c.h.b16 %v387
    %v1528 = vunpack.c.l.b16 %v388
    %v1529 = vunpack.c.h.b16 %v388
    %v1530 = vunpack.c.l.b16 %v389
    %v1531 = vunpack.c.h.b16 %v389
    %v1532 = vunpack.c.l.b16 %v390
    %v1533 = vunpack.c.h.b16 %v390
    %v1534 = vunpack.c.l.b16 %v391
    %v1535 = vunpack.c.h.b16 %v391
    %v1536 = vunpack.c.l.b16 %v392
    %v1537 = vunpack.c.h.b16 %v392
    %v1538 = vunpack.c.l.b16 %v393
    %v1539 = vunpack.c.h.b16 %v393
    %v1540 = vunpack.c.l.b16 %v394
    %v1541 = vunpack.c.h.b16 %v394
    %v1542 = vunpack.c.l.b16 %v395
    %v1543 = vunpack.c.h.b16 %v395
    %v1544 = vunpack.c.l.b16 %v396
    %v1545 = vunpack.c.h.b16 %v396
    %v1546 = vunpack.c.l.b16 %v397
    %v1547 = vunpack.c.h.b16 %v397
    %v1548 = vunpack.c.l.b16 %v398
    %v1549 = vunpack.c.h.b16 %v398
    %v1550 = vunpack.c.l.b16 %v399
    %v1551 = vunpack.c.h.b16 %v399
    %v1552 = vunpack.c.l.b16 %v400
    %v1553 = vunpack.c.h.b16 %v400
    %v1554 = vunpack.c.l.b16 %v401
    %v1555 = vunpack.c.h.b16 %v401
    %v1556 = vunpack.c.l.b16 %v402
    %v1557 = vunpack.c.h.b16 %v402
    %v1558 = vunpack.c.l.b16 %v403
    %v1559 = vunpack.c.h.b16 %v403
    %v1560 = vunpack.c.l.b16 %v404
    %v1561 = vunpack.c.h.b16 %v404
    %v1562 = vunpack.c.l.b16 %v405
    %v1563 = vunpack.c.h.b16 %v405
    %v1564 = vunpack.c.l.b16 %v406
    %v1565 = vunpack.c.h.b16 %v406
    %v1566 = vunpack.c.l.b16 %v407
    %v1567 = vunpack.c.h.b16 %v407
    %v1568 = vunpack.c.l.b16 %v408
    %v1569 = vunpack.c.h.b16 %v408
    %v1570 = vunpack.c.l.b16 %v409
    %v1571 = vunpack.c.h.b16 %v409
    %v1572 = vunpack.c.l.b16 %v410
    %v1573 = vunpack.c.h.b16 %v410
    %v1574 = vunpack.c.l.b16 %v411
    %v1575 = vunpack.c.h.b16 %v411
    %v1576 = vunpack.c.l.b16 %v412
    %v1577 = vunpack.c.h.b16 %v412
    %v1578 = vunpack.c.l.b16 %v413
    %v1579 = vunpack.c.h.b16 %v413
    %v1580 = vunpack.c.l.b16 %v414
    %v1581 = vunpack.c.h.b16 %v414
    %v1582 = vunpack.c.l.b16 %v415
    %v1583 = vunpack.c.h.b16 %v415
    %v1584 = vunpack.c.l.b16 %v416
    %v1585 = vunpack.c.h.b16 %v416
    %v1586 = vunpack.c.l.b16 %v417
    %v1587 = vunpack.c.h.b16 %v417
    %v1588 = vunpack.c.l.b16 %v418
    %v1589 = vunpack.c.h.b16 %v418
    %v1590 = vunpack.c.l.b16 %v419
    %v1591 = vunpack.c.h.b16 %v419
    %v1592 = vunpack.c.l.b16 %v420
    %v1593 = vunpack.c.h.b16 %v420
    %v1594 = vunpack.c.l.b16 %v421
    %v1595 = vunpack.c.h.b16 %v421
    %v1596 = vunpack.c.l.b16 %v422
    %v1597 = vunpack.c.h.b16 %v422
    %v1598 = vunpack.c.l.b16 %v423
    %v1599 = vunpack.c.h.b16 %v423
    %v1600 = vunpack.c.l.b16 %v424
    %v1601 = vunpack.c.h.b16 %v424
    %v1602 = vunpack.c.l.b16 %v425
    %v1603 = vunpack.c.h.b16 %v425
    %v1604 = vunpack.c.l.b16 %v426
    %v1605 = vunpack.c.h.b16 %v426
    %v1606 = vunpack.c.l.b16 %v427
    %v1607 = vunpack.c.h.b16 %v427
    %v1608 = vunpack.c.l.b16 %v428
    %v1609 = vunpack.c.h.b16 %v428
    %v1610 = vunpack.c.l.b16 %v429
    %v1611 = vunpack.c.h.b16 %v429
    %v1612 = vunpack.c.l.b16 %v430
    %v1613 = vunpack.c.h.b16 %v430
    %v1614 = vunpack.c.l.b16 %v431
    %v1615 = vunpack.c.h.b16 %v431
    %v1616 = vunpack.c.l.b16 %v432
    %v1617 = vunpack.c.h.b16 %v432
    %v1618 = vunpack.c.l.b16 %v433
    %v1619 = vunpack.c.h.b16 %v433
    %v1620 = vunpack.c.l.b16 %v434
    %v1621 = vunpack.c.h.b16 %v434
    %v1622 = vunpack.c.l.b16 %v435
    %v1623 = vunpack.c.h.b16 %v435
    %v1624 = vunpack.c.l.b16 %v436
    %v1625 = vunpack.c.h.b16 %v436
    %v1626 = vunpack.c.l.b16 %v437
    %v1627 = vunpack.c.h.b16 %v437
    %v1628 = vunpack.c.l.b16 %v438
    %v1629 = vunpack.c.h.b16 %v438
    %v1630 = vunpack.c.l.b16 %v439
    %v1631 = vunpack.c.h.b16 %v439
    %v1632 = vunpack.c.l.b16 %v440
    %v1633 = vunpack.c.h.b16 %v440
    %v1634 = vunpack.c.l.b16 %v441
    %v1635 = vunpack.c.h.b16 %v441
    %v1636 = vunpack.c.l.b16 %v442
    %v1637 = vunpack.c.h.b16 %v442
    %v1638 = vunpack.c.l.b16 %v443
    %v1639 = vunpack.c.h.b16 %v443
    %v1640 = vunpack.c.l.b16 %v444
    %v1641 = vunpack.c.h.b16 %v444
    %v1642 = vunpack.c.l.b16 %v445
    %v1643 = vunpack.c.h.b16 %v445
    %v1644 = vunpack.c.l.b16 %v446
    %v1645 = vunpack.c.h.b16 %v446
    %v1646 = vunpack.c.l.b16 %v447
    %v1647 = vunpack.c.h.b16 %v447
    %v1648 = vunpack.c.l.b16 %v448
    %v1649 = vunpack.c.h.b16 %v448
    %v1650 = vunpack.c.l.b16 %v449
    %v1651 = vunpack.c.h.b16 %v449
    %v1652 = vunpack.c.l.b16 %v450
    %v1653 = vunpack.c.h.b16 %v450
    %v1654 = vunpack.c.l.b16 %v451
    %v1655 = vunpack.c.h.b16 %v451
    %v1656 = vunpack.c.l.b16 %v452
    %v1657 = vunpack.c.h.b16 %v452
    %v1658 = vunpack.c.l.b16 %v453
    %v1659 = vunpack.c.h.b16 %v453
    %v1660 = vunpack.c.l.b16 %v454
    %v1661 = vunpack.c.h.b16 %v454
    %v1662 = vunpack.c.l.b16 %v455
    %v1663 = vunpack.c.h.b16 %v455
    %v1664 = vunpack.c.l.b16 %v456
    %v1665 = vunpack.c.h.b16 %v456
    %v1666 = vunpack.c.l.b16 %v457
    %v1667 = vunpack.c.h.b16 %v457
    %v1668 = vunpack.c.l.b16 %v458
    %v1669 = vunpack.c.h.b16 %v458
    %v1670 = vunpack.c.l.b16 %v459
    %v1671 = vunpack.c.h.b16 %v459
    %v1672 = vunpack.c.l.b16 %v460
    %v1673 = vunpack.c.h.b16 %v460
    %v1674 = vunpack.c.l.b16 %v461
    %v1675 = vunpack.c.h.b16 %v461
    %v1676 = vunpack.c.l.b16 %v462
    %v1677 = vunpack.c.h.b16 %v462
    %v1678 = vunpack.c.l.b16 %v463
    %v1679 = vunpack.c.h.b16 %v463
    %v1680 = vunpack.c.l.b16 %v464
    %v1681 = vunpack.c.h.b16 %v464
    %v1682 = vunpack.c.l.b16 %v465
    %v1683 = vunpack.c.h.b16 %v465
    %v1684 = vunpack.c.l.b16 %v466
    %v1685 = vunpack.c.h.b16 %v466
    %v1686 = vunpack.c.l.b16 %v467
    %v1687 = vunpack.c.h.b16 %v467
    %v1688 = vunpack.c.l.b16 %v468
    %v1689 = vunpack.c.h.b16 %v468
    %v1690 = vunpack.c.l.b16 %v469
    %v1691 = vunpack.c.h.b16 %v469
    %v1692 = vunpack.c.l.b16 %v470
    %v1693 = vunpack.c.h.b16 %v470
    %v1694 = vunpack.c.l.b16 %v471
    %v1695 = vunpack.c.h.b16 %v471
    %v1696 = vunpack.c.l.b16 %v472
    %v1697 = vunpack.c.h.b16 %v472
    %v1698 = vunpack.c.l.b16 %v473
    %v1699 = vunpack.c.h.b16 %v473
    %v1700 = vunpack.c.l.b16 %v474
    %v1701 = vunpack.c.h.b16 %v474
    %v1702 = vunpack.c.l.b16 %v475
    %v1703 = vunpack.c.h.b16 %v475
    %v1704 = vunpack.c.l.b16 %v476
    %v1705 = vunpack.c.h.b16 %v476
    %v1706 = vunpack.c.l.b16 %v477
    %v1707 = vunpack.c.h.b16 %v477
    %v1708 = vunpack.c.l.b16 %v478
    %v1709 = vunpack.c.h.b16 %v478
    %v1710 = vunpack.c.l.b16 %v479
    %v1711 = vunpack.c.h.b16 %v479
    %v1712 = vunpack.c.l.b16 %v480
    %v1713 = vunpack.c.h.b16 %v480
    %v1714 = vunpack.c.l.b16 %v481
    %v1715 = vunpack.c.h.b16 %v481
    %v1716 = vunpack.c.l.b16 %v482
    %v1717 = vunpack.c.h.b16 %v482
    %v1718 = vunpack.c.l.b16 %v483
    %v1719 = vunpack.c.h.b16 %v483
    %v1720 = vunpack.c.l.b16 %v484
    %v1721 = vunpack.c.h.b16 %v484
    %v1722 = vunpack.c.l.b16 %v485
    %v1723 = vunpack.c.h.b16 %v485
    %v1724 = vunpack.c.l.b16 %v486
    %v1725 = vunpack.c.h.b16 %v486
    %v1726 = vunpack.c.l.b16 %v487
    %v1727 = vunpack.c.h.b16 %v487
    %v1728 = vunpack.c.l.b16 %v488
    %v1729 = vunpack.c.h.b16 %v488
    %v1730 = vunpack.c.l.b16 %v489
    %v1731 = vunpack.c.h.b16 %v489
    %v1732 = vunpack.c.l.b16 %v490
    %v1733 = vunpack.c.h.b16 %v490
    %v1734 = vunpack.c.l.b16 %v491
    %v1735 = vunpack.c.h.b16 %v491
    %v1736 = vunpack.c.l.b16 %v492
    %v1737 = vunpack.c.h.b16 %v492
    %v1738 = vunpack.c.l.b16 %v493
    %v1739 = vunpack.c.h.b16 %v493
    %v1740 = vunpack.c.l.b16 %v494
    %v1741 = vunpack.c.h.b16 %v494
    %v1742 = vunpack.c.l.b16 %v495
    %v1743 = vunpack.c.h.b16 %v495
    %v1744 = vunpack.c.l.b16 %v496
    %v1745 = vunpack.c.h.b16 %v496
    %v1746 = vunpack.c.l.b16 %v497
    %v1747 = vunpack.c.h.b16 %v497
    %v1748 = vunpack.c.l.b16 %v498
    %v1749 = vunpack.c.h.b16 %v498
    %v1750 = vunpack.c.l.b16 %v499
    %v1751 = vunpack.c.h.b16 %v499
    %v1752 = vunpack.c.l.b16 %v500
    %v1753 = vunpack.c.h.b16 %v500
    %v1754 = vunpack.c.l.b16 %v501
    %v1755 = vunpack.c.h.b16 %v501
    %v1756 = vunpack.c.l.b16 %v502
    %v1757 = vunpack.c.h.b16 %v502
    %v1758 = vunpack.c.l.b16 %v503
    %v1759 = vunpack.c.h.b16 %v503
    %v1760 = vunpack.c.l.b16 %v504
    %v1761 = vunpack.c.h.b16 %v504
    %v1762 = vunpack.c.l.b16 %v505
    %v1763 = vunpack.c.h.b16 %v505
    %v1764 = vunpack.c.l.b16 %v506
    %v1765 = vunpack.c.h.b16 %v506
    %v1766 = vunpack.c.l.b16 %v507
    %v1767 = vunpack.c.h.b16 %v507
    %v1768 = vunpack.c.l.b16 %v508
    %v1769 = vunpack.c.h.b16 %v508
    %v1770 = vunpack.c.l.b16 %v509
    %v1771 = vunpack.c.h.b16 %v509
    %v1772 = vunpack.c.l.b16 %v510
    %v1773 = vunpack.c.h.b16 %v510
    %v1774 = vunpack.c.l.b16 %v511
    %v1775 = vunpack.c.h.b16 %v511
    %v1776 = vunpack.c.l.b16 %v512
    %v1777 = vunpack.c.h.b16 %v512
    %v1778 = vunpack.c.l.b16 %v513
    %v1779 = vunpack.c.h.b16 %v513
    %v1780 = vunpack.c.l.b16 %v514
    %v1781 = vunpack.c.h.b16 %v514
    %v1782 = vunpack.c.l.b16 %v515
    %v1783 = vunpack.c.h.b16 %v515
    %v1784 = vunpack.c.l.b16 %v516
    %v1785 = vunpack.c.h.b16 %v516
    %v1786 = vunpack.c.l.b16 %v517
    %v1787 = vunpack.c.h.b16 %v517
    %v1788 = vunpack.c.l.b16 %v518
    %v1789 = vunpack.c.h.b16 %v518
    %v1790 = vunpack.c.l.b16 %v519
    %v1791 = vunpack.c.h.b16 %v519
    %v1792 = vunpack.c.l.b16 %v520
    %v1793 = vunpack.c.h.b16 %v520
    %v1794 = vunpack.c.l.b16 %v521
    %v1795 = vunpack.c.h.b16 %v521
    %v1796 = vunpack.c.l.b16 %v522
    %v1797 = vunpack.c.h.b16 %v522
    %v1798 = vunpack.c.l.b16 %v523
    %v1799 = vunpack.c.h.b16 %v523
    %v1800 = vunpack.c.l.b16 %v524
    %v1801 = vunpack.c.h.b16 %v524
    %v1802 = vunpack.c.l.b16 %v525
    %v1803 = vunpack.c.h.b16 %v525
    %v1804 = vunpack.c.l.b16 %v526
    %v1805 = vunpack.c.h.b16 %v526
    %v1806 = vunpack.c.l.b16 %v527
    %v1807 = vunpack.c.h.b16 %v527
    %v1808 = vunpack.c.l.b16 %v528
    %v1809 = vunpack.c.h.b16 %v528
    %v1810 = vunpack.c.l.b16 %v529
    %v1811 = vunpack.c.h.b16 %v529
    %v1812 = vunpack.c.l.b16 %v530
    %v1813 = vunpack.c.h.b16 %v530
    %v1814 = vunpack.c.l.b16 %v531
    %v1815 = vunpack.c.h.b16 %v531
    %v1816 = vunpack.c.l.b16 %v532
    %v1817 = vunpack.c.h.b16 %v532
    %v1818 = vunpack.c.l.b16 %v533
    %v1819 = vunpack.c.h.b16 %v533
    %v1820 = vunpack.c.l.b16 %v534
    %v1821 = vunpack.c.h.b16 %v534
    %v1822 = vunpack.c.l.b16 %v535
    %v1823 = vunpack.c.h.b16 %v535
    %v1824 = vunpack.c.l.b16 %v536
    %v1825 = vunpack.c.h.b16 %v536
    %v1826 = vunpack.c.l.b16 %v537
    %v1827 = vunpack.c.h.b16 %v537
    %v1828 = vunpack.c.l.b16 %v538
    %v1829 = vunpack.c.h.b16 %v538
    %v1830 = vunpack.c.l.b16 %v539
    %v1831 = vunpack.c.h.b16 %v539
    %v1832 = vunpack.c.l.b16 %v540
    %v1833 = vunpack.c.h.b16 %v540
    %v1834 = vunpack.c.l.b16 %v541
    %v1835 = vunpack.c.h.b16 %v541
    %v1836 = vunpack.c.l.b16 %v542
    %v1837 = vunpack.c.h.b16 %v542
    %v1838 = vunpack.c.l.b16 %v543
    %v1839 = vunpack.c.h.b16 %v543
    %v1840 = vunpack.c.l.b16 %v544
    %v1841 = vunpack.c.h.b16 %v544
    %v1842 = vunpack.c.l.b16 %v545
    %v1843 = vunpack.c.h.b16 %v545
    %v1844 = vunpack.c.l.b16 %v546
    %v1845 = vunpack.c.h.b16 %v546
    %v1846 = vunpack.c.l.b16 %v547
    %v1847 = vunpack.c.h.b16 %v547
    %v1848 = vunpack.c.l.b16 %v548
    %v1849 = vunpack.c.h.b16 %v548
    %v1850 = vunpack.c.l.b16 %v549
    %v1851 = vunpack.c.h.b16 %v549
    %v1852 = vunpack.c.l.b16 %v550
    %v1853 = vunpack.c.h.b16 %v550
    %v1854 = vunpack.c.l.b16 %v551
    %v1855 = vunpack.c.h.b16 %v551
    %v1856 = vunpack.c.l.b16 %v552
    %v1857 = vunpack.c.h.b16 %v552
    %v1858 = vunpack.c.l.b16 %v553
    %v1859 = vunpack.c.h.b16 %v553
    %v1860 = vunpack.c.l.b16 %v554
    %v1861 = vunpack.c.h.b16 %v554
    %v1862 = vunpack.c.l.b16 %v555
    %v1863 = vunpack.c.h.b16 %v555
    %v1864 = vunpack.c.l.b16 %v556
    %v1865 = vunpack.c.h.b16 %v556
    %v1866 = vunpack.c.l.b16 %v557
    %v1867 = vunpack.c.h.b16 %v557
    %v1868 = vunpack.c.l.b16 %v558
    %v1869 = vunpack.c.h.b16 %v558
    %v1870 = vunpack.c.l.b16 %v559
    %v1871 = vunpack.c.h.b16 %v559
    %v1872 = vunpack.c.l.b16 %v560
    %v1873 = vunpack.c.h.b16 %v560
    %v1874 = vunpack.c.l.b16 %v561
    %v1875 = vunpack.c.h.b16 %v561
    %v1876 = vunpack.c.l.b16 %v562
    %v1877 = vunpack.c.h.b16 %v562
    %v1878 = vunpack.c.l.b16 %v563
    %v1879 = vunpack.c.h.b16 %v563
    %v1880 = vunpack.c.l.b16 %v564
    %v1881 = vunpack.c.h.b16 %v564
    %v1882 = vunpack.c.l.b16 %v565
    %v1883 = vunpack.c.h.b16 %v565
    %v1884 = vunpack.c.l.b16 %v566
    %v1885 = vunpack.c.h.b16 %v566
    %v1886 = vunpack.c.l.b16 %v567
    %v1887 = vunpack.c.h.b16 %v567
    %v1888 = vunpack.c.l.b16 %v568
    %v1889 = vunpack.c.h.b16 %v568
    %v1890 = vunpack.c.l.b16 %v569
    %v1891 = vunpack.c.h.b16 %v569
    %v1892 = vunpack.c.l.b16 %v570
    %v1893 = vunpack.c.h.b16 %v570
    %v1894 = vunpack.c.l.b16 %v571
    %v1895 = vunpack.c.h.b16 %v571
    %v1896 = vunpack.c.l.b16 %v572
    %v1897 = vunpack.c.h.b16 %v572
    %v1898 = vunpack.c.l.b16 %v573
    %v1899 = vunpack.c.h.b16 %v573
    %v1900 = vunpack.c.l.b16 %v574
    %v1901 = vunpack.c.h.b16 %v574
    %v1902 = vunpack.c.l.b16 %v575
    %v1903 = vunpack.c.h.b16 %v575
    %v1904 = vunpack.c.l.b16 %v576
    %v1905 = vunpack.c.h.b16 %v576
    %v1906 = vunpack.c.l.b16 %v577
    %v1907 = vunpack.c.h.b16 %v577
    %v1908 = vunpack.c.l.b16 %v578
    %v1909 = vunpack.c.h.b16 %v578
    %v1910 = vunpack.c.l.b16 %v579
    %v1911 = vunpack.c.h.b16 %v579
    %v1912 = vunpack.c.l.b16 %v580
    %v1913 = vunpack.c.h.b16 %v580
    %v1914 = vunpack.c.l.b16 %v581
    %v1915 = vunpack.c.h.b16 %v581
    %v1916 = vunpack.c.l.b16 %v582
    %v1917 = vunpack.c.h.b16 %v582
    %v1918 = vunpack.c.l.b16 %v583
    %v1919 = vunpack.c.h.b16 %v583
    %v1920 = vunpack.c.l.b16 %v584
    %v1921 = vunpack.c.h.b16 %v584
    %v1922 = vunpack.c.l.b16 %v585
    %v1923 = vunpack.c.h.b16 %v585
    %v1924 = vunpack.c.l.b16 %v586
    %v1925 = vunpack.c.h.b16 %v586
    %v1926 = vunpack.c.l.b16 %v587
    %v1927 = vunpack.c.h.b16 %v587
    %v1928 = vunpack.c.l.b16 %v588
    %v1929 = vunpack.c.h.b16 %v588
    %v1930 = vunpack.c.l.b16 %v589
    %v1931 = vunpack.c.h.b16 %v589
    %v1932 = vunpack.c.l.b16 %v590
    %v1933 = vunpack.c.h.b16 %v590
    %v1934 = vunpack.c.l.b16 %v591
    %v1935 = vunpack.c.h.b16 %v591
    %v1936 = vunpack.c.l.b16 %v592
    %v1937 = vunpack.c.h.b16 %v592
    %v1938 = vunpack.c.l.b16 %v593
    %v1939 = vunpack.c.h.b16 %v593
    %v1940 = vunpack.c.l.b16 %v594
    %v1941 = vunpack.c.h.b16 %v594
    %v1942 = vunpack.c.l.b16 %v595
    %v1943 = vunpack.c.h.b16 %v595
    %v1944 = vunpack.c.l.b16 %v596
    %v1945 = vunpack.c.h.b16 %v596
    %v1946 = vunpack.c.l.b16 %v597
    %v1947 = vunpack.c.h.b16 %v597
    %v1948 = vunpack.c.l.b16 %v598
    %v1949 = vunpack.c.h.b16 %v598
    %v1950 = vunpack.c.l.b16 %v599
    %v1951 = vunpack.c.h.b16 %v599
    %v1952 = vunpack.c.l.b16 %v600
    %v1953 = vunpack.c.h.b16 %v600
    %v1954 = vunpack.c.l.b16 %v601
    %v1955 = vunpack.c.h.b16 %v601
    %v1956 = vunpack.c.l.b16 %v602
    %v1957 = vunpack.c.h.b16 %v602
    %v1958 = vunpack.c.l.b16 %v603
    %v1959 = vunpack.c.h.b16 %v603
    %v1960 = vunpack.c.l.b16 %v604
    %v1961 = vunpack.c.h.b16 %v604
    %v1962 = vunpack.c.l.b16 %v605
    %v1963 = vunpack.c.h.b16 %v605
    %v1964 = vunpack.c.l.b16 %v606
    %v1965 = vunpack.c.h.b16 %v606
    %v1966 = vunpack.c.l.b16 %v607
    %v1967 = vunpack.c.h.b16 %v607
    %v1968 = vunpack.c.l.b16 %v608
    %v1969 = vunpack.c.h.b16 %v608
    %v1970 = vunpack.c.l.b16 %v609
    %v1971 = vunpack.c.h.b16 %v609
    %v1972 = vunpack.c.l.b16 %v610
    %v1973 = vunpack.c.h.b16 %v610
    %v1974 = vunpack.c.l.b16 %v611
    %v1975 = vunpack.c.h.b16 %v611
    %v1976 = vunpack.c.l.b16 %v612
    %v1977 = vunpack.c.h.b16 %v612
    %v1978 = vunpack.c.l.b16 %v613
    %v1979 = vunpack.c.h.b16 %v613
    %v1980 = vunpack.c.l.b16 %v614
    %v1981 = vunpack.c.h.b16 %v614
    %v1982 = vunpack.c.l.b16 %v615
    %v1983 = vunpack.c.h.b16 %v615
    %v1984 = vunpack.c.l.b16 %v616
    %v1985 = vunpack.c.h.b16 %v616
    %v1986 = vunpack.c.l.b16 %v617
    %v1987 = vunpack.c.h.b16 %v617
    %v1988 = vunpack.c.l.b16 %v618
    %v1989 = vunpack.c.h.b16 %v618
    %v1990 = vunpack.c.l.b16 %v619
    %v1991 = vunpack.c.h.b16 %v619
    %v1992 = vunpack.c.l.b16 %v620
    %v1993 = vunpack.c.h.b16 %v620
    %v1994 = vunpack.c.l.b16 %v621
    %v1995 = vunpack.c.h.b16 %v621
    %v1996 = vunpack.c.l.b16 %v622
    %v1997 = vunpack.c.h.b16 %v622
    %v1998 = vunpack.c.l.b16 %v623
    %v1999 = vunpack.c.h.b16 %v623
    %v2000 = vunpack.c.l.b16 %v624
    %v2001 = vunpack.c.h.b16 %v624
    %v2002 = vunpack.c.l.b16 %v625
    %v2003 = vunpack.c.h.b16 %v625
    %v2004 = vunpack.c.l.b16 %v626
    %v2005 = vunpack.c.h.b16 %v626
    %v2006 = vunpack.c.l.b16 %v627
    %v2007 = vunpack.c.h.b16 %v627
    %v2008 = vunpack.c.l.b16 %v628
    %v2009 = vunpack.c.h.b16 %v628
    %v2010 = vunpack.c.l.b16 %v629
    %v2011 = vunpack.c.h.b16 %v629
    %v2012 = vunpack.c.l.b16 %v630
    %v2013 = vunpack.c.h.b16 %v630
    %v2014 = vunpack.c.l.b16 %v631
    %v2015 = vunpack.c.h.b16 %v631
    %v2016 = vunpack.c.l.b16 %v632
    %v2017 = vunpack.c.h.b16 %v632
    %v2018 = vunpack.c.l.b16 %v633
    %v2019 = vunpack.c.h.b16 %v633
    %v2020 = vunpack.c.l.b16 %v634
    %v2021 = vunpack.c.h.b16 %v634
    %v2022 = vunpack.c.l.b16 %v635
    %v2023 = vunpack.c.h.b16 %v635
    %v2024 = vunpack.c.l.b16 %v636
    %v2025 = vunpack.c.h.b16 %v636
    %v2026 = vunpack.c.l.b16 %v637
    %v2027 = vunpack.c.h.b16 %v637
    %v2028 = vunpack.c.l.b16 %v638
    %v2029 = vunpack.c.h.b16 %v638
    %v2030 = vunpack.c.l.b16 %v639
    %v2031 = vunpack.c.h.b16 %v639
    %v2032 = vunpack.c.l.b16 %v640
    %v2033 = vunpack.c.h.b16 %v640
    %v2034 = vunpack.c.l.b16 %v641
    %v2035 = vunpack.c.h.b16 %v641
    %v2036 = vunpack.c.l.b16 %v642
    %v2037 = vunpack.c.h.b16 %v642
    %v2038 = vunpack.c.l.b16 %v643
    %v2039 = vunpack.c.h.b16 %v643
    %v2040 = vunpack.c.l.b16 %v644
    %v2041 = vunpack.c.h.b16 %v644
    %v2042 = vunpack.c.l.b16 %v645
    %v2043 = vunpack.c.h.b16 %v645
    %v2044 = vunpack.c.l.b16 %v646
    %v2045 = vunpack.c.h.b16 %v646
    %v2046 = vunpack.c.l.b16 %v647
    %v2047 = vunpack.c.h.b16 %v647
    %v2048 = vunpack.c.l.b16 %v648
    %v2049 = vunpack.c.h.b16 %v648
    %v2050 = vunpack.c.l.b16 %v649
    %v2051 = vunpack.c.h.b16 %v649
    %v2052 = vunpack.c.l.b16 %v650
    %v2053 = vunpack.c.h.b16 %v650
    %v2054 = vunpack.c.l.b16 %v651
    %v2055 = vunpack.c.h.b16 %v651
    %v2056 = vunpack.c.l.b16 %v652
    %v2057 = vunpack.c.h.b16 %v652
    %v2058 = vunpack.c.l.b16 %v653
    %v2059 = vunpack.c.h.b16 %v653
    %v2060 = vunpack.c.l.b16 %v654
    %v2061 = vunpack.c.h.b16 %v654
    %v2062 = vunpack.c.l.b16 %v655
    %v2063 = vunpack.c.h.b16 %v655
    %v2064 = vunpack.c.l.b16 %v656
    %v2065 = vunpack.c.h.b16 %v656
    %v2066 = vunpack.c.l.b16 %v657
    %v2067 = vunpack.c.h.b16 %v657
    %v2068 = vunpack.c.l.b16 %v658
    %v2069 = vunpack.c.h.b16 %v658
    %v2070 = vunpack.c.l.b16 %v659
    %v2071 = vunpack.c.h.b16 %v659
    %v2072 = vunpack.c.l.b16 %v660
    %v2073 = vunpack.c.h.b16 %v660
    %v2074 = vunpack.c.l.b16 %v661
    %v2075 = vunpack.c.h.b16 %v661
    %v2076 = vunpack.c.l.b16 %v662
    %v2077 = vunpack.c.h.b16 %v662
    %v2078 = vunpack.c.l.b16 %v663
    %v2079 = vunpack.c.h.b16 %v663
    %v2080 = vunpack.c.l.b16 %v664
    %v2081 = vunpack.c.h.b16 %v664
    %v2082 = vunpack.c.l.b16 %v665
    %v2083 = vunpack.c.h.b16 %v665
    %v2084 = vunpack.c.l.b16 %v666
    %v2085 = vunpack.c.h.b16 %v666
    %v2086 = vunpack.c.l.b16 %v667
    %v2087 = vunpack.c.h.b16 %v667
    %v2088 = vunpack.c.l.b16 %v668
    %v2089 = vunpack.c.h.b16 %v668
    %v2090 = vunpack.c.l.b16 %v669
    %v2091 = vunpack.c.h.b16 %v669
    %v2092 = vunpack.c.l.b16 %v670
    %v2093 = vunpack.c.h.b16 %v670
    %v2094 = vunpack.c.l.b16 %v671
    %v2095 = vunpack.c.h.b16 %v671
    %v2096 = vunpack.c.l.b16 %v672
    %v2097 = vunpack.c.h.b16 %v672
    %v2098 = vunpack.c.l.b16 %v673
    %v2099 = vunpack.c.h.b16 %v673
    %v2100 = vunpack.c.l.b16 %v674
    %v2101 = vunpack.c.h.b16 %v674
    %v2102 = vunpack.c.l.b16 %v675
    %v2103 = vunpack.c.h.b16 %v675
    %v2104 = vunpack.c.l.b16 %v676
    %v2105 = vunpack.c.h.b16 %v676
    %v2106 = vunpack.c.l.b16 %v677
    %v2107 = vunpack.c.h.b16 %v677
    %v2108 = vunpack.c.l.b16 %v678
    %v2109 = vunpack.c.h.b16 %v678
    %v2110 = vunpack.c.l.b16 %v679
    %v2111 = vunpack.c.h.b16 %v679
    %v2112 = vunpack.c.l.b16 %v680
    %v2113 = vunpack.c.h.b16 %v680
    %v2114 = vunpack.c.l.b16 %v681
    %v2115 = vunpack.c.h.b16 %v681
    %v2116 = vunpack.c.l.b16 %v682
    %v2117 = vunpack.c.h.b16 %v682
    %v2118 = vunpack.c.l.b16 %v683
    %v2119 = vunpack.c.h.b16 %v683
    %v2120 = vunpack.c.l.b16 %v684
    %v2121 = vunpack.c.h.b16 %v684
    %v2122 = vunpack.c.l.b16 %v685
    %v2123 = vunpack.c.h.b16 %v685
    %v2124 = vunpack.c.l.b16 %v686
    %v2125 = vunpack.c.h.b16 %v686
    %v2126 = vunpack.c.l.b16 %v687
    %v2127 = vunpack.c.h.b16 %v687
    %v2128 = vunpack.c.l.b16 %v688
    %v2129 = vunpack.c.h.b16 %v688
    %v2130 = vunpack.c.l.b16 %v689
    %v2131 = vunpack.c.h.b16 %v689
    %v2132 = vunpack.c.l.b16 %v690
    %v2133 = vunpack.c.h.b16 %v690
    %v2134 = vunpack.c.l.b16 %v691
    %v2135 = vunpack.c.h.b16 %v691
    %v2136 = vunpack.c.l.b16 %v692
    %v2137 = vunpack.c.h.b16 %v692
    %v2138 = vunpack.c.l.b16 %v693
    %v2139 = vunpack.c.h.b16 %v693
    %v2140 = vunpack.c.l.b16 %v694
    %v2141 = vunpack.c.h.b16 %v694
    %v2142 = vunpack.c.l.b16 %v695
    %v2143 = vunpack.c.h.b16 %v695
    %v2144 = vunpack.c.l.b16 %v696
    %v2145 = vunpack.c.h.b16 %v696
    %v2146 = vunpack.c.l.b16 %v697
    %v2147 = vunpack.c.h.b16 %v697
    %v2148 = vunpack.c.l.b16 %v698
    %v2149 = vunpack.c.h.b16 %v698
    %v2150 = vunpack.c.l.b16 %v699
    %v2151 = vunpack.c.h.b16 %v699
    %v2152 = vunpack.c.l.b16 %v700
    %v2153 = vunpack.c.h.b16 %v700
    %v2154 = vunpack.c.l.b16 %v701
    %v2155 = vunpack.c.h.b16 %v701
    %v2156 = vunpack.c.l.b16 %v702
    %v2157 = vunpack.c.h.b16 %v702
    %v2158 = vunpack.c.l.b16 %v703
    %v2159 = vunpack.c.h.b16 %v703
    %v2160 = vunpack.c.l.b16 %v704
    %v2161 = vunpack.c.h.b16 %v704
    %v2162 = vunpack.c.l.b16 %v705
    %v2163 = vunpack.c.h.b16 %v705
    %v2164 = vunpack.c.l.b16 %v706
    %v2165 = vunpack.c.h.b16 %v706
    %v2166 = vunpack.c.l.b16 %v707
    %v2167 = vunpack.c.h.b16 %v707
    %v2168 = vunpack.c.l.b16 %v708
    %v2169 = vunpack.c.h.b16 %v708
    %v2170 = vunpack.c.l.b16 %v709
    %v2171 = vunpack.c.h.b16 %v709
    %v2172 = vunpack.c.l.b16 %v710
    %v2173 = vunpack.c.h.b16 %v710
    %v2174 = vunpack.c.l.b16 %v711
    %v2175 = vunpack.c.h.b16 %v711
    %v2176 = vunpack.c.l.b16 %v712
    %v2177 = vunpack.c.h.b16 %v712
    %v2178 = vunpack.c.l.b16 %v713
    %v2179 = vunpack.c.h.b16 %v713
    %v2180 = vunpack.c.l.b16 %v714
    %v2181 = vunpack.c.h.b16 %v714
    %v2182 = vunpack.c.l.b16 %v715
    %v2183 = vunpack.c.h.b16 %v715
    %v2184 = vunpack.c.l.b16 %v716
    %v2185 = vunpack.c.h.b16 %v716
    %v2186 = vunpack.c.l.b16 %v717
    %v2187 = vunpack.c.h.b16 %v717
    %v2188 = vunpack.c.l.b16 %v718
    %v2189 = vunpack.c.h.b16 %v718
    %v2190 = vunpack.c.l.b16 %v719
    %v2191 = vunpack.c.h.b16 %v719
    %v2192 = vunpack.c.l.b16 %v720
    %v2193 = vunpack.c.h.b16 %v720
    %v2194 = vunpack.c.l.b16 %v721
    %v2195 = vunpack.c.h.b16 %v721
    %v2196 = vunpack.c.l.b16 %v722
    %v2197 = vunpack.c.h.b16 %v722
    %v2198 = vunpack.c.l.b16 %v723
    %v2199 = vunpack.c.h.b16 %v723
    %v2200 = vunpack.c.l.b16 %v724
    %v2201 = vunpack.c.h.b16 %v724
    %v2202 = vunpack.c.l.b16 %v725
    %v2203 = vunpack.c.h.b16 %v725
    %v2204 = vunpack.c.l.b16 %v726
    %v2205 = vunpack.c.h.b16 %v726
    %v2206 = vunpack.c.l.b16 %v727
    %v2207 = vunpack.c.h.b16 %v727
    %v2208 = vunpack.c.l.b16 %v728
    %v2209 = vunpack.c.h.b16 %v728
    %v2210 = vunpack.c.l.b16 %v729
    %v2211 = vunpack.c.h.b16 %v729
    %v2212 = vunpack.c.l.b16 %v730
    %v2213 = vunpack.c.h.b16 %v730
    %v2214 = vunpack.c.l.b16 %v731
    %v2215 = vunpack.c.h.b16 %v731
    %v2216 = vunpack.c.l.b16 %v732
    %v2217 = vunpack.c.h.b16 %v732
    %v2218 = vunpack.c.l.b16 %v733
    %v2219 = vunpack.c.h.b16 %v733
    %v2220 = vunpack.c.l.b16 %v734
    %v2221 = vunpack.c.h.b16 %v734
    %v2222 = vunpack.c.l.b16 %v735
    %v2223 = vunpack.c.h.b16 %v735
    %v2224 = vunpack.c.l.b16 %v736
    %v2225 = vunpack.c.h.b16 %v736
    %v2226 = vunpack.c.l.b16 %v737
    %v2227 = vunpack.c.h.b16 %v737
    %v2228 = vunpack.c.l.b16 %v738
    %v2229 = vunpack.c.h.b16 %v738
    %v2230 = vunpack.c.l.b16 %v739
    %v2231 = vunpack.c.h.b16 %v739
    %v2232 = vunpack.c.l.b16 %v740
    %v2233 = vunpack.c.h.b16 %v740
    %v2234 = vunpack.c.l.b16 %v741
    %v2235 = vunpack.c.h.b16 %v741
    %v2236 = vunpack.c.l.b16 %v742
    %v2237 = vunpack.c.h.b16 %v742
    %v2238 = vunpack.c.l.b16 %v743
    %v2239 = vunpack.c.h.b16 %v743
    %v2240 = vunpack.c.l.b16 %v744
    %v2241 = vunpack.c.h.b16 %v744
    %v2242 = vunpack.c.l.b16 %v745
    %v2243 = vunpack.c.h.b16 %v745
    %v2244 = vunpack.c.l.b16 %v746
    %v2245 = vunpack.c.h.b16 %v746
    %v2246 = vunpack.c.l.b16 %v747
    %v2247 = vunpack.c.h.b16 %v747
    %v2248 = vunpack.c.l.b16 %v748
    %v2249 = vunpack.c.h.b16 %v748
    %v2250 = vunpack.c.l.b16 %v749
    %v2251 = vunpack.c.h.b16 %v749
    %v2252 = vunpack.c.l.b16 %v750
    %v2253 = vunpack.c.h.b16 %v750
    %v2254 = vunpack.c.l.b16 %v751
    %v2255 = vunpack.c.h.b16 %v751
    %v2256 = vunpack.c.l.b16 %v752
    %v2257 = vunpack.c.h.b16 %v752
    %v2258 = vunpack.c.l.b16 %v753
    %v2259 = vunpack.c.h.b16 %v753
    %v2260 = vunpack.c.l.b16 %v754
    %v2261 = vunpack.c.h.b16 %v754
    %v2262 = vunpack.c.l.b16 %v755
    %v2263 = vunpack.c.h.b16 %v755
    %v2264 = vunpack.c.l.b16 %v756
    %v2265 = vunpack.c.h.b16 %v756
    %v2266 = vunpack.c.l.b16 %v757
    %v2267 = vunpack.c.h.b16 %v757
    %v2268 = vunpack.c.l.b16 %v758
    %v2269 = vunpack.c.h.b16 %v758
    %v2270 = vunpack.c.l.b16 %v759
    %v2271 = vunpack.c.h.b16 %v759
    %v2272 = vunpack.c.l.b16 %v760
    %v2273 = vunpack.c.h.b16 %v760
    %v2274 = vunpack.c.l.b16 %v761
    %v2275 = vunpack.c.h.b16 %v761
    %v2276 = vunpack.c.l.b16 %v762
    %v2277 = vunpack.c.h.b16 %v762
    %v2278 = vunpack.c.l.b16 %v763
    %v2279 = vunpack.c.h.b16 %v763
    %v2280 = vunpack.c.l.b16 %v764
    %v2281 = vunpack.c.h.b16 %v764
    %v2282 = vunpack.c.l.b16 %v765
    %v2283 = vunpack.c.h.b16 %v765
    %v2284 = vunpack.c.l.b16 %v766
    %v2285 = vunpack.c.h.b16 %v766
    %v2286 = vunpack.c.l.b16 %v767
    %v2287 = vunpack.c.h.b16 %v767
    %v2288 = vunpack.c.l.b16 %v768
    %v2289 = vunpack.c.h.b16 %v768
    %v2290 = vunpack.c.l.b16 %v769
    %v2291 = vunpack.c.h.b16 %v769
    %v2292 = vunpack.c.l.b16 %v770
    %v2293 = vunpack.c.h.b16 %v770
    %v2294 = vunpack.c.l.b16 %v771
    %v2295 = vunpack.c.h.b16 %v771
    %v2296 = vunpack.c.l.b16 %v772
    %v2297 = vunpack.c.h.b16 %v772
    %v2298 = vunpack.c.l.b16 %v773
    %v2299 = vunpack.c.h.b16 %v773
    %v2300 = vunpack.c.l.b16 %v774
    %v2301 = vunpack.c.h.b16 %v774
    %v2302 = vunpack.c.l.b16 %v775
    %v2303 = vunpack.c.h.b16 %v775
    %v2304 = vunpack.c.l.b16 %v776
    %v2305 = vunpack.c.h.b16 %v776
    %v2306 = vunpack.c.l.b16 %v777
    %v2307 = vunpack.c.h.b16 %v777
    %v2308 = vunpack.c.l.b16 %v778
    %v2309 = vunpack.c.h.b16 %v778
    %v2310 = vunpack.c.l.b16 %v779
    %v2311 = vunpack.c.h.b16 %v779
    %v2312 = vunpack.c.l.b16 %v780
    %v2313 = vunpack.c.h.b16 %v780
    %v2314 = vunpack.c.l.b16 %v781
    %v2315 = vunpack.c.h.b16 %v781
    %v2316 = vunpack.c.l.b16 %v782
    %v2317 = vunpack.c.h.b16 %v782
    %v2318 = vunpack.c.l.b16 %v783
    %v2319 = vunpack.c.h.b16 %v783
    %v2320 = vunpack.c.l.b16 %v784
    %v2321 = vunpack.c.h.b16 %v784
    %v2322 = vunpack.c.l.b16 %v785
    %v2323 = vunpack.c.h.b16 %v785
    %v2324 = vunpack.c.l.b16 %v786
    %v2325 = vunpack.c.h.b16 %v786
    %v2326 = vunpack.c.l.b16 %v787
    %v2327 = vunpack.c.h.b16 %v787
    %v2328 = vunpack.c.l.b16 %v788
    %v2329 = vunpack.c.h.b16 %v788
    %v2330 = vunpack.c.l.b16 %v789
    %v2331 = vunpack.c.h.b16 %v789
    %v2332 = vunpack.c.l.b16 %v790
    %v2333 = vunpack.c.h.b16 %v790
    %v2334 = vunpack.c.l.b16 %v791
    %v2335 = vunpack.c.h.b16 %v791
    %v2336 = vunpack.c.l.b16 %v792
    %v2337 = vunpack.c.h.b16 %v792
    %v2338 = vunpack.c.l.b16 %v793
    %v2339 = vunpack.c.h.b16 %v793
    %v2340 = vunpack.c.l.b16 %v794
    %v2341 = vunpack.c.h.b16 %v794
    %v2342 = vunpack.c.l.b16 %v795
    %v2343 = vunpack.c.h.b16 %v795
    %v2344 = vunpack.c.l.b16 %v796
    %v2345 = vunpack.c.h.b16 %v796
    %v2346 = vunpack.c.l.b16 %v797
    %v2347 = vunpack.c.h.b16 %v797
    %v2348 = vunpack.c.l.b16 %v798
    %v2349 = vunpack.c.h.b16 %v798
    %v2350 = vunpack.c.l.b16 %v799
    %v2351 = vunpack.c.h.b16 %v799
    %v2352 = vunpack.c.l.b16 %v800
    %v2353 = vunpack.c.h.b16 %v800
    %v2354 = vunpack.c.l.b16 %v801
    %v2355 = vunpack.c.h.b16 %v801
    %v2356 = vpack.c.b16 %v1340, %v1332
    %v2357 = vpack.c.b16 %v1341, %v1333
    %v2358 = vpack.c.b16 %v1342, %v1334
    %v2359 = vpack.c.b16 %v1343, %v1335
    %v2360 = vpack.c.b16 %v1344, %v1336
    %v2361 = vpack.c.b16 %v1345, %v1337
    %v2362 = vpack.c.b16 %v1346, %v1338
    %v2363 = vpack.c.b16 %v1347, %v1339
    %v2364 = vpack.c.b16 %v1356, %v1348
    %v2365 = vpack.c.b16 %v1357, %v1349
    %v2366 = vpack.c.b16 %v1358, %v1350
    %v2367 = vpack.c.b16 %v1359, %v1351
    %v2368 = vpack.c.b16 %v1360, %v1352
    %v2369 = vpack.c.b16 %v1361, %v1353
    %v2370 = vpack.c.b16 %v1362, %v1354
    %v2371 = vpack.c.b16 %v1363, %v1355
    %v2372 = vpack.c.b16 %v1372, %v1364
    %v2373 = vpack.c.b16 %v1373, %v1365
    %v2374 = vpack.c.b16 %v1374, %v1366
    %v2375 = vpack.c.b16 %v1375, %v1367
    %v2376 = vpack.c.b16 %v1376, %v1368
    %v2377 = vpack.c.b16 %v1377, %v1369
    %v2378 = vpack.c.b16 %v1378, %v1370
    %v2379 = vpack.c.b16 %v1379, %v1371
    %v2380 = vpack.c.b16 %v1388, %v1380
    %v2381 = vpack.c.b16 %v1389, %v1381
    %v2382 = vpack.c.b16 %v1390, %v1382
    %v2383 = vpack.c.b16 %v1391, %v1383
    %v2384 = vpack.c.b16 %v1392, %v1384
    %v2385 = vpack.c.b16 %v1393, %v1385
    %v2386 = vpack.c.b16 %v1394, %v1386
    %v2387 = vpack.c.b16 %v1395, %v1387
    %v2388 = vpack.c.b16 %v1404, %v1396
    %v2389 = vpack.c.b16 %v1405, %v1397
    %v2390 = vpack.c.b16 %v1406, %v1398
    %v2391 = vpack.c.b16 %v1407, %v1399
    %v2392 = vpack.c.b16 %v1408, %v1400
    %v2393 = vpack.c.b16 %v1409, %v1401
    %v2394 = vpack.c.b16 %v1410, %v1402
    %v2395 = vpack.c.b16 %v1411, %v1403
    %v2396 = vpack.c.b16 %v1420, %v1412
    %v2397 = vpack.c.b16 %v1421, %v1413
    %v2398 = vpack.c.b16 %v1422, %v1414
    %v2399 = vpack.c.b16 %v1423, %v1415
    %v2400 = vpack.c.b16 %v1424, %v1416
    %v2401 = vpack.c.b16 %v1425, %v1417
    %v2402 = vpack.c.b16 %v1426, %v1418
    %v2403 = vpack.c.b16 %v1427, %v1419
    %v2404 = vpack.c.b16 %v1436, %v1428
    %v2405 = vpack.c.b16 %v1437, %v1429
    %v2406 = vpack.c.b16 %v1438, %v1430
    %v2407 = vpack.c.b16 %v1439, %v1431
    %v2408 = vpack.c.b16 %v1440, %v1432
    %v2409 = vpack.c.b16 %v1441, %v1433
    %v2410 = vpack.c.b16 %v1442, %v1434
    %v2411 = vpack.c.b16 %v1443, %v1435
    %v2412 = vpack.c.b16 %v1452, %v1444
    %v2413 = vpack.c.b16 %v1453, %v1445
    %v2414 = vpack.c.b16 %v1454, %v1446
    %v2415 = vpack.c.b16 %v1455, %v1447
    %v2416 = vpack.c.b16 %v1456, %v1448
    %v2417 = vpack.c.b16 %v1457, %v1449
    %v2418 = vpack.c.b16 %v1458, %v1450
    %v2419 = vpack.c.b16 %v1459, %v1451
    %v2420 = vpack.c.b16 %v1468, %v1460
    %v2421 = vpack.c.b16 %v1469, %v1461
    %v2422 = vpack.c.b16 %v1470, %v1462
    %v2423 = vpack.c.b16 %v1471, %v1463
    %v2424 = vpack.c.b16 %v1472, %v1464
    %v2425 = vpack.c.b16 %v1473, %v1465
    %v2426 = vpack.c.b16 %v1474, %v1466
    %v2427 = vpack.c.b16 %v1475, %v1467
    %v2428 = vpack.c.b16 %v1484, %v1476
    %v2429 = vpack.c.b16 %v1485, %v1477
    %v2430 = vpack.c.b16 %v1486, %v1478
    %v2431 = vpack.c.b16 %v1487, %v1479
    %v2432 = vpack.c.b16 %v1488, %v1480
    %v2433 = vpack.c.b16 %v1489, %v1481
    %v2434 = vpack.c.b16 %v1490, %v1482
    %v2435 = vpack.c.b16 %v1491, %v1483
    %v2436 = vpack.c.b16 %v1500, %v1492
    %v2437 = vpack.c.b16 %v1501, %v1493
    %v2438 = vpack.c.b16 %v1502, %v1494
    %v2439 = vpack.c.b16 %v1503, %v1495
    %v2440 = vpack.c.b16 %v1504, %v1496
    %v2441 = vpack.c.b16 %v1505, %v1497
    %v2442 = vpack.c.b16 %v1506, %v1498
    %v2443 = vpack.c.b16 %v1507, %v1499
    %v2444 = vpack.c.b16 %v1516, %v1508
    %v2445 = vpack.c.b16 %v1517, %v1509
    %v2446 = vpack.c.b16 %v1518, %v1510
    %v2447 = vpack.c.b16 %v1519, %v1511
    %v2448 = vpack.c.b16 %v1520, %v1512
    %v2449 = vpack.c.b16 %v1521, %v1513
    %v2450 = vpack.c.b16 %v1522, %v1514
    %v2451 = vpack.c.b16 %v1523, %v1515
    %v2452 = vpack.c.b16 %v1532, %v1524
    %v2453 = vpack.c.b16 %v1533, %v1525
    %v2454 = vpack.c.b16 %v1534, %v1526
    %v2455 = vpack.c.b16 %v1535, %v1527
    %v2456 = vpack.c.b16 %v1536, %v1528
    %v2457 = vpack.c.b16 %v1537, %v1529
    %v2458 = vpack.c.b16 %v1538, %v1530
    %v2459 = vpack.c.b16 %v1539, %v1531
    %v2460 = vpack.c.b16 %v1548, %v1540
    %v2461 = vpack.c.b16 %v1549, %v1541
    %v2462 = vpack.c.b16 %v1550, %v1542
    %v2463 = vpack.c.b16 %v1551, %v1543
    %v2464 = vpack.c.b16 %v1552, %v1544
    %v2465 = vpack.c.b16 %v1553, %v1545
    %v2466 = vpack.c.b16 %v1554, %v1546
    %v2467 = vpack.c.b16 %v1555, %v1547
    %v2468 = vpack.c.b16 %v1564, %v1556
    %v2469 = vpack.c.b16 %v1565, %v1557
    %v2470 = vpack.c.b16 %v1566, %v1558
    %v2471 = vpack.c.b16 %v1567, %v1559
    %v2472 = vpack.c.b16 %v1568, %v1560
    %v2473 = vpack.c.b16 %v1569, %v1561
    %v2474 = vpack.c.b16 %v1570, %v1562
    %v2475 = vpack.c.b16 %v1571, %v1563
    %v2476 = vpack.c.b16 %v1580, %v1572
    %v2477 = vpack.c.b16 %v1581, %v1573
    %v2478 = vpack.c.b16 %v1582, %v1574
    %v2479 = vpack.c.b16 %v1583, %v1575
    %v2480 = vpack.c.b16 %v1584, %v1576
    %v2481 = vpack.c.b16 %v1585, %v1577
    %v2482 = vpack.c.b16 %v1586, %v1578
    %v2483 = vpack.c.b16 %v1587, %v1579
    %v2484 = vpack.c.b16 %v1596, %v1588
    %v2485 = vpack.c.b16 %v1597, %v1589
    %v2486 = vpack.c.b16 %v1598, %v1590
    %v2487 = vpack.c.b16 %v1599, %v1591
    %v2488 = vpack.c.b16 %v1600, %v1592
    %v2489 = vpack.c.b16 %v1601, %v1593
    %v2490 = vpack.c.b16 %v1602, %v1594
    %v2491 = vpack.c.b16 %v1603, %v1595
    %v2492 = vpack.c.b16 %v1612, %v1604
    %v2493 = vpack.c.b16 %v1613, %v1605
    %v2494 = vpack.c.b16 %v1614, %v1606
    %v2495 = vpack.c.b16 %v1615, %v1607
    %v2496 = vpack.c.b16 %v1616, %v1608
    %v2497 = vpack.c.b16 %v1617, %v1609
    %v2498 = vpack.c.b16 %v1618, %v1610
    %v2499 = vpack.c.b16 %v1619, %v1611
    %v2500 = vpack.c.b16 %v1628, %v1620
    %v2501 = vpack.c.b16 %v1629, %v1621
    %v2502 = vpack.c.b16 %v1630, %v1622
    %v2503 = vpack.c.b16 %v1631, %v1623
    %v2504 = vpack.c.b16 %v1632, %v1624
    %v2505 = vpack.c.b16 %v1633, %v1625
    %v2506 = vpack.c.b16 %v1634, %v1626
    %v2507 = vpack.c.b16 %v1635, %v1627
    %v2508 = vpack.c.b16 %v1644, %v1636
    %v2509 = vpack.c.b16 %v1645, %v1637
    %v2510 = vpack.c.b16 %v1646, %v1638
    %v2511 = vpack.c.b16 %v1647, %v1639
    %v2512 = vpack.c.b16 %v1648, %v1640
    %v2513 = vpack.c.b16 %v1649, %v1641
    %v2514 = vpack.c.b16 %v1650, %v1642
    %v2515 = vpack.c.b16 %v1651, %v1643
    %v2516 = vpack.c.b16 %v1660, %v1652
    %v2517 = vpack.c.b16 %v1661, %v1653
    %v2518 = vpack.c.b16 %v1662, %v1654
    %v2519 = vpack.c.b16 %v1663, %v1655
    %v2520 = vpack.c.b16 %v1664, %v1656
    %v2521 = vpack.c.b16 %v1665, %v1657
    %v2522 = vpack.c.b16 %v1666, %v1658
    %v2523 = vpack.c.b16 %v1667, %v1659
    %v2524 = vpack.c.b16 %v1676, %v1668
    %v2525 = vpack.c.b16 %v1677, %v1669
    %v2526 = vpack.c.b16 %v1678, %v1670
    %v2527 = vpack.c.b16 %v1679, %v1671
    %v2528 = vpack.c.b16 %v1680, %v1672
    %v2529 = vpack.c.b16 %v1681, %v1673
    %v2530 = vpack.c.b16 %v1682, %v1674
    %v2531 = vpack.c.b16 %v1683, %v1675
    %v2532 = vpack.c.b16 %v1692, %v1684
    %v2533 = vpack.c.b16 %v1693, %v1685
    %v2534 = vpack.c.b16 %v1694, %v1686
    %v2535 = vpack.c.b16 %v1695, %v1687
    %v2536 = vpack.c.b16 %v1696, %v1688
    %v2537 = vpack.c.b16 %v1697, %v1689
    %v2538 = vpack.c.b16 %v1698, %v1690
    %v2539 = vpack.c.b16 %v1699, %v1691
    %v2540 = vpack.c.b16 %v1708, %v1700
    %v2541 = vpack.c.b16 %v1709, %v1701
    %v2542 = vpack.c.b16 %v1710, %v1702
    %v2543 = vpack.c.b16 %v1711, %v1703
    %v2544 = vpack.c.b16 %v1712, %v1704
    %v2545 = vpack.c.b16 %v1713, %v1705
    %v2546 = vpack.c.b16 %v1714, %v1706
    %v2547 = vpack.c.b16 %v1715, %v1707
    %v2548 = vpack.c.b16 %v1724, %v1716
    %v2549 = vpack.c.b16 %v1725, %v1717
    %v2550 = vpack.c.b16 %v1726, %v1718
    %v2551 = vpack.c.b16 %v1727, %v1719
    %v2552 = vpack.c.b16 %v1728, %v1720
    %v2553 = vpack.c.b16 %v1729, %v1721
    %v2554 = vpack.c.b16 %v1730, %v1722
    %v2555 = vpack.c.b16 %v1731, %v1723
    %v2556 = vpack.c.b16 %v1740, %v1732
    %v2557 = vpack.c.b16 %v1741, %v1733
    %v2558 = vpack.c.b16 %v1742, %v1734
    %v2559 = vpack.c.b16 %v1743, %v1735
    %v2560 = vpack.c.b16 %v1744, %v1736
    %v2561 = vpack.c.b16 %v1745, %v1737
    %v2562 = vpack.c.b16 %v1746, %v1738
    %v2563 = vpack.c.b16 %v1747, %v1739
    %v2564 = vpack.c.b16 %v1756, %v1748
    %v2565 = vpack.c.b16 %v1757, %v1749
    %v2566 = vpack.c.b16 %v1758, %v1750
    %v2567 = vpack.c.b16 %v1759, %v1751
    %v2568 = vpack.c.b16 %v1760, %v1752
    %v2569 = vpack.c.b16 %v1761, %v1753
    %v2570 = vpack.c.b16 %v1762, %v1754
    %v2571 = vpack.c.b16 %v1763, %v1755
    %v2572 = vpack.c.b16 %v1772, %v1764
    %v2573 = vpack.c.b16 %v1773, %v1765
    %v2574 = vpack.c.b16 %v1774, %v1766
    %v2575 = vpack.c.b16 %v1775, %v1767
    %v2576 = vpack.c.b16 %v1776, %v1768
    %v2577 = vpack.c.b16 %v1777, %v1769
    %v2578 = vpack.c.b16 %v1778, %v1770
    %v2579 = vpack.c.b16 %v1779, %v1771
    %v2580 = vpack.c.b16 %v1788, %v1780
    %v2581 = vpack.c.b16 %v1789, %v1781
    %v2582 = vpack.c.b16 %v1790, %v1782
    %v2583 = vpack.c.b16 %v1791, %v1783
    %v2584 = vpack.c.b16 %v1792, %v1784
    %v2585 = vpack.c.b16 %v1793, %v1785
    %v2586 = vpack.c.b16 %v1794, %v1786
    %v2587 = vpack.c.b16 %v1795, %v1787
    %v2588 = vpack.c.b16 %v1804, %v1796
    %v2589 = vpack.c.b16 %v1805, %v1797
    %v2590 = vpack.c.b16 %v1806, %v1798
    %v2591 = vpack.c.b16 %v1807, %v1799
    %v2592 = vpack.c.b16 %v1808, %v1800
    %v2593 = vpack.c.b16 %v1809, %v1801
    %v2594 = vpack.c.b16 %v1810, %v1802
    %v2595 = vpack.c.b16 %v1811, %v1803
    %v2596 = vpack.c.b16 %v1820, %v1812
    %v2597 = vpack.c.b16 %v1821, %v1813
    %v2598 = vpack.c.b16 %v1822, %v1814
    %v2599 = vpack.c.b16 %v1823, %v1815
    %v2600 = vpack.c.b16 %v1824, %v1816
    %v2601 = vpack.c.b16 %v1825, %v1817
    %v2602 = vpack.c.b16 %v1826, %v1818
    %v2603 = vpack.c.b16 %v1827, %v1819
    %v2604 = vpack.c.b16 %v1836, %v1828
    %v2605 = vpack.c.b16 %v1837, %v1829
    %v2606 = vpack.c.b16 %v1838, %v1830
    %v2607 = vpack.c.b16 %v1839, %v1831
    %v2608 = vpack.c.b16 %v1840, %v1832
    %v2609 = vpack.c.b16 %v1841, %v1833
    %v2610 = vpack.c.b16 %v1842, %v1834
    %v2611 = vpack.c.b16 %v1843, %v1835
    %v2612 = vpack.c.b16 %v1852, %v1844
    %v2613 = vpack.c.b16 %v1853, %v1845
    %v2614 = vpack.c.b16 %v1854, %v1846
    %v2615 = vpack.c.b16 %v1855, %v1847
    %v2616 = vpack.c.b16 %v1856, %v1848
    %v2617 = vpack.c.b16 %v1857, %v1849
    %v2618 = vpack.c.b16 %v1858, %v1850
    %v2619 = vpack.c.b16 %v1859, %v1851
    %v2620 = vpack.c.b16 %v1868, %v1860
    %v2621 = vpack.c.b16 %v1869, %v1861
    %v2622 = vpack.c.b16 %v1870, %v1862
    %v2623 = vpack.c.b16 %v1871, %v1863
    %v2624 = vpack.c.b16 %v1872, %v1864
    %v2625 = vpack.c.b16 %v1873, %v1865
    %v2626 = vpack.c.b16 %v1874, %v1866
    %v2627 = vpack.c.b16 %v1875, %v1867
    %v2628 = vpack.c.b16 %v1884, %v1876
    %v2629 = vpack.c.b16 %v1885, %v1877
    %v2630 = vpack.c.b16 %v1886, %v1878
    %v2631 = vpack.c.b16 %v1887, %v1879
    %v2632 = vpack.c.b16 %v1888, %v1880
    %v2633 = vpack.c.b16 %v1889, %v1881
    %v2634 = vpack.c.b16 %v1890, %v1882
    %v2635 = vpack.c.b16 %v1891, %v1883
    %v2636 = vpack.c.b16 %v1900, %v1892
    %v2637 = vpack.c.b16 %v1901, %v1893
    %v2638 = vpack.c.b16 %v1902, %v1894
    %v2639 = vpack.c.b16 %v1903, %v1895
    %v2640 = vpack.c.b16 %v1904, %v1896
    %v2641 = vpack.c.b16 %v1905, %v1897
    %v2642 = vpack.c.b16 %v1906, %v1898
    %v2643 = vpack.c.b16 %v1907, %v1899
    %v2644 = vpack.c.b16 %v1916, %v1908
    %v2645 = vpack.c.b16 %v1917, %v1909
    %v2646 = vpack.c.b16 %v1918, %v1910
    %v2647 = vpack.c.b16 %v1919, %v1911
    %v2648 = vpack.c.b16 %v1920, %v1912
    %v2649 = vpack.c.b16 %v1921, %v1913
    %v2650 = vpack.c.b16 %v1922, %v1914
    %v2651 = vpack.c.b16 %v1923, %v1915
    %v2652 = vpack.c.b16 %v1932, %v1924
    %v2653 = vpack.c.b16 %v1933, %v1925
    %v2654 = vpack.c.b16 %v1934, %v1926
    %v2655 = vpack.c.b16 %v1935, %v1927
    %v2656 = vpack.c.b16 %v1936, %v1928
    %v2657 = vpack.c.b16 %v1937, %v1929
    %v2658 = vpack.c.b16 %v1938, %v1930
    %v2659 = vpack.c.b16 %v1939, %v1931
    %v2660 = vpack.c.b16 %v1948, %v1940
    %v2661 = vpack.c.b16 %v1949, %v1941
    %v2662 = vpack.c.b16 %v1950, %v1942
    %v2663 = vpack.c.b16 %v1951, %v1943
    %v2664 = vpack.c.b16 %v1952, %v1944
    %v2665 = vpack.c.b16 %v1953, %v1945
    %v2666 = vpack.c.b16 %v1954, %v1946
    %v2667 = vpack.c.b16 %v1955, %v1947
    %v2668 = vpack.c.b16 %v1964, %v1956
    %v2669 = vpack.c.b16 %v1965, %v1957
    %v2670 = vpack.c.b16 %v1966, %v1958
    %v2671 = vpack.c.b16 %v1967, %v1959
    %v2672 = vpack.c.b16 %v1968, %v1960
    %v2673 = vpack.c.b16 %v1969, %v1961
    %v2674 = vpack.c.b16 %v1970, %v1962
    %v2675 = vpack.c.b16 %v1971, %v1963
    %v2676 = vpack.c.b16 %v1980, %v1972
    %v2677 = vpack.c.b16 %v1981, %v1973
    %v2678 = vpack.c.b16 %v1982, %v1974
    %v2679 = vpack.c.b16 %v1983, %v1975
    %v2680 = vpack.c.b16 %v1984, %v1976
    %v2681 = vpack.c.b16 %v1985, %v1977
    %v2682 = vpack.c.b16 %v1986, %v1978
    %v2683 = vpack.c.b16 %v1987, %v1979
    %v2684 = vpack.c.b16 %v1996, %v1988
    %v2685 = vpack.c.b16 %v1997, %v1989
    %v2686 = vpack.c.b16 %v1998, %v1990
    %v2687 = vpack.c.b16 %v1999, %v1991
    %v2688 = vpack.c.b16 %v2000, %v1992
    %v2689 = vpack.c.b16 %v2001, %v1993
    %v2690 = vpack.c.b16 %v2002, %v1994
    %v2691 = vpack.c.b16 %v2003, %v1995
    %v2692 = vpack.c.b16 %v2012, %v2004
    %v2693 = vpack.c.b16 %v2013, %v2005
    %v2694 = vpack.c.b16 %v2014, %v2006
    %v2695 = vpack.c.b16 %v2015, %v2007
    %v2696 = vpack.c.b16 %v2016, %v2008
    %v2697 = vpack.c.b16 %v2017, %v2009
    %v2698 = vpack.c.b16 %v2018, %v2010
    %v2699 = vpack.c.b16 %v2019, %v2011
    %v2700 = vpack.c.b16 %v2028, %v2020
    %v2701 = vpack.c.b16 %v2029, %v2021
    %v2702 = vpack.c.b16 %v2030, %v2022
    %v2703 = vpack.c.b16 %v2031, %v2023
    %v2704 = vpack.c.b16 %v2032, %v2024
    %v2705 = vpack.c.b16 %v2033, %v2025
    %v2706 = vpack.c.b16 %v2034, %v2026
    %v2707 = vpack.c.b16 %v2035, %v2027
    %v2708 = vpack.c.b16 %v2044, %v2036
    %v2709 = vpack.c.b16 %v2045, %v2037
    %v2710 = vpack.c.b16 %v2046, %v2038
    %v2711 = vpack.c.b16 %v2047, %v2039
    %v2712 = vpack.c.b16 %v2048, %v2040
    %v2713 = vpack.c.b16 %v2049, %v2041
    %v2714 = vpack.c.b16 %v2050, %v2042
    %v2715 = vpack.c.b16 %v2051, %v2043
    %v2716 = vpack.c.b16 %v2060, %v2052
    %v2717 = vpack.c.b16 %v2061, %v2053
    %v2718 = vpack.c.b16 %v2062, %v2054
    %v2719 = vpack.c.b16 %v2063, %v2055
    %v2720 = vpack.c.b16 %v2064, %v2056
    %v2721 = vpack.c.b16 %v2065, %v2057
    %v2722 = vpack.c.b16 %v2066, %v2058
    %v2723 = vpack.c.b16 %v2067, %v2059
    %v2724 = vpack.c.b16 %v2076, %v2068
    %v2725 = vpack.c.b16 %v2077, %v2069
    %v2726 = vpack.c.b16 %v2078, %v2070
    %v2727 = vpack.c.b16 %v2079, %v2071
    %v2728 = vpack.c.b16 %v2080, %v2072
    %v2729 = vpack.c.b16 %v2081, %v2073
    %v2730 = vpack.c.b16 %v2082, %v2074
    %v2731 = vpack.c.b16 %v2083, %v2075
    %v2732 = vpack.c.b16 %v2092, %v2084
    %v2733 = vpack.c.b16 %v2093, %v2085
    %v2734 = vpack.c.b16 %v2094, %v2086
    %v2735 = vpack.c.b16 %v2095, %v2087
    %v2736 = vpack.c.b16 %v2096, %v2088
    %v2737 = vpack.c.b16 %v2097, %v2089
    %v2738 = vpack.c.b16 %v2098, %v2090
    %v2739 = vpack.c.b16 %v2099, %v2091
    %v2740 = vpack.c.b16 %v2108, %v2100
    %v2741 = vpack.c.b16 %v2109, %v2101
    %v2742 = vpack.c.b16 %v2110, %v2102
    %v2743 = vpack.c.b16 %v2111, %v2103
    %v2744 = vpack.c.b16 %v2112, %v2104
    %v2745 = vpack.c.b16 %v2113, %v2105
    %v2746 = vpack.c.b16 %v2114, %v2106
    %v2747 = vpack.c.b16 %v2115, %v2107
    %v2748 = vpack.c.b16 %v2124, %v2116
    %v2749 = vpack.c.b16 %v2125, %v2117
    %v2750 = vpack.c.b16 %v2126, %v2118
    %v2751 = vpack.c.b16 %v2127, %v2119
    %v2752 = vpack.c.b16 %v2128, %v2120
    %v2753 = vpack.c.b16 %v2129, %v2121
    %v2754 = vpack.c.b16 %v2130, %v2122
    %v2755 = vpack.c.b16 %v2131, %v2123
    %v2756 = vpack.c.b16 %v2140, %v2132
    %v2757 = vpack.c.b16 %v2141, %v2133
    %v2758 = vpack.c.b16 %v2142, %v2134
    %v2759 = vpack.c.b16 %v2143, %v2135
    %v2760 = vpack.c.b16 %v2144, %v2136
    %v2761 = vpack.c.b16 %v2145, %v2137
    %v2762 = vpack.c.b16 %v2146, %v2138
    %v2763 = vpack.c.b16 %v2147, %v2139
    %v2764 = vpack.c.b16 %v2156, %v2148
    %v2765 = vpack.c.b16 %v2157, %v2149
    %v2766 = vpack.c.b16 %v2158, %v2150
    %v2767 = vpack.c.b16 %v2159, %v2151
    %v2768 = vpack.c.b16 %v2160, %v2152
    %v2769 = vpack.c.b16 %v2161, %v2153
    %v2770 = vpack.c.b16 %v2162, %v2154
    %v2771 = vpack.c.b16 %v2163, %v2155
    %v2772 = vpack.c.b16 %v2172, %v2164
    %v2773 = vpack.c.b16 %v2173, %v2165
    %v2774 = vpack.c.b16 %v2174, %v2166
    %v2775 = vpack.c.b16 %v2175, %v2167
    %v2776 = vpack.c.b16 %v2176, %v2168
    %v2777 = vpack.c.b16 %v2177, %v2169
    %v2778 = vpack.c.b16 %v2178, %v2170
    %v2779 = vpack.c.b16 %v2179, %v2171
    %v2780 = vpack.c.b16 %v2188, %v2180
    %v2781 = vpack.c.b16 %v2189, %v2181
    %v2782 = vpack.c.b16 %v2190, %v2182
    %v2783 = vpack.c.b16 %v2191, %v2183
    %v2784 = vpack.c.b16 %v2192, %v2184
    %v2785 = vpack.c.b16 %v2193, %v2185
    %v2786 = vpack.c.b16 %v2194, %v2186
    %v2787 = vpack.c.b16 %v2195, %v2187
    %v2788 = vpack.c.b16 %v2204, %v2196
    %v2789 = vpack.c.b16 %v2205, %v2197
    %v2790 = vpack.c.b16 %v2206, %v2198
    %v2791 = vpack.c.b16 %v2207, %v2199
    %v2792 = vpack.c.b16 %v2208, %v2200
    %v2793 = vpack.c.b16 %v2209, %v2201
    %v2794 = vpack.c.b16 %v2210, %v2202
    %v2795 = vpack.c.b16 %v2211, %v2203
    %v2796 = vpack.c.b16 %v2220, %v2212
    %v2797 = vpack.c.b16 %v2221, %v2213
    %v2798 = vpack.c.b16 %v2222, %v2214
    %v2799 = vpack.c.b16 %v2223, %v2215
    %v2800 = vpack.c.b16 %v2224, %v2216
    %v2801 = vpack.c.b16 %v2225, %v2217
    %v2802 = vpack.c.b16 %v2226, %v2218
    %v2803 = vpack.c.b16 %v2227, %v2219
    %v2804 = vpack.c.b16 %v2236, %v2228
    %v2805 = vpack.c.b16 %v2237, %v2229
    %v2806 = vpack.c.b16 %v2238, %v2230
    %v2807 = vpack.c.b16 %v2239, %v2231
    %v2808 = vpack.c.b16 %v2240, %v2232
    %v2809 = vpack.c.b16 %v2241, %v2233
    %v2810 = vpack.c.b16 %v2242, %v2234
    %v2811 = vpack.c.b16 %v2243, %v2235
    %v2812 = vpack.c.b16 %v2252, %v2244
    %v2813 = vpack.c.b16 %v2253, %v2245
    %v2814 = vpack.c.b16 %v2254, %v2246
    %v2815 = vpack.c.b16 %v2255, %v2247
    %v2816 = vpack.c.b16 %v2256, %v2248
    %v2817 = vpack.c.b16 %v2257, %v2249
    %v2818 = vpack.c.b16 %v2258, %v2250
    %v2819 = vpack.c.b16 %v2259, %v2251
    %v2820 = vpack.c.b16 %v2268, %v2260
    %v2821 = vpack.c.b16 %v2269, %v2261
    %v2822 = vpack.c.b16 %v2270, %v2262
    %v2823 = vpack.c.b16 %v2271, %v2263
    %v2824 = vpack.c.b16 %v2272, %v2264
    %v2825 = vpack.c.b16 %v2273, %v2265
    %v2826 = vpack.c.b16 %v2274, %v2266
    %v2827 = vpack.c.b16 %v2275, %v2267
    %v2828 = vpack.c.b16 %v2284, %v2276
    %v2829 = vpack.c.b16 %v2285, %v2277
    %v2830 = vpack.c.b16 %v2286, %v2278
    %v2831 = vpack.c.b16 %v2287, %v2279
    %v2832 = vpack.c.b16 %v2288, %v2280
    %v2833 = vpack.c.b16 %v2289, %v2281
    %v2834 = vpack.c.b16 %v2290, %v2282
    %v2835 = vpack.c.b16 %v2291, %v2283
    %v2836 = vpack.c.b16 %v2300, %v2292
    %v2837 = vpack.c.b16 %v2301, %v2293
    %v2838 = vpack.c.b16 %v2302, %v2294
    %v2839 = vpack.c.b16 %v2303, %v2295
    %v2840 = vpack.c.b16 %v2304, %v2296
    %v2841 = vpack.c.b16 %v2305, %v2297
    %v2842 = vpack.c.b16 %v2306, %v2298
    %v2843 = vpack.c.b16 %v2307, %v2299
    %v2844 = vpack.c.b16 %v2316, %v2308
    %v2845 = vpack.c.b16 %v2317, %v2309
    %v2846 = vpack.c.b16 %v2318, %v2310
    %v2847 = vpack.c.b16 %v2319, %v2311
    %v2848 = vpack.c.b16 %v2320, %v2312
    %v2849 = vpack.c.b16 %v2321, %v2313
    %v2850 = vpack.c.b16 %v2322, %v2314
    %v2851 = vpack.c.b16 %v2323, %v2315
    %v2852 = vpack.c.b16 %v2332, %v2324
    %v2853 = vpack.c.b16 %v2333, %v2325
    %v2854 = vpack.c.b16 %v2334, %v2326
    %v2855 = vpack.c.b16 %v2335, %v2327
    %v2856 = vpack.c.b16 %v2336, %v2328
    %v2857 = vpack.c.b16 %v2337, %v2329
    %v2858 = vpack.c.b16 %v2338, %v2330
    %v2859 = vpack.c.b16 %v2339, %v2331
    %v2860 = vpack.c.b16 %v2348, %v2340
    %v2861 = vpack.c.b16 %v2349, %v2341
    %v2862 = vpack.c.b16 %v2350, %v2342
    %v2863 = vpack.c.b16 %v2351, %v2343
    %v2864 = vpack.c.b16 %v2352, %v2344
    %v2865 = vpack.c.b16 %v2353, %v2345
    %v2866 = vpack.c.b16 %v2354, %v2346
    %v2867 = vpack.c.b16 %v2355, %v2347
    %3380 = vmatpush.bf16.msra.mxu0 %v2412
    %3381 = vmatpush.bf16.msra.mxu0 %v2404
    %3382 = vmatpush.bf16.msra.mxu0 %v2396
    %3383 = vmatpush.bf16.msra.mxu0 %v2388
    %3384 = vmatpush.bf16.msra.mxu0 %v2380
    %3385 = vmatpush.bf16.msra.mxu0 %v2372
    %3386 = vmatpush.bf16.msra.mxu0 %v2364
    %3387 = vmatpush.bf16.msra.mxu0 %v2356
    %3388 = vmatmul.bf16.gmra.mxu0 %v282
    %v3389 = vpop.f32.mrf.mxu0
    %v3390 = vadd.f32 %v804, %v3389
    %v3391 = vpop.f32.mrf.mxu0
    %3392 = vdwg.mxu0
    %3393 = vmatpush.bf16.msra.mxu0 %v2476
    %3394 = vmatpush.bf16.msra.mxu0 %v2468
    %3395 = vmatpush.bf16.msra.mxu0 %v2460
    %3396 = vmatpush.bf16.msra.mxu0 %v2452
    %3397 = vmatpush.bf16.msra.mxu0 %v2444
    %3398 = vmatpush.bf16.msra.mxu0 %v2436
    %3399 = vmatpush.bf16.msra.mxu0 %v2428
    %3400 = vmatpush.bf16.msra.mxu0 %v2420
    %3401 = vmatmul.bf16.gmra.mxu0 %v283
    %v3402 = vpop.f32.mrf.mxu0
    %v3403 = vadd.f32 %v3390, %v3402
    %v3404 = vpop.f32.mrf.mxu0
    %3405 = vdwg.mxu0
    %3406 = vmatpush.bf16.msra.mxu0 %v2540
    %3407 = vmatpush.bf16.msra.mxu0 %v2532
    %3408 = vmatpush.bf16.msra.mxu0 %v2524
    %3409 = vmatpush.bf16.msra.mxu0 %v2516
    %3410 = vmatpush.bf16.msra.mxu0 %v2508
    %3411 = vmatpush.bf16.msra.mxu0 %v2500
    %3412 = vmatpush.bf16.msra.mxu0 %v2492
    %3413 = vmatpush.bf16.msra.mxu0 %v2484
    %3414 = vmatmul.bf16.gmra.mxu0 %v284
    %v3415 = vpop.f32.mrf.mxu0
    %v3416 = vadd.f32 %v3403, %v3415
    %v3417 = vpop.f32.mrf.mxu0
    %3418 = vdwg.mxu0
    %3419 = vmatpush.bf16.msra.mxu0 %v2604
    %3420 = vmatpush.bf16.msra.mxu0 %v2596
    %3421 = vmatpush.bf16.msra.mxu0 %v2588
    %3422 = vmatpush.bf16.msra.mxu0 %v2580
    %3423 = vmatpush.bf16.msra.mxu0 %v2572
    %3424 = vmatpush.bf16.msra.mxu0 %v2564
    %3425 = vmatpush.bf16.msra.mxu0 %v2556
    %3426 = vmatpush.bf16.msra.mxu0 %v2548
    %3427 = vmatmul.bf16.gmra.mxu0 %v285
    %v3428 = vpop.f32.mrf.mxu0
    %v3429 = vadd.f32 %v3416, %v3428
    %v3430 = vpop.f32.mrf.mxu0
    %3431 = vdwg.mxu0
    %3432 = vmatpush.bf16.msra.mxu0 %v2668
    %3433 = vmatpush.bf16.msra.mxu0 %v2660
    %3434 = vmatpush.bf16.msra.mxu0 %v2652
    %3435 = vmatpush.bf16.msra.mxu0 %v2644
    %3436 = vmatpush.bf16.msra.mxu0 %v2636
    %3437 = vmatpush.bf16.msra.mxu0 %v2628
    %3438 = vmatpush.bf16.msra.mxu0 %v2620
    %3439 = vmatpush.bf16.msra.mxu0 %v2612
    %3440 = vmatmul.bf16.gmra.mxu0 %v286
    %v3441 = vpop.f32.mrf.mxu0
    %v3442 = vadd.f32 %v3429, %v3441
    %v3443 = vpop.f32.mrf.mxu0
    %3444 = vdwg.mxu0
    %3445 = vmatpush.bf16.msra.mxu0 %v2732
    %3446 = vmatpush.bf16.msra.mxu0 %v2724
    %3447 = vmatpush.bf16.msra.mxu0 %v2716
    %3448 = vmatpush.bf16.msra.mxu0 %v2708
    %3449 = vmatpush.bf16.msra.mxu0 %v2700
    %3450 = vmatpush.bf16.msra.mxu0 %v2692
    %3451 = vmatpush.bf16.msra.mxu0 %v2684
    %3452 = vmatpush.bf16.msra.mxu0 %v2676
    %3453 = vmatmul.bf16.gmra.mxu0 %v287
    %v3454 = vpop.f32.mrf.mxu0
    %v3455 = vadd.f32 %v3442, %v3454
    %v3456 = vpop.f32.mrf.mxu0
    %3457 = vdwg.mxu0
    %3458 = vmatpush.bf16.msra.mxu0 %v2796
    %3459 = vmatpush.bf16.msra.mxu0 %v2788
    %3460 = vmatpush.bf16.msra.mxu0 %v2780
    %3461 = vmatpush.bf16.msra.mxu0 %v2772
    %3462 = vmatpush.bf16.msra.mxu0 %v2764
    %3463 = vmatpush.bf16.msra.mxu0 %v2756
    %3464 = vmatpush.bf16.msra.mxu0 %v2748
    %3465 = vmatpush.bf16.msra.mxu0 %v2740
    %3466 = vmatmul.bf16.gmra.mxu0 %v288
    %v3467 = vpop.f32.mrf.mxu0
    %v3468 = vadd.f32 %v3455, %v3467
    %v3469 = vpop.f32.mrf.mxu0
    %3470 = vdwg.mxu0
    %3471 = vmatpush.bf16.msra.mxu0 %v2860
    %3472 = vmatpush.bf16.msra.mxu0 %v2852
    %3473 = vmatpush.bf16.msra.mxu0 %v2844
    %3474 = vmatpush.bf16.msra.mxu0 %v2836
    %3475 = vmatpush.bf16.msra.mxu0 %v2828
    %3476 = vmatpush.bf16.msra.mxu0 %v2820
    %3477 = vmatpush.bf16.msra.mxu0 %v2812
    %3478 = vmatpush.bf16.msra.mxu0 %v2804
    %3479 = vmatmul.bf16.gmra.mxu0 %v289
    %v3480 = vpop.f32.mrf.mxu0
    %v3481 = vadd.f32 %v3468, %v3480
    %v3482 = vpop.f32.mrf.mxu0
    %3483 = vdwg.mxu0
    %3484 = vmatpush.bf16.msra.mxu0 %v2413
    %3485 = vmatpush.bf16.msra.mxu0 %v2405
    %3486 = vmatpush.bf16.msra.mxu0 %v2397
    %3487 = vmatpush.bf16.msra.mxu0 %v2389
    %3488 = vmatpush.bf16.msra.mxu0 %v2381
    %3489 = vmatpush.bf16.msra.mxu0 %v2373
    %3490 = vmatpush.bf16.msra.mxu0 %v2365
    %3491 = vmatpush.bf16.msra.mxu0 %v2357
    %3492 = vmatmul.bf16.gmra.mxu0 %v282
    %v3493 = vpop.f32.mrf.mxu0
    %v3494 = vadd.f32 %v805, %v3493
    %v3495 = vpop.f32.mrf.mxu0
    %3496 = vdwg.mxu0
    %3497 = vmatpush.bf16.msra.mxu0 %v2477
    %3498 = vmatpush.bf16.msra.mxu0 %v2469
    %3499 = vmatpush.bf16.msra.mxu0 %v2461
    %3500 = vmatpush.bf16.msra.mxu0 %v2453
    %3501 = vmatpush.bf16.msra.mxu0 %v2445
    %3502 = vmatpush.bf16.msra.mxu0 %v2437
    %3503 = vmatpush.bf16.msra.mxu0 %v2429
    %3504 = vmatpush.bf16.msra.mxu0 %v2421
    %3505 = vmatmul.bf16.gmra.mxu0 %v283
    %v3506 = vpop.f32.mrf.mxu0
    %v3507 = vadd.f32 %v3494, %v3506
    %v3508 = vpop.f32.mrf.mxu0
    %3509 = vdwg.mxu0
    %3510 = vmatpush.bf16.msra.mxu0 %v2541
    %3511 = vmatpush.bf16.msra.mxu0 %v2533
    %3512 = vmatpush.bf16.msra.mxu0 %v2525
    %3513 = vmatpush.bf16.msra.mxu0 %v2517
    %3514 = vmatpush.bf16.msra.mxu0 %v2509
    %3515 = vmatpush.bf16.msra.mxu0 %v2501
    %3516 = vmatpush.bf16.msra.mxu0 %v2493
    %3517 = vmatpush.bf16.msra.mxu0 %v2485
    %3518 = vmatmul.bf16.gmra.mxu0 %v284
    %v3519 = vpop.f32.mrf.mxu0
    %v3520 = vadd.f32 %v3507, %v3519
    %v3521 = vpop.f32.mrf.mxu0
    %3522 = vdwg.mxu0
    %3523 = vmatpush.bf16.msra.mxu0 %v2605
    %3524 = vmatpush.bf16.msra.mxu0 %v2597
    %3525 = vmatpush.bf16.msra.mxu0 %v2589
    %3526 = vmatpush.bf16.msra.mxu0 %v2581
    %3527 = vmatpush.bf16.msra.mxu0 %v2573
    %3528 = vmatpush.bf16.msra.mxu0 %v2565
    %3529 = vmatpush.bf16.msra.mxu0 %v2557
    %3530 = vmatpush.bf16.msra.mxu0 %v2549
    %3531 = vmatmul.bf16.gmra.mxu0 %v285
    %v3532 = vpop.f32.mrf.mxu0
    %v3533 = vadd.f32 %v3520, %v3532
    %v3534 = vpop.f32.mrf.mxu0
    %3535 = vdwg.mxu0
    %3536 = vmatpush.bf16.msra.mxu0 %v2669
    %3537 = vmatpush.bf16.msra.mxu0 %v2661
    %3538 = vmatpush.bf16.msra.mxu0 %v2653
    %3539 = vmatpush.bf16.msra.mxu0 %v2645
    %3540 = vmatpush.bf16.msra.mxu0 %v2637
    %3541 = vmatpush.bf16.msra.mxu0 %v2629
    %3542 = vmatpush.bf16.msra.mxu0 %v2621
    %3543 = vmatpush.bf16.msra.mxu0 %v2613
    %3544 = vmatmul.bf16.gmra.mxu0 %v286
    %v3545 = vpop.f32.mrf.mxu0
    %v3546 = vadd.f32 %v3533, %v3545
    %v3547 = vpop.f32.mrf.mxu0
    %3548 = vdwg.mxu0
    %3549 = vmatpush.bf16.msra.mxu0 %v2733
    %3550 = vmatpush.bf16.msra.mxu0 %v2725
    %3551 = vmatpush.bf16.msra.mxu0 %v2717
    %3552 = vmatpush.bf16.msra.mxu0 %v2709
    %3553 = vmatpush.bf16.msra.mxu0 %v2701
    %3554 = vmatpush.bf16.msra.mxu0 %v2693
    %3555 = vmatpush.bf16.msra.mxu0 %v2685
    %3556 = vmatpush.bf16.msra.mxu0 %v2677
    %3557 = vmatmul.bf16.gmra.mxu0 %v287
    %v3558 = vpop.f32.mrf.mxu0
    %v3559 = vadd.f32 %v3546, %v3558
    %v3560 = vpop.f32.mrf.mxu0
    %3561 = vdwg.mxu0
    %3562 = vmatpush.bf16.msra.mxu0 %v2797
    %3563 = vmatpush.bf16.msra.mxu0 %v2789
    %3564 = vmatpush.bf16.msra.mxu0 %v2781
    %3565 = vmatpush.bf16.msra.mxu0 %v2773
    %3566 = vmatpush.bf16.msra.mxu0 %v2765
    %3567 = vmatpush.bf16.msra.mxu0 %v2757
    %3568 = vmatpush.bf16.msra.mxu0 %v2749
    %3569 = vmatpush.bf16.msra.mxu0 %v2741
    %3570 = vmatmul.bf16.gmra.mxu0 %v288
    %v3571 = vpop.f32.mrf.mxu0
    %v3572 = vadd.f32 %v3559, %v3571
    %v3573 = vpop.f32.mrf.mxu0
    %3574 = vdwg.mxu0
    %3575 = vmatpush.bf16.msra.mxu0 %v2861
    %3576 = vmatpush.bf16.msra.mxu0 %v2853
    %3577 = vmatpush.bf16.msra.mxu0 %v2845
    %3578 = vmatpush.bf16.msra.mxu0 %v2837
    %3579 = vmatpush.bf16.msra.mxu0 %v2829
    %3580 = vmatpush.bf16.msra.mxu0 %v2821
    %3581 = vmatpush.bf16.msra.mxu0 %v2813
    %3582 = vmatpush.bf16.msra.mxu0 %v2805
    %3583 = vmatmul.bf16.gmra.mxu0 %v289
    %v3584 = vpop.f32.mrf.mxu0
    %v3585 = vadd.f32 %v3572, %v3584
    %v3586 = vpop.f32.mrf.mxu0
    %3587 = vdwg.mxu0
    %3588 = vmatpush.bf16.msra.mxu0 %v2414
    %3589 = vmatpush.bf16.msra.mxu0 %v2406
    %3590 = vmatpush.bf16.msra.mxu0 %v2398
    %3591 = vmatpush.bf16.msra.mxu0 %v2390
    %3592 = vmatpush.bf16.msra.mxu0 %v2382
    %3593 = vmatpush.bf16.msra.mxu0 %v2374
    %3594 = vmatpush.bf16.msra.mxu0 %v2366
    %3595 = vmatpush.bf16.msra.mxu0 %v2358
    %3596 = vmatmul.bf16.gmra.mxu0 %v282
    %v3597 = vpop.f32.mrf.mxu0
    %v3598 = vadd.f32 %v806, %v3597
    %v3599 = vpop.f32.mrf.mxu0
    %3600 = vdwg.mxu0
    %3601 = vmatpush.bf16.msra.mxu0 %v2478
    %3602 = vmatpush.bf16.msra.mxu0 %v2470
    %3603 = vmatpush.bf16.msra.mxu0 %v2462
    %3604 = vmatpush.bf16.msra.mxu0 %v2454
    %3605 = vmatpush.bf16.msra.mxu0 %v2446
    %3606 = vmatpush.bf16.msra.mxu0 %v2438
    %3607 = vmatpush.bf16.msra.mxu0 %v2430
    %3608 = vmatpush.bf16.msra.mxu0 %v2422
    %3609 = vmatmul.bf16.gmra.mxu0 %v283
    %v3610 = vpop.f32.mrf.mxu0
    %v3611 = vadd.f32 %v3598, %v3610
    %v3612 = vpop.f32.mrf.mxu0
    %3613 = vdwg.mxu0
    %3614 = vmatpush.bf16.msra.mxu0 %v2542
    %3615 = vmatpush.bf16.msra.mxu0 %v2534
    %3616 = vmatpush.bf16.msra.mxu0 %v2526
    %3617 = vmatpush.bf16.msra.mxu0 %v2518
    %3618 = vmatpush.bf16.msra.mxu0 %v2510
    %3619 = vmatpush.bf16.msra.mxu0 %v2502
    %3620 = vmatpush.bf16.msra.mxu0 %v2494
    %3621 = vmatpush.bf16.msra.mxu0 %v2486
    %3622 = vmatmul.bf16.gmra.mxu0 %v284
    %v3623 = vpop.f32.mrf.mxu0
    %v3624 = vadd.f32 %v3611, %v3623
    %v3625 = vpop.f32.mrf.mxu0
    %3626 = vdwg.mxu0
    %3627 = vmatpush.bf16.msra.mxu0 %v2606
    %3628 = vmatpush.bf16.msra.mxu0 %v2598
    %3629 = vmatpush.bf16.msra.mxu0 %v2590
    %3630 = vmatpush.bf16.msra.mxu0 %v2582
    %3631 = vmatpush.bf16.msra.mxu0 %v2574
    %3632 = vmatpush.bf16.msra.mxu0 %v2566
    %3633 = vmatpush.bf16.msra.mxu0 %v2558
    %3634 = vmatpush.bf16.msra.mxu0 %v2550
    %3635 = vmatmul.bf16.gmra.mxu0 %v285
    %v3636 = vpop.f32.mrf.mxu0
    %v3637 = vadd.f32 %v3624, %v3636
    %v3638 = vpop.f32.mrf.mxu0
    %3639 = vdwg.mxu0
    %3640 = vmatpush.bf16.msra.mxu0 %v2670
    %3641 = vmatpush.bf16.msra.mxu0 %v2662
    %3642 = vmatpush.bf16.msra.mxu0 %v2654
    %3643 = vmatpush.bf16.msra.mxu0 %v2646
    %3644 = vmatpush.bf16.msra.mxu0 %v2638
    %3645 = vmatpush.bf16.msra.mxu0 %v2630
    %3646 = vmatpush.bf16.msra.mxu0 %v2622
    %3647 = vmatpush.bf16.msra.mxu0 %v2614
    %3648 = vmatmul.bf16.gmra.mxu0 %v286
    %v3649 = vpop.f32.mrf.mxu0
    %v3650 = vadd.f32 %v3637, %v3649
    %v3651 = vpop.f32.mrf.mxu0
    %3652 = vdwg.mxu0
    %3653 = vmatpush.bf16.msra.mxu0 %v2734
    %3654 = vmatpush.bf16.msra.mxu0 %v2726
    %3655 = vmatpush.bf16.msra.mxu0 %v2718
    %3656 = vmatpush.bf16.msra.mxu0 %v2710
    %3657 = vmatpush.bf16.msra.mxu0 %v2702
    %3658 = vmatpush.bf16.msra.mxu0 %v2694
    %3659 = vmatpush.bf16.msra.mxu0 %v2686
    %3660 = vmatpush.bf16.msra.mxu0 %v2678
    %3661 = vmatmul.bf16.gmra.mxu0 %v287
    %v3662 = vpop.f32.mrf.mxu0
    %v3663 = vadd.f32 %v3650, %v3662
    %v3664 = vpop.f32.mrf.mxu0
    %3665 = vdwg.mxu0
    %3666 = vmatpush.bf16.msra.mxu0 %v2798
    %3667 = vmatpush.bf16.msra.mxu0 %v2790
    %3668 = vmatpush.bf16.msra.mxu0 %v2782
    %3669 = vmatpush.bf16.msra.mxu0 %v2774
    %3670 = vmatpush.bf16.msra.mxu0 %v2766
    %3671 = vmatpush.bf16.msra.mxu0 %v2758
    %3672 = vmatpush.bf16.msra.mxu0 %v2750
    %3673 = vmatpush.bf16.msra.mxu0 %v2742
    %3674 = vmatmul.bf16.gmra.mxu0 %v288
    %v3675 = vpop.f32.mrf.mxu0
    %v3676 = vadd.f32 %v3663, %v3675
    %v3677 = vpop.f32.mrf.mxu0
    %3678 = vdwg.mxu0
    %3679 = vmatpush.bf16.msra.mxu0 %v2862
    %3680 = vmatpush.bf16.msra.mxu0 %v2854
    %3681 = vmatpush.bf16.msra.mxu0 %v2846
    %3682 = vmatpush.bf16.msra.mxu0 %v2838
    %3683 = vmatpush.bf16.msra.mxu0 %v2830
    %3684 = vmatpush.bf16.msra.mxu0 %v2822
    %3685 = vmatpush.bf16.msra.mxu0 %v2814
    %3686 = vmatpush.bf16.msra.mxu0 %v2806
    %3687 = vmatmul.bf16.gmra.mxu0 %v289
    %v3688 = vpop.f32.mrf.mxu0
    %v3689 = vadd.f32 %v3676, %v3688
    %v3690 = vpop.f32.mrf.mxu0
    %3691 = vdwg.mxu0
    %3692 = vmatpush.bf16.msra.mxu0 %v2415
    %3693 = vmatpush.bf16.msra.mxu0 %v2407
    %3694 = vmatpush.bf16.msra.mxu0 %v2399
    %3695 = vmatpush.bf16.msra.mxu0 %v2391
    %3696 = vmatpush.bf16.msra.mxu0 %v2383
    %3697 = vmatpush.bf16.msra.mxu0 %v2375
    %3698 = vmatpush.bf16.msra.mxu0 %v2367
    %3699 = vmatpush.bf16.msra.mxu0 %v2359
    %3700 = vmatmul.bf16.gmra.mxu0 %v282
    %v3701 = vpop.f32.mrf.mxu0
    %v3702 = vadd.f32 %v807, %v3701
    %v3703 = vpop.f32.mrf.mxu0
    %3704 = vdwg.mxu0
    %3705 = vmatpush.bf16.msra.mxu0 %v2479
    %3706 = vmatpush.bf16.msra.mxu0 %v2471
    %3707 = vmatpush.bf16.msra.mxu0 %v2463
    %3708 = vmatpush.bf16.msra.mxu0 %v2455
    %3709 = vmatpush.bf16.msra.mxu0 %v2447
    %3710 = vmatpush.bf16.msra.mxu0 %v2439
    %3711 = vmatpush.bf16.msra.mxu0 %v2431
    %3712 = vmatpush.bf16.msra.mxu0 %v2423
    %3713 = vmatmul.bf16.gmra.mxu0 %v283
    %v3714 = vpop.f32.mrf.mxu0
    %v3715 = vadd.f32 %v3702, %v3714
    %v3716 = vpop.f32.mrf.mxu0
    %3717 = vdwg.mxu0
    %3718 = vmatpush.bf16.msra.mxu0 %v2543
    %3719 = vmatpush.bf16.msra.mxu0 %v2535
    %3720 = vmatpush.bf16.msra.mxu0 %v2527
    %3721 = vmatpush.bf16.msra.mxu0 %v2519
    %3722 = vmatpush.bf16.msra.mxu0 %v2511
    %3723 = vmatpush.bf16.msra.mxu0 %v2503
    %3724 = vmatpush.bf16.msra.mxu0 %v2495
    %3725 = vmatpush.bf16.msra.mxu0 %v2487
    %3726 = vmatmul.bf16.gmra.mxu0 %v284
    %v3727 = vpop.f32.mrf.mxu0
    %v3728 = vadd.f32 %v3715, %v3727
    %v3729 = vpop.f32.mrf.mxu0
    %3730 = vdwg.mxu0
    %3731 = vmatpush.bf16.msra.mxu0 %v2607
    %3732 = vmatpush.bf16.msra.mxu0 %v2599
    %3733 = vmatpush.bf16.msra.mxu0 %v2591
    %3734 = vmatpush.bf16.msra.mxu0 %v2583
    %3735 = vmatpush.bf16.msra.mxu0 %v2575
    %3736 = vmatpush.bf16.msra.mxu0 %v2567
    %3737 = vmatpush.bf16.msra.mxu0 %v2559
    %3738 = vmatpush.bf16.msra.mxu0 %v2551
    %3739 = vmatmul.bf16.gmra.mxu0 %v285
    %v3740 = vpop.f32.mrf.mxu0
    %v3741 = vadd.f32 %v3728, %v3740
    %v3742 = vpop.f32.mrf.mxu0
    %3743 = vdwg.mxu0
    %3744 = vmatpush.bf16.msra.mxu0 %v2671
    %3745 = vmatpush.bf16.msra.mxu0 %v2663
    %3746 = vmatpush.bf16.msra.mxu0 %v2655
    %3747 = vmatpush.bf16.msra.mxu0 %v2647
    %3748 = vmatpush.bf16.msra.mxu0 %v2639
    %3749 = vmatpush.bf16.msra.mxu0 %v2631
    %3750 = vmatpush.bf16.msra.mxu0 %v2623
    %3751 = vmatpush.bf16.msra.mxu0 %v2615
    %3752 = vmatmul.bf16.gmra.mxu0 %v286
    %v3753 = vpop.f32.mrf.mxu0
    %v3754 = vadd.f32 %v3741, %v3753
    %v3755 = vpop.f32.mrf.mxu0
    %3756 = vdwg.mxu0
    %3757 = vmatpush.bf16.msra.mxu0 %v2735
    %3758 = vmatpush.bf16.msra.mxu0 %v2727
    %3759 = vmatpush.bf16.msra.mxu0 %v2719
    %3760 = vmatpush.bf16.msra.mxu0 %v2711
    %3761 = vmatpush.bf16.msra.mxu0 %v2703
    %3762 = vmatpush.bf16.msra.mxu0 %v2695
    %3763 = vmatpush.bf16.msra.mxu0 %v2687
    %3764 = vmatpush.bf16.msra.mxu0 %v2679
    %3765 = vmatmul.bf16.gmra.mxu0 %v287
    %v3766 = vpop.f32.mrf.mxu0
    %v3767 = vadd.f32 %v3754, %v3766
    %v3768 = vpop.f32.mrf.mxu0
    %3769 = vdwg.mxu0
    %3770 = vmatpush.bf16.msra.mxu0 %v2799
    %3771 = vmatpush.bf16.msra.mxu0 %v2791
    %3772 = vmatpush.bf16.msra.mxu0 %v2783
    %3773 = vmatpush.bf16.msra.mxu0 %v2775
    %3774 = vmatpush.bf16.msra.mxu0 %v2767
    %3775 = vmatpush.bf16.msra.mxu0 %v2759
    %3776 = vmatpush.bf16.msra.mxu0 %v2751
    %3777 = vmatpush.bf16.msra.mxu0 %v2743
    %3778 = vmatmul.bf16.gmra.mxu0 %v288
    %v3779 = vpop.f32.mrf.mxu0
    %v3780 = vadd.f32 %v3767, %v3779
    %v3781 = vpop.f32.mrf.mxu0
    %3782 = vdwg.mxu0
    %3783 = vmatpush.bf16.msra.mxu0 %v2863
    %3784 = vmatpush.bf16.msra.mxu0 %v2855
    %3785 = vmatpush.bf16.msra.mxu0 %v2847
    %3786 = vmatpush.bf16.msra.mxu0 %v2839
    %3787 = vmatpush.bf16.msra.mxu0 %v2831
    %3788 = vmatpush.bf16.msra.mxu0 %v2823
    %3789 = vmatpush.bf16.msra.mxu0 %v2815
    %3790 = vmatpush.bf16.msra.mxu0 %v2807
    %3791 = vmatmul.bf16.gmra.mxu0 %v289
    %v3792 = vpop.f32.mrf.mxu0
    %v3793 = vadd.f32 %v3780, %v3792
    %v3794 = vpop.f32.mrf.mxu0
    %3795 = vdwg.mxu0
    %3796 = vmatpush.bf16.msra.mxu0 %v2416
    %3797 = vmatpush.bf16.msra.mxu0 %v2408
    %3798 = vmatpush.bf16.msra.mxu0 %v2400
    %3799 = vmatpush.bf16.msra.mxu0 %v2392
    %3800 = vmatpush.bf16.msra.mxu0 %v2384
    %3801 = vmatpush.bf16.msra.mxu0 %v2376
    %3802 = vmatpush.bf16.msra.mxu0 %v2368
    %3803 = vmatpush.bf16.msra.mxu0 %v2360
    %3804 = vmatmul.bf16.gmra.mxu0 %v282
    %v3805 = vpop.f32.mrf.mxu0
    %v3806 = vadd.f32 %v808, %v3805
    %v3807 = vpop.f32.mrf.mxu0
    %3808 = vdwg.mxu0
    %3809 = vmatpush.bf16.msra.mxu0 %v2480
    %3810 = vmatpush.bf16.msra.mxu0 %v2472
    %3811 = vmatpush.bf16.msra.mxu0 %v2464
    %3812 = vmatpush.bf16.msra.mxu0 %v2456
    %3813 = vmatpush.bf16.msra.mxu0 %v2448
    %3814 = vmatpush.bf16.msra.mxu0 %v2440
    %3815 = vmatpush.bf16.msra.mxu0 %v2432
    %3816 = vmatpush.bf16.msra.mxu0 %v2424
    %3817 = vmatmul.bf16.gmra.mxu0 %v283
    %v3818 = vpop.f32.mrf.mxu0
    %v3819 = vadd.f32 %v3806, %v3818
    %v3820 = vpop.f32.mrf.mxu0
    %3821 = vdwg.mxu0
    %3822 = vmatpush.bf16.msra.mxu0 %v2544
    %3823 = vmatpush.bf16.msra.mxu0 %v2536
    %3824 = vmatpush.bf16.msra.mxu0 %v2528
    %3825 = vmatpush.bf16.msra.mxu0 %v2520
    %3826 = vmatpush.bf16.msra.mxu0 %v2512
    %3827 = vmatpush.bf16.msra.mxu0 %v2504
    %3828 = vmatpush.bf16.msra.mxu0 %v2496
    %3829 = vmatpush.bf16.msra.mxu0 %v2488
    %3830 = vmatmul.bf16.gmra.mxu0 %v284
    %v3831 = vpop.f32.mrf.mxu0
    %v3832 = vadd.f32 %v3819, %v3831
    %v3833 = vpop.f32.mrf.mxu0
    %3834 = vdwg.mxu0
    %3835 = vmatpush.bf16.msra.mxu0 %v2608
    %3836 = vmatpush.bf16.msra.mxu0 %v2600
    %3837 = vmatpush.bf16.msra.mxu0 %v2592
    %3838 = vmatpush.bf16.msra.mxu0 %v2584
    %3839 = vmatpush.bf16.msra.mxu0 %v2576
    %3840 = vmatpush.bf16.msra.mxu0 %v2568
    %3841 = vmatpush.bf16.msra.mxu0 %v2560
    %3842 = vmatpush.bf16.msra.mxu0 %v2552
    %3843 = vmatmul.bf16.gmra.mxu0 %v285
    %v3844 = vpop.f32.mrf.mxu0
    %v3845 = vadd.f32 %v3832, %v3844
    %v3846 = vpop.f32.mrf.mxu0
    %3847 = vdwg.mxu0
    %3848 = vmatpush.bf16.msra.mxu0 %v2672
    %3849 = vmatpush.bf16.msra.mxu0 %v2664
    %3850 = vmatpush.bf16.msra.mxu0 %v2656
    %3851 = vmatpush.bf16.msra.mxu0 %v2648
    %3852 = vmatpush.bf16.msra.mxu0 %v2640
    %3853 = vmatpush.bf16.msra.mxu0 %v2632
    %3854 = vmatpush.bf16.msra.mxu0 %v2624
    %3855 = vmatpush.bf16.msra.mxu0 %v2616
    %3856 = vmatmul.bf16.gmra.mxu0 %v286
    %v3857 = vpop.f32.mrf.mxu0
    %v3858 = vadd.f32 %v3845, %v3857
    %v3859 = vpop.f32.mrf.mxu0
    %3860 = vdwg.mxu0
    %3861 = vmatpush.bf16.msra.mxu0 %v2736
    %3862 = vmatpush.bf16.msra.mxu0 %v2728
    %3863 = vmatpush.bf16.msra.mxu0 %v2720
    %3864 = vmatpush.bf16.msra.mxu0 %v2712
    %3865 = vmatpush.bf16.msra.mxu0 %v2704
    %3866 = vmatpush.bf16.msra.mxu0 %v2696
    %3867 = vmatpush.bf16.msra.mxu0 %v2688
    %3868 = vmatpush.bf16.msra.mxu0 %v2680
    %3869 = vmatmul.bf16.gmra.mxu0 %v287
    %v3870 = vpop.f32.mrf.mxu0
    %v3871 = vadd.f32 %v3858, %v3870
    %v3872 = vpop.f32.mrf.mxu0
    %3873 = vdwg.mxu0
    %3874 = vmatpush.bf16.msra.mxu0 %v2800
    %3875 = vmatpush.bf16.msra.mxu0 %v2792
    %3876 = vmatpush.bf16.msra.mxu0 %v2784
    %3877 = vmatpush.bf16.msra.mxu0 %v2776
    %3878 = vmatpush.bf16.msra.mxu0 %v2768
    %3879 = vmatpush.bf16.msra.mxu0 %v2760
    %3880 = vmatpush.bf16.msra.mxu0 %v2752
    %3881 = vmatpush.bf16.msra.mxu0 %v2744
    %3882 = vmatmul.bf16.gmra.mxu0 %v288
    %v3883 = vpop.f32.mrf.mxu0
    %v3884 = vadd.f32 %v3871, %v3883
    %v3885 = vpop.f32.mrf.mxu0
    %3886 = vdwg.mxu0
    %3887 = vmatpush.bf16.msra.mxu0 %v2864
    %3888 = vmatpush.bf16.msra.mxu0 %v2856
    %3889 = vmatpush.bf16.msra.mxu0 %v2848
    %3890 = vmatpush.bf16.msra.mxu0 %v2840
    %3891 = vmatpush.bf16.msra.mxu0 %v2832
    %3892 = vmatpush.bf16.msra.mxu0 %v2824
    %3893 = vmatpush.bf16.msra.mxu0 %v2816
    %3894 = vmatpush.bf16.msra.mxu0 %v2808
    %3895 = vmatmul.bf16.gmra.mxu0 %v289
    %v3896 = vpop.f32.mrf.mxu0
    %v3897 = vadd.f32 %v3884, %v3896
    %v3898 = vpop.f32.mrf.mxu0
    %3899 = vdwg.mxu0
    %3900 = vmatpush.bf16.msra.mxu0 %v2417
    %3901 = vmatpush.bf16.msra.mxu0 %v2409
    %3902 = vmatpush.bf16.msra.mxu0 %v2401
    %3903 = vmatpush.bf16.msra.mxu0 %v2393
    %3904 = vmatpush.bf16.msra.mxu0 %v2385
    %3905 = vmatpush.bf16.msra.mxu0 %v2377
    %3906 = vmatpush.bf16.msra.mxu0 %v2369
    %3907 = vmatpush.bf16.msra.mxu0 %v2361
    %3908 = vmatmul.bf16.gmra.mxu0 %v282
    %v3909 = vpop.f32.mrf.mxu0
    %v3910 = vadd.f32 %v809, %v3909
    %v3911 = vpop.f32.mrf.mxu0
    %3912 = vdwg.mxu0
    %3913 = vmatpush.bf16.msra.mxu0 %v2481
    %3914 = vmatpush.bf16.msra.mxu0 %v2473
    %3915 = vmatpush.bf16.msra.mxu0 %v2465
    %3916 = vmatpush.bf16.msra.mxu0 %v2457
    %3917 = vmatpush.bf16.msra.mxu0 %v2449
    %3918 = vmatpush.bf16.msra.mxu0 %v2441
    %3919 = vmatpush.bf16.msra.mxu0 %v2433
    %3920 = vmatpush.bf16.msra.mxu0 %v2425
    %3921 = vmatmul.bf16.gmra.mxu0 %v283
    %v3922 = vpop.f32.mrf.mxu0
    %v3923 = vadd.f32 %v3910, %v3922
    %v3924 = vpop.f32.mrf.mxu0
    %3925 = vdwg.mxu0
    %3926 = vmatpush.bf16.msra.mxu0 %v2545
    %3927 = vmatpush.bf16.msra.mxu0 %v2537
    %3928 = vmatpush.bf16.msra.mxu0 %v2529
    %3929 = vmatpush.bf16.msra.mxu0 %v2521
    %3930 = vmatpush.bf16.msra.mxu0 %v2513
    %3931 = vmatpush.bf16.msra.mxu0 %v2505
    %3932 = vmatpush.bf16.msra.mxu0 %v2497
    %3933 = vmatpush.bf16.msra.mxu0 %v2489
    %3934 = vmatmul.bf16.gmra.mxu0 %v284
    %v3935 = vpop.f32.mrf.mxu0
    %v3936 = vadd.f32 %v3923, %v3935
    %v3937 = vpop.f32.mrf.mxu0
    %3938 = vdwg.mxu0
    %3939 = vmatpush.bf16.msra.mxu0 %v2609
    %3940 = vmatpush.bf16.msra.mxu0 %v2601
    %3941 = vmatpush.bf16.msra.mxu0 %v2593
    %3942 = vmatpush.bf16.msra.mxu0 %v2585
    %3943 = vmatpush.bf16.msra.mxu0 %v2577
    %3944 = vmatpush.bf16.msra.mxu0 %v2569
    %3945 = vmatpush.bf16.msra.mxu0 %v2561
    %3946 = vmatpush.bf16.msra.mxu0 %v2553
    %3947 = vmatmul.bf16.gmra.mxu0 %v285
    %v3948 = vpop.f32.mrf.mxu0
    %v3949 = vadd.f32 %v3936, %v3948
    %v3950 = vpop.f32.mrf.mxu0
    %3951 = vdwg.mxu0
    %3952 = vmatpush.bf16.msra.mxu0 %v2673
    %3953 = vmatpush.bf16.msra.mxu0 %v2665
    %3954 = vmatpush.bf16.msra.mxu0 %v2657
    %3955 = vmatpush.bf16.msra.mxu0 %v2649
    %3956 = vmatpush.bf16.msra.mxu0 %v2641
    %3957 = vmatpush.bf16.msra.mxu0 %v2633
    %3958 = vmatpush.bf16.msra.mxu0 %v2625
    %3959 = vmatpush.bf16.msra.mxu0 %v2617
    %3960 = vmatmul.bf16.gmra.mxu0 %v286
    %v3961 = vpop.f32.mrf.mxu0
    %v3962 = vadd.f32 %v3949, %v3961
    %v3963 = vpop.f32.mrf.mxu0
    %3964 = vdwg.mxu0
    %3965 = vmatpush.bf16.msra.mxu0 %v2737
    %3966 = vmatpush.bf16.msra.mxu0 %v2729
    %3967 = vmatpush.bf16.msra.mxu0 %v2721
    %3968 = vmatpush.bf16.msra.mxu0 %v2713
    %3969 = vmatpush.bf16.msra.mxu0 %v2705
    %3970 = vmatpush.bf16.msra.mxu0 %v2697
    %3971 = vmatpush.bf16.msra.mxu0 %v2689
    %3972 = vmatpush.bf16.msra.mxu0 %v2681
    %3973 = vmatmul.bf16.gmra.mxu0 %v287
    %v3974 = vpop.f32.mrf.mxu0
    %v3975 = vadd.f32 %v3962, %v3974
    %v3976 = vpop.f32.mrf.mxu0
    %3977 = vdwg.mxu0
    %3978 = vmatpush.bf16.msra.mxu0 %v2801
    %3979 = vmatpush.bf16.msra.mxu0 %v2793
    %3980 = vmatpush.bf16.msra.mxu0 %v2785
    %3981 = vmatpush.bf16.msra.mxu0 %v2777
    %3982 = vmatpush.bf16.msra.mxu0 %v2769
    %3983 = vmatpush.bf16.msra.mxu0 %v2761
    %3984 = vmatpush.bf16.msra.mxu0 %v2753
    %3985 = vmatpush.bf16.msra.mxu0 %v2745
    %3986 = vmatmul.bf16.gmra.mxu0 %v288
    %v3987 = vpop.f32.mrf.mxu0
    %v3988 = vadd.f32 %v3975, %v3987
    %v3989 = vpop.f32.mrf.mxu0
    %3990 = vdwg.mxu0
    %3991 = vmatpush.bf16.msra.mxu0 %v2865
    %3992 = vmatpush.bf16.msra.mxu0 %v2857
    %3993 = vmatpush.bf16.msra.mxu0 %v2849
    %3994 = vmatpush.bf16.msra.mxu0 %v2841
    %3995 = vmatpush.bf16.msra.mxu0 %v2833
    %3996 = vmatpush.bf16.msra.mxu0 %v2825
    %3997 = vmatpush.bf16.msra.mxu0 %v2817
    %3998 = vmatpush.bf16.msra.mxu0 %v2809
    %3999 = vmatmul.bf16.gmra.mxu0 %v289
    %v4000 = vpop.f32.mrf.mxu0
    %v4001 = vadd.f32 %v3988, %v4000
    %v4002 = vpop.f32.mrf.mxu0
    %4003 = vdwg.mxu0
    %4004 = vmatpush.bf16.msra.mxu0 %v2418
    %4005 = vmatpush.bf16.msra.mxu0 %v2410
    %4006 = vmatpush.bf16.msra.mxu0 %v2402
    %4007 = vmatpush.bf16.msra.mxu0 %v2394
    %4008 = vmatpush.bf16.msra.mxu0 %v2386
    %4009 = vmatpush.bf16.msra.mxu0 %v2378
    %4010 = vmatpush.bf16.msra.mxu0 %v2370
    %4011 = vmatpush.bf16.msra.mxu0 %v2362
    %4012 = vmatmul.bf16.gmra.mxu0 %v282
    %v4013 = vpop.f32.mrf.mxu0
    %v4014 = vadd.f32 %v810, %v4013
    %v4015 = vpop.f32.mrf.mxu0
    %4016 = vdwg.mxu0
    %4017 = vmatpush.bf16.msra.mxu0 %v2482
    %4018 = vmatpush.bf16.msra.mxu0 %v2474
    %4019 = vmatpush.bf16.msra.mxu0 %v2466
    %4020 = vmatpush.bf16.msra.mxu0 %v2458
    %4021 = vmatpush.bf16.msra.mxu0 %v2450
    %4022 = vmatpush.bf16.msra.mxu0 %v2442
    %4023 = vmatpush.bf16.msra.mxu0 %v2434
    %4024 = vmatpush.bf16.msra.mxu0 %v2426
    %4025 = vmatmul.bf16.gmra.mxu0 %v283
    %v4026 = vpop.f32.mrf.mxu0
    %v4027 = vadd.f32 %v4014, %v4026
    %v4028 = vpop.f32.mrf.mxu0
    %4029 = vdwg.mxu0
    %4030 = vmatpush.bf16.msra.mxu0 %v2546
    %4031 = vmatpush.bf16.msra.mxu0 %v2538
    %4032 = vmatpush.bf16.msra.mxu0 %v2530
    %4033 = vmatpush.bf16.msra.mxu0 %v2522
    %4034 = vmatpush.bf16.msra.mxu0 %v2514
    %4035 = vmatpush.bf16.msra.mxu0 %v2506
    %4036 = vmatpush.bf16.msra.mxu0 %v2498
    %4037 = vmatpush.bf16.msra.mxu0 %v2490
    %4038 = vmatmul.bf16.gmra.mxu0 %v284
    %v4039 = vpop.f32.mrf.mxu0
    %v4040 = vadd.f32 %v4027, %v4039
    %v4041 = vpop.f32.mrf.mxu0
    %4042 = vdwg.mxu0
    %4043 = vmatpush.bf16.msra.mxu0 %v2610
    %4044 = vmatpush.bf16.msra.mxu0 %v2602
    %4045 = vmatpush.bf16.msra.mxu0 %v2594
    %4046 = vmatpush.bf16.msra.mxu0 %v2586
    %4047 = vmatpush.bf16.msra.mxu0 %v2578
    %4048 = vmatpush.bf16.msra.mxu0 %v2570
    %4049 = vmatpush.bf16.msra.mxu0 %v2562
    %4050 = vmatpush.bf16.msra.mxu0 %v2554
    %4051 = vmatmul.bf16.gmra.mxu0 %v285
    %v4052 = vpop.f32.mrf.mxu0
    %v4053 = vadd.f32 %v4040, %v4052
    %v4054 = vpop.f32.mrf.mxu0
    %4055 = vdwg.mxu0
    %4056 = vmatpush.bf16.msra.mxu0 %v2674
    %4057 = vmatpush.bf16.msra.mxu0 %v2666
    %4058 = vmatpush.bf16.msra.mxu0 %v2658
    %4059 = vmatpush.bf16.msra.mxu0 %v2650
    %4060 = vmatpush.bf16.msra.mxu0 %v2642
    %4061 = vmatpush.bf16.msra.mxu0 %v2634
    %4062 = vmatpush.bf16.msra.mxu0 %v2626
    %4063 = vmatpush.bf16.msra.mxu0 %v2618
    %4064 = vmatmul.bf16.gmra.mxu0 %v286
    %v4065 = vpop.f32.mrf.mxu0
    %v4066 = vadd.f32 %v4053, %v4065
    %v4067 = vpop.f32.mrf.mxu0
    %4068 = vdwg.mxu0
    %4069 = vmatpush.bf16.msra.mxu0 %v2738
    %4070 = vmatpush.bf16.msra.mxu0 %v2730
    %4071 = vmatpush.bf16.msra.mxu0 %v2722
    %4072 = vmatpush.bf16.msra.mxu0 %v2714
    %4073 = vmatpush.bf16.msra.mxu0 %v2706
    %4074 = vmatpush.bf16.msra.mxu0 %v2698
    %4075 = vmatpush.bf16.msra.mxu0 %v2690
    %4076 = vmatpush.bf16.msra.mxu0 %v2682
    %4077 = vmatmul.bf16.gmra.mxu0 %v287
    %v4078 = vpop.f32.mrf.mxu0
    %v4079 = vadd.f32 %v4066, %v4078
    %v4080 = vpop.f32.mrf.mxu0
    %4081 = vdwg.mxu0
    %4082 = vmatpush.bf16.msra.mxu0 %v2802
    %4083 = vmatpush.bf16.msra.mxu0 %v2794
    %4084 = vmatpush.bf16.msra.mxu0 %v2786
    %4085 = vmatpush.bf16.msra.mxu0 %v2778
    %4086 = vmatpush.bf16.msra.mxu0 %v2770
    %4087 = vmatpush.bf16.msra.mxu0 %v2762
    %4088 = vmatpush.bf16.msra.mxu0 %v2754
    %4089 = vmatpush.bf16.msra.mxu0 %v2746
    %4090 = vmatmul.bf16.gmra.mxu0 %v288
    %v4091 = vpop.f32.mrf.mxu0
    %v4092 = vadd.f32 %v4079, %v4091
    %v4093 = vpop.f32.mrf.mxu0
    %4094 = vdwg.mxu0
    %4095 = vmatpush.bf16.msra.mxu0 %v2866
    %4096 = vmatpush.bf16.msra.mxu0 %v2858
    %4097 = vmatpush.bf16.msra.mxu0 %v2850
    %4098 = vmatpush.bf16.msra.mxu0 %v2842
    %4099 = vmatpush.bf16.msra.mxu0 %v2834
    %4100 = vmatpush.bf16.msra.mxu0 %v2826
    %4101 = vmatpush.bf16.msra.mxu0 %v2818
    %4102 = vmatpush.bf16.msra.mxu0 %v2810
    %4103 = vmatmul.bf16.gmra.mxu0 %v289
    %v4104 = vpop.f32.mrf.mxu0
    %v4105 = vadd.f32 %v4092, %v4104
    %v4106 = vpop.f32.mrf.mxu0
    %4107 = vdwg.mxu0
    %4108 = vmatpush.bf16.msra.mxu0 %v2419
    %4109 = vmatpush.bf16.msra.mxu0 %v2411
    %4110 = vmatpush.bf16.msra.mxu0 %v2403
    %4111 = vmatpush.bf16.msra.mxu0 %v2395
    %4112 = vmatpush.bf16.msra.mxu0 %v2387
    %4113 = vmatpush.bf16.msra.mxu0 %v2379
    %4114 = vmatpush.bf16.msra.mxu0 %v2371
    %4115 = vmatpush.bf16.msra.mxu0 %v2363
    %4116 = vmatmul.bf16.gmra.mxu0 %v282
    %v4117 = vpop.f32.mrf.mxu0
    %v4118 = vadd.f32 %v811, %v4117
    %v4119 = vpop.f32.mrf.mxu0
    %4120 = vdwg.mxu0
    %4121 = vmatpush.bf16.msra.mxu0 %v2483
    %4122 = vmatpush.bf16.msra.mxu0 %v2475
    %4123 = vmatpush.bf16.msra.mxu0 %v2467
    %4124 = vmatpush.bf16.msra.mxu0 %v2459
    %4125 = vmatpush.bf16.msra.mxu0 %v2451
    %4126 = vmatpush.bf16.msra.mxu0 %v2443
    %4127 = vmatpush.bf16.msra.mxu0 %v2435
    %4128 = vmatpush.bf16.msra.mxu0 %v2427
    %4129 = vmatmul.bf16.gmra.mxu0 %v283
    %v4130 = vpop.f32.mrf.mxu0
    %v4131 = vadd.f32 %v4118, %v4130
    %v4132 = vpop.f32.mrf.mxu0
    %4133 = vdwg.mxu0
    %4134 = vmatpush.bf16.msra.mxu0 %v2547
    %4135 = vmatpush.bf16.msra.mxu0 %v2539
    %4136 = vmatpush.bf16.msra.mxu0 %v2531
    %4137 = vmatpush.bf16.msra.mxu0 %v2523
    %4138 = vmatpush.bf16.msra.mxu0 %v2515
    %4139 = vmatpush.bf16.msra.mxu0 %v2507
    %4140 = vmatpush.bf16.msra.mxu0 %v2499
    %4141 = vmatpush.bf16.msra.mxu0 %v2491
    %4142 = vmatmul.bf16.gmra.mxu0 %v284
    %v4143 = vpop.f32.mrf.mxu0
    %v4144 = vadd.f32 %v4131, %v4143
    %v4145 = vpop.f32.mrf.mxu0
    %4146 = vdwg.mxu0
    %4147 = vmatpush.bf16.msra.mxu0 %v2611
    %4148 = vmatpush.bf16.msra.mxu0 %v2603
    %4149 = vmatpush.bf16.msra.mxu0 %v2595
    %4150 = vmatpush.bf16.msra.mxu0 %v2587
    %4151 = vmatpush.bf16.msra.mxu0 %v2579
    %4152 = vmatpush.bf16.msra.mxu0 %v2571
    %4153 = vmatpush.bf16.msra.mxu0 %v2563
    %4154 = vmatpush.bf16.msra.mxu0 %v2555
    %4155 = vmatmul.bf16.gmra.mxu0 %v285
    %v4156 = vpop.f32.mrf.mxu0
    %v4157 = vadd.f32 %v4144, %v4156
    %v4158 = vpop.f32.mrf.mxu0
    %4159 = vdwg.mxu0
    %4160 = vmatpush.bf16.msra.mxu0 %v2675
    %4161 = vmatpush.bf16.msra.mxu0 %v2667
    %4162 = vmatpush.bf16.msra.mxu0 %v2659
    %4163 = vmatpush.bf16.msra.mxu0 %v2651
    %4164 = vmatpush.bf16.msra.mxu0 %v2643
    %4165 = vmatpush.bf16.msra.mxu0 %v2635
    %4166 = vmatpush.bf16.msra.mxu0 %v2627
    %4167 = vmatpush.bf16.msra.mxu0 %v2619
    %4168 = vmatmul.bf16.gmra.mxu0 %v286
    %v4169 = vpop.f32.mrf.mxu0
    %v4170 = vadd.f32 %v4157, %v4169
    %v4171 = vpop.f32.mrf.mxu0
    %4172 = vdwg.mxu0
    %4173 = vmatpush.bf16.msra.mxu0 %v2739
    %4174 = vmatpush.bf16.msra.mxu0 %v2731
    %4175 = vmatpush.bf16.msra.mxu0 %v2723
    %4176 = vmatpush.bf16.msra.mxu0 %v2715
    %4177 = vmatpush.bf16.msra.mxu0 %v2707
    %4178 = vmatpush.bf16.msra.mxu0 %v2699
    %4179 = vmatpush.bf16.msra.mxu0 %v2691
    %4180 = vmatpush.bf16.msra.mxu0 %v2683
    %4181 = vmatmul.bf16.gmra.mxu0 %v287
    %v4182 = vpop.f32.mrf.mxu0
    %v4183 = vadd.f32 %v4170, %v4182
    %v4184 = vpop.f32.mrf.mxu0
    %4185 = vdwg.mxu0
    %4186 = vmatpush.bf16.msra.mxu0 %v2803
    %4187 = vmatpush.bf16.msra.mxu0 %v2795
    %4188 = vmatpush.bf16.msra.mxu0 %v2787
    %4189 = vmatpush.bf16.msra.mxu0 %v2779
    %4190 = vmatpush.bf16.msra.mxu0 %v2771
    %4191 = vmatpush.bf16.msra.mxu0 %v2763
    %4192 = vmatpush.bf16.msra.mxu0 %v2755
    %4193 = vmatpush.bf16.msra.mxu0 %v2747
    %4194 = vmatmul.bf16.gmra.mxu0 %v288
    %v4195 = vpop.f32.mrf.mxu0
    %v4196 = vadd.f32 %v4183, %v4195
    %v4197 = vpop.f32.mrf.mxu0
    %4198 = vdwg.mxu0
    %4199 = vmatpush.bf16.msra.mxu0 %v2867
    %4200 = vmatpush.bf16.msra.mxu0 %v2859
    %4201 = vmatpush.bf16.msra.mxu0 %v2851
    %4202 = vmatpush.bf16.msra.mxu0 %v2843
    %4203 = vmatpush.bf16.msra.mxu0 %v2835
    %4204 = vmatpush.bf16.msra.mxu0 %v2827
    %4205 = vmatpush.bf16.msra.mxu0 %v2819
    %4206 = vmatpush.bf16.msra.mxu0 %v2811
    %4207 = vmatmul.bf16.gmra.mxu0 %v289
    %v4208 = vpop.f32.mrf.mxu0
    %v4209 = vadd.f32 %v4196, %v4208
    %v4210 = vpop.f32.mrf.mxu0
    %4211 = vdwg.mxu0
    %v4212 = vmax.f32 %v3481, 0.0
    %v4213 = vmax.f32 %v3585, 0.0
    %v4214 = vmax.f32 %v3689, 0.0
    %v4215 = vmax.f32 %v3793, 0.0
    %v4216 = vmax.f32 %v3897, 0.0
    %v4217 = vmax.f32 %v4001, 0.0
    %v4218 = vmax.f32 %v4105, 0.0
    %v4219 = vmax.f32 %v4209, 0.0
    %v4220 = vpack.c.bf16 %v4212, %v4212
    %v4221 = vpack.c.bf16 %v4213, %v4213
    %v4222 = vpack.c.bf16 %v4214, %v4214
    %v4223 = vpack.c.bf16 %v4215, %v4215
    %v4224 = vpack.c.bf16 %v4216, %v4216
    %v4225 = vpack.c.bf16 %v4217, %v4217
    %v4226 = vpack.c.bf16 %v4218, %v4218
    %v4227 = vpack.c.bf16 %v4219, %v4219
    %v4228 = vld [vmem:[%s5] sm:$0xf]
    %v4229 = vld [vmem:[%s5 + $0x4] sm:$0xf]
    %v4230 = vld [vmem:[%s5 + $0x8] sm:$0xf]
    %v4231 = vld [vmem:[%s5 + $0xc] sm:$0xf]
    %v4232 = vld [vmem:[%s5 + $0x10] sm:$0xf]
    %v4233 = vld [vmem:[%s5 + $0x14] sm:$0xf]
    %v4234 = vld [vmem:[%s5 + $0x18] sm:$0xf]
    %v4235 = vld [vmem:[%s5 + $0x1c] sm:$0xf]
    %v4236 = vld [vmem:[%s5 + $0x20] sm:$0xf]
    %v4237 = vld [vmem:[%s5 + $0x24] sm:$0xf]
    %v4238 = vld [vmem:[%s5 + $0x28] sm:$0xf]
    %v4239 = vld [vmem:[%s5 + $0x2c] sm:$0xf]
    %v4240 = vld [vmem:[%s5 + $0x30] sm:$0xf]
    %v4241 = vld [vmem:[%s5 + $0x34] sm:$0xf]
    %v4242 = vld [vmem:[%s5 + $0x38] sm:$0xf]
    %v4243 = vld [vmem:[%s5 + $0x3c] sm:$0xf]
    %v4244 = vld [vmem:[%s5 + $0x40] sm:$0xf]
    %v4245 = vld [vmem:[%s5 + $0x44] sm:$0xf]
    %v4246 = vld [vmem:[%s5 + $0x48] sm:$0xf]
    %v4247 = vld [vmem:[%s5 + $0x4c] sm:$0xf]
    %v4248 = vld [vmem:[%s5 + $0x50] sm:$0xf]
    %v4249 = vld [vmem:[%s5 + $0x54] sm:$0xf]
    %v4250 = vld [vmem:[%s5 + $0x58] sm:$0xf]
    %v4251 = vld [vmem:[%s5 + $0x5c] sm:$0xf]
    %v4252 = vld [vmem:[%s5 + $0x60] sm:$0xf]
    %v4253 = vld [vmem:[%s5 + $0x64] sm:$0xf]
    %v4254 = vld [vmem:[%s5 + $0x68] sm:$0xf]
    %v4255 = vld [vmem:[%s5 + $0x6c] sm:$0xf]
    %v4256 = vld [vmem:[%s5 + $0x70] sm:$0xf]
    %v4257 = vld [vmem:[%s5 + $0x74] sm:$0xf]
    %v4258 = vld [vmem:[%s5 + $0x78] sm:$0xf]
    %v4259 = vld [vmem:[%s5 + $0x7c] sm:$0xf]
    %v4260 = vld [vmem:[%s5 + $0x80] sm:$0xf]
    %v4261 = vld [vmem:[%s5 + $0x84] sm:$0xf]
    %v4262 = vld [vmem:[%s5 + $0x88] sm:$0xf]
    %v4263 = vld [vmem:[%s5 + $0x8c] sm:$0xf]
    %v4264 = vld [vmem:[%s5 + $0x90] sm:$0xf]
    %v4265 = vld [vmem:[%s5 + $0x94] sm:$0xf]
    %v4266 = vld [vmem:[%s5 + $0x98] sm:$0xf]
    %v4267 = vld [vmem:[%s5 + $0x9c] sm:$0xf]
    %v4268 = vld [vmem:[%s5 + $0xa0] sm:$0xf]
    %v4269 = vld [vmem:[%s5 + $0xa4] sm:$0xf]
    %v4270 = vld [vmem:[%s5 + $0xa8] sm:$0xf]
    %v4271 = vld [vmem:[%s5 + $0xac] sm:$0xf]
    %v4272 = vld [vmem:[%s5 + $0xb0] sm:$0xf]
    %v4273 = vld [vmem:[%s5 + $0xb4] sm:$0xf]
    %v4274 = vld [vmem:[%s5 + $0xb8] sm:$0xf]
    %v4275 = vld [vmem:[%s5 + $0xbc] sm:$0xf]
    %v4276 = vld [vmem:[%s5 + $0xc0] sm:$0xf]
    %v4277 = vld [vmem:[%s5 + $0xc4] sm:$0xf]
    %v4278 = vld [vmem:[%s5 + $0xc8] sm:$0xf]
    %v4279 = vld [vmem:[%s5 + $0xcc] sm:$0xf]
    %v4280 = vld [vmem:[%s5 + $0xd0] sm:$0xf]
    %v4281 = vld [vmem:[%s5 + $0xd4] sm:$0xf]
    %v4282 = vld [vmem:[%s5 + $0xd8] sm:$0xf]
    %v4283 = vld [vmem:[%s5 + $0xdc] sm:$0xf]
    %v4284 = vld [vmem:[%s5 + $0xe0] sm:$0xf]
    %v4285 = vld [vmem:[%s5 + $0xe4] sm:$0xf]
    %v4286 = vld [vmem:[%s5 + $0xe8] sm:$0xf]
    %v4287 = vld [vmem:[%s5 + $0xec] sm:$0xf]
    %v4288 = vld [vmem:[%s5 + $0xf0] sm:$0xf]
    %v4289 = vld [vmem:[%s5 + $0xf4] sm:$0xf]
    %v4290 = vld [vmem:[%s5 + $0xf8] sm:$0xf]
    %v4291 = vld [vmem:[%s5 + $0xfc] sm:$0xf]
    %v4292 = vld [vmem:[%s5 + $0x100] sm:$0xf]
    %v4293 = vld [vmem:[%s5 + $0x104] sm:$0xf]
    %v4294 = vld [vmem:[%s5 + $0x108] sm:$0xf]
    %v4295 = vld [vmem:[%s5 + $0x10c] sm:$0xf]
    %v4296 = vld [vmem:[%s5 + $0x110] sm:$0xf]
    %v4297 = vld [vmem:[%s5 + $0x114] sm:$0xf]
    %v4298 = vld [vmem:[%s5 + $0x118] sm:$0xf]
    %v4299 = vld [vmem:[%s5 + $0x11c] sm:$0xf]
    %v4300 = vld [vmem:[%s5 + $0x120] sm:$0xf]
    %v4301 = vld [vmem:[%s5 + $0x124] sm:$0xf]
    %v4302 = vld [vmem:[%s5 + $0x128] sm:$0xf]
    %v4303 = vld [vmem:[%s5 + $0x12c] sm:$0xf]
    %v4304 = vld [vmem:[%s5 + $0x130] sm:$0xf]
    %v4305 = vld [vmem:[%s5 + $0x134] sm:$0xf]
    %v4306 = vld [vmem:[%s5 + $0x138] sm:$0xf]
    %v4307 = vld [vmem:[%s5 + $0x13c] sm:$0xf]
    %v4308 = vld [vmem:[%s5 + $0x140] sm:$0xf]
    %v4309 = vld [vmem:[%s5 + $0x144] sm:$0xf]
    %v4310 = vld [vmem:[%s5 + $0x148] sm:$0xf]
    %v4311 = vld [vmem:[%s5 + $0x14c] sm:$0xf]
    %v4312 = vld [vmem:[%s5 + $0x150] sm:$0xf]
    %v4313 = vld [vmem:[%s5 + $0x154] sm:$0xf]
    %v4314 = vld [vmem:[%s5 + $0x158] sm:$0xf]
    %v4315 = vld [vmem:[%s5 + $0x15c] sm:$0xf]
    %v4316 = vld [vmem:[%s5 + $0x160] sm:$0xf]
    %v4317 = vld [vmem:[%s5 + $0x164] sm:$0xf]
    %v4318 = vld [vmem:[%s5 + $0x168] sm:$0xf]
    %v4319 = vld [vmem:[%s5 + $0x16c] sm:$0xf]
    %v4320 = vld [vmem:[%s5 + $0x170] sm:$0xf]
    %v4321 = vld [vmem:[%s5 + $0x174] sm:$0xf]
    %v4322 = vld [vmem:[%s5 + $0x178] sm:$0xf]
    %v4323 = vld [vmem:[%s5 + $0x17c] sm:$0xf]
    %v4324 = vld [vmem:[%s5 + $0x180] sm:$0xf]
    %v4325 = vld [vmem:[%s5 + $0x184] sm:$0xf]
    %v4326 = vld [vmem:[%s5 + $0x188] sm:$0xf]
    %v4327 = vld [vmem:[%s5 + $0x18c] sm:$0xf]
    %v4328 = vld [vmem:[%s5 + $0x190] sm:$0xf]
    %v4329 = vld [vmem:[%s5 + $0x194] sm:$0xf]
    %v4330 = vld [vmem:[%s5 + $0x198] sm:$0xf]
    %v4331 = vld [vmem:[%s5 + $0x19c] sm:$0xf]
    %v4332 = vld [vmem:[%s5 + $0x1a0] sm:$0xf]
    %v4333 = vld [vmem:[%s5 + $0x1a4] sm:$0xf]
    %v4334 = vld [vmem:[%s5 + $0x1a8] sm:$0xf]
    %v4335 = vld [vmem:[%s5 + $0x1ac] sm:$0xf]
    %v4336 = vld [vmem:[%s5 + $0x1b0] sm:$0xf]
    %v4337 = vld [vmem:[%s5 + $0x1b4] sm:$0xf]
    %v4338 = vld [vmem:[%s5 + $0x1b8] sm:$0xf]
    %v4339 = vld [vmem:[%s5 + $0x1bc] sm:$0xf]
    %v4340 = vld [vmem:[%s5 + $0x1c0] sm:$0xf]
    %v4341 = vld [vmem:[%s5 + $0x1c4] sm:$0xf]
    %v4342 = vld [vmem:[%s5 + $0x1c8] sm:$0xf]
    %v4343 = vld [vmem:[%s5 + $0x1cc] sm:$0xf]
    %v4344 = vld [vmem:[%s5 + $0x1d0] sm:$0xf]
    %v4345 = vld [vmem:[%s5 + $0x1d4] sm:$0xf]
    %v4346 = vld [vmem:[%s5 + $0x1d8] sm:$0xf]
    %v4347 = vld [vmem:[%s5 + $0x1dc] sm:$0xf]
    %v4348 = vld [vmem:[%s5 + $0x1e0] sm:$0xf]
    %v4349 = vld [vmem:[%s5 + $0x1e4] sm:$0xf]
    %v4350 = vld [vmem:[%s5 + $0x1e8] sm:$0xf]
    %v4351 = vld [vmem:[%s5 + $0x1ec] sm:$0xf]
    %v4352 = vld [vmem:[%s5 + $0x1f0] sm:$0xf]
    %v4353 = vld [vmem:[%s5 + $0x1f4] sm:$0xf]
    %v4354 = vld [vmem:[%s5 + $0x1f8] sm:$0xf]
    %v4355 = vld [vmem:[%s5 + $0x1fc] sm:$0xf]
    %v4356 = vld [vmem:[#allocation9] sm:$0x1]
    %v4358 = vperm.slane %v4356, 0
    %v4488 = vunpack.c.l.b16 %v4228
    %v4489 = vunpack.c.l.b16 %v4229
    %v4490 = vunpack.c.l.b16 %v4230
    %v4491 = vunpack.c.l.b16 %v4231
    %v4492 = vunpack.c.l.b16 %v4232
    %v4493 = vunpack.c.l.b16 %v4233
    %v4494 = vunpack.c.l.b16 %v4234
    %v4495 = vunpack.c.l.b16 %v4235
    %v4496 = vunpack.c.l.b16 %v4236
    %v4497 = vunpack.c.l.b16 %v4237
    %v4498 = vunpack.c.l.b16 %v4238
    %v4499 = vunpack.c.l.b16 %v4239
    %v4500 = vunpack.c.l.b16 %v4240
    %v4501 = vunpack.c.l.b16 %v4241
    %v4502 = vunpack.c.l.b16 %v4242
    %v4503 = vunpack.c.l.b16 %v4243
    %v4504 = vunpack.c.l.b16 %v4244
    %v4505 = vunpack.c.l.b16 %v4245
    %v4506 = vunpack.c.l.b16 %v4246
    %v4507 = vunpack.c.l.b16 %v4247
    %v4508 = vunpack.c.l.b16 %v4248
    %v4509 = vunpack.c.l.b16 %v4249
    %v4510 = vunpack.c.l.b16 %v4250
    %v4511 = vunpack.c.l.b16 %v4251
    %v4512 = vunpack.c.l.b16 %v4252
    %v4513 = vunpack.c.l.b16 %v4253
    %v4514 = vunpack.c.l.b16 %v4254
    %v4515 = vunpack.c.l.b16 %v4255
    %v4516 = vunpack.c.l.b16 %v4256
    %v4517 = vunpack.c.l.b16 %v4257
    %v4518 = vunpack.c.l.b16 %v4258
    %v4519 = vunpack.c.l.b16 %v4259
    %v4520 = vunpack.c.l.b16 %v4260
    %v4521 = vunpack.c.l.b16 %v4261
    %v4522 = vunpack.c.l.b16 %v4262
    %v4523 = vunpack.c.l.b16 %v4263
    %v4524 = vunpack.c.l.b16 %v4264
    %v4525 = vunpack.c.l.b16 %v4265
    %v4526 = vunpack.c.l.b16 %v4266
    %v4527 = vunpack.c.l.b16 %v4267
    %v4528 = vunpack.c.l.b16 %v4268
    %v4529 = vunpack.c.l.b16 %v4269
    %v4530 = vunpack.c.l.b16 %v4270
    %v4531 = vunpack.c.l.b16 %v4271
    %v4532 = vunpack.c.l.b16 %v4272
    %v4533 = vunpack.c.l.b16 %v4273
    %v4534 = vunpack.c.l.b16 %v4274
    %v4535 = vunpack.c.l.b16 %v4275
    %v4536 = vunpack.c.l.b16 %v4276
    %v4537 = vunpack.c.l.b16 %v4277
    %v4538 = vunpack.c.l.b16 %v4278
    %v4539 = vunpack.c.l.b16 %v4279
    %v4540 = vunpack.c.l.b16 %v4280
    %v4541 = vunpack.c.l.b16 %v4281
    %v4542 = vunpack.c.l.b16 %v4282
    %v4543 = vunpack.c.l.b16 %v4283
    %v4544 = vunpack.c.l.b16 %v4284
    %v4545 = vunpack.c.l.b16 %v4285
    %v4546 = vunpack.c.l.b16 %v4286
    %v4547 = vunpack.c.l.b16 %v4287
    %v4548 = vunpack.c.l.b16 %v4288
    %v4549 = vunpack.c.l.b16 %v4289
    %v4550 = vunpack.c.l.b16 %v4290
    %v4551 = vunpack.c.l.b16 %v4291
    %v4552 = vunpack.c.l.b16 %v4292
    %v4553 = vunpack.c.l.b16 %v4293
    %v4554 = vunpack.c.l.b16 %v4294
    %v4555 = vunpack.c.l.b16 %v4295
    %v4556 = vunpack.c.l.b16 %v4296
    %v4557 = vunpack.c.l.b16 %v4297
    %v4558 = vunpack.c.l.b16 %v4298
    %v4559 = vunpack.c.l.b16 %v4299
    %v4560 = vunpack.c.l.b16 %v4300
    %v4561 = vunpack.c.l.b16 %v4301
    %v4562 = vunpack.c.l.b16 %v4302
    %v4563 = vunpack.c.l.b16 %v4303
    %v4564 = vunpack.c.l.b16 %v4304
    %v4565 = vunpack.c.l.b16 %v4305
    %v4566 = vunpack.c.l.b16 %v4306
    %v4567 = vunpack.c.l.b16 %v4307
    %v4568 = vunpack.c.l.b16 %v4308
    %v4569 = vunpack.c.l.b16 %v4309
    %v4570 = vunpack.c.l.b16 %v4310
    %v4571 = vunpack.c.l.b16 %v4311
    %v4572 = vunpack.c.l.b16 %v4312
    %v4573 = vunpack.c.l.b16 %v4313
    %v4574 = vunpack.c.l.b16 %v4314
    %v4575 = vunpack.c.l.b16 %v4315
    %v4576 = vunpack.c.l.b16 %v4316
    %v4577 = vunpack.c.l.b16 %v4317
    %v4578 = vunpack.c.l.b16 %v4318
    %v4579 = vunpack.c.l.b16 %v4319
    %v4580 = vunpack.c.l.b16 %v4320
    %v4581 = vunpack.c.l.b16 %v4321
    %v4582 = vunpack.c.l.b16 %v4322
    %v4583 = vunpack.c.l.b16 %v4323
    %v4584 = vunpack.c.l.b16 %v4324
    %v4585 = vunpack.c.l.b16 %v4325
    %v4586 = vunpack.c.l.b16 %v4326
    %v4587 = vunpack.c.l.b16 %v4327
    %v4588 = vunpack.c.l.b16 %v4328
    %v4589 = vunpack.c.l.b16 %v4329
    %v4590 = vunpack.c.l.b16 %v4330
    %v4591 = vunpack.c.l.b16 %v4331
    %v4592 = vunpack.c.l.b16 %v4332
    %v4593 = vunpack.c.l.b16 %v4333
    %v4594 = vunpack.c.l.b16 %v4334
    %v4595 = vunpack.c.l.b16 %v4335
    %v4596 = vunpack.c.l.b16 %v4336
    %v4597 = vunpack.c.l.b16 %v4337
    %v4598 = vunpack.c.l.b16 %v4338
    %v4599 = vunpack.c.l.b16 %v4339
    %v4600 = vunpack.c.l.b16 %v4340
    %v4601 = vunpack.c.l.b16 %v4341
    %v4602 = vunpack.c.l.b16 %v4342
    %v4603 = vunpack.c.l.b16 %v4343
    %v4604 = vunpack.c.l.b16 %v4344
    %v4605 = vunpack.c.l.b16 %v4345
    %v4606 = vunpack.c.l.b16 %v4346
    %v4607 = vunpack.c.l.b16 %v4347
    %v4608 = vunpack.c.l.b16 %v4348
    %v4609 = vunpack.c.l.b16 %v4349
    %v4610 = vunpack.c.l.b16 %v4350
    %v4611 = vunpack.c.l.b16 %v4351
    %v4612 = vunpack.c.l.b16 %v4352
    %v4613 = vunpack.c.l.b16 %v4353
    %v4614 = vunpack.c.l.b16 %v4354
    %v4615 = vunpack.c.l.b16 %v4355
    %v4616 = vpack.c.b16 %v4489, %v4488
    %v4617 = vpack.c.b16 %v4491, %v4490
    %v4618 = vpack.c.b16 %v4493, %v4492
    %v4619 = vpack.c.b16 %v4495, %v4494
    %v4620 = vpack.c.b16 %v4497, %v4496
    %v4621 = vpack.c.b16 %v4499, %v4498
    %v4622 = vpack.c.b16 %v4501, %v4500
    %v4623 = vpack.c.b16 %v4503, %v4502
    %v4624 = vpack.c.b16 %v4505, %v4504
    %v4625 = vpack.c.b16 %v4507, %v4506
    %v4626 = vpack.c.b16 %v4509, %v4508
    %v4627 = vpack.c.b16 %v4511, %v4510
    %v4628 = vpack.c.b16 %v4513, %v4512
    %v4629 = vpack.c.b16 %v4515, %v4514
    %v4630 = vpack.c.b16 %v4517, %v4516
    %v4631 = vpack.c.b16 %v4519, %v4518
    %v4632 = vpack.c.b16 %v4521, %v4520
    %v4633 = vpack.c.b16 %v4523, %v4522
    %v4634 = vpack.c.b16 %v4525, %v4524
    %v4635 = vpack.c.b16 %v4527, %v4526
    %v4636 = vpack.c.b16 %v4529, %v4528
    %v4637 = vpack.c.b16 %v4531, %v4530
    %v4638 = vpack.c.b16 %v4533, %v4532
    %v4639 = vpack.c.b16 %v4535, %v4534
    %v4640 = vpack.c.b16 %v4537, %v4536
    %v4641 = vpack.c.b16 %v4539, %v4538
    %v4642 = vpack.c.b16 %v4541, %v4540
    %v4643 = vpack.c.b16 %v4543, %v4542
    %v4644 = vpack.c.b16 %v4545, %v4544
    %v4645 = vpack.c.b16 %v4547, %v4546
    %v4646 = vpack.c.b16 %v4549, %v4548
    %v4647 = vpack.c.b16 %v4551, %v4550
    %v4648 = vpack.c.b16 %v4553, %v4552
    %v4649 = vpack.c.b16 %v4555, %v4554
    %v4650 = vpack.c.b16 %v4557, %v4556
    %v4651 = vpack.c.b16 %v4559, %v4558
    %v4652 = vpack.c.b16 %v4561, %v4560
    %v4653 = vpack.c.b16 %v4563, %v4562
    %v4654 = vpack.c.b16 %v4565, %v4564
    %v4655 = vpack.c.b16 %v4567, %v4566
    %v4656 = vpack.c.b16 %v4569, %v4568
    %v4657 = vpack.c.b16 %v4571, %v4570
    %v4658 = vpack.c.b16 %v4573, %v4572
    %v4659 = vpack.c.b16 %v4575, %v4574
    %v4660 = vpack.c.b16 %v4577, %v4576
    %v4661 = vpack.c.b16 %v4579, %v4578
    %v4662 = vpack.c.b16 %v4581, %v4580
    %v4663 = vpack.c.b16 %v4583, %v4582
    %v4664 = vpack.c.b16 %v4585, %v4584
    %v4665 = vpack.c.b16 %v4587, %v4586
    %v4666 = vpack.c.b16 %v4589, %v4588
    %v4667 = vpack.c.b16 %v4591, %v4590
    %v4668 = vpack.c.b16 %v4593, %v4592
    %v4669 = vpack.c.b16 %v4595, %v4594
    %v4670 = vpack.c.b16 %v4597, %v4596
    %v4671 = vpack.c.b16 %v4599, %v4598
    %v4672 = vpack.c.b16 %v4601, %v4600
    %v4673 = vpack.c.b16 %v4603, %v4602
    %v4674 = vpack.c.b16 %v4605, %v4604
    %v4675 = vpack.c.b16 %v4607, %v4606
    %v4676 = vpack.c.b16 %v4609, %v4608
    %v4677 = vpack.c.b16 %v4611, %v4610
    %v4678 = vpack.c.b16 %v4613, %v4612
    %v4679 = vpack.c.b16 %v4615, %v4614
    %4744 = vmatpush.bf16.msra.mxu0 %v4623
    %4745 = vmatpush.bf16.msra.mxu0 %v4622
    %4746 = vmatpush.bf16.msra.mxu0 %v4621
    %4747 = vmatpush.bf16.msra.mxu0 %v4620
    %4748 = vmatpush.bf16.msra.mxu0 %v4619
    %4749 = vmatpush.bf16.msra.mxu0 %v4618
    %4750 = vmatpush.bf16.msra.mxu0 %v4617
    %4751 = vmatpush.bf16.msra.mxu0 %v4616
    %4752 = vmatmul.bf16.gmra.mxu0 %v4220
    %v4753 = vpop.f32.mrf.mxu0
    %v4754 = vadd.f32 %v4358, %v4753
    %v4755 = vpop.f32.mrf.mxu0
    %4756 = vdwg.mxu0
    %4757 = vmatpush.bf16.msra.mxu0 %v4631
    %4758 = vmatpush.bf16.msra.mxu0 %v4630
    %4759 = vmatpush.bf16.msra.mxu0 %v4629
    %4760 = vmatpush.bf16.msra.mxu0 %v4628
    %4761 = vmatpush.bf16.msra.mxu0 %v4627
    %4762 = vmatpush.bf16.msra.mxu0 %v4626
    %4763 = vmatpush.bf16.msra.mxu0 %v4625
    %4764 = vmatpush.bf16.msra.mxu0 %v4624
    %4765 = vmatmul.bf16.gmra.mxu0 %v4221
    %v4766 = vpop.f32.mrf.mxu0
    %v4767 = vadd.f32 %v4754, %v4766
    %v4768 = vpop.f32.mrf.mxu0
    %4769 = vdwg.mxu0
    %4770 = vmatpush.bf16.msra.mxu0 %v4639
    %4771 = vmatpush.bf16.msra.mxu0 %v4638
    %4772 = vmatpush.bf16.msra.mxu0 %v4637
    %4773 = vmatpush.bf16.msra.mxu0 %v4636
    %4774 = vmatpush.bf16.msra.mxu0 %v4635
    %4775 = vmatpush.bf16.msra.mxu0 %v4634
    %4776 = vmatpush.bf16.msra.mxu0 %v4633
    %4777 = vmatpush.bf16.msra.mxu0 %v4632
    %4778 = vmatmul.bf16.gmra.mxu0 %v4222
    %v4779 = vpop.f32.mrf.mxu0
    %v4780 = vadd.f32 %v4767, %v4779
    %v4781 = vpop.f32.mrf.mxu0
    %4782 = vdwg.mxu0
    %4783 = vmatpush.bf16.msra.mxu0 %v4647
    %4784 = vmatpush.bf16.msra.mxu0 %v4646
    %4785 = vmatpush.bf16.msra.mxu0 %v4645
    %4786 = vmatpush.bf16.msra.mxu0 %v4644
    %4787 = vmatpush.bf16.msra.mxu0 %v4643
    %4788 = vmatpush.bf16.msra.mxu0 %v4642
    %4789 = vmatpush.bf16.msra.mxu0 %v4641
    %4790 = vmatpush.bf16.msra.mxu0 %v4640
    %4791 = vmatmul.bf16.gmra.mxu0 %v4223
    %v4792 = vpop.f32.mrf.mxu0
    %v4793 = vadd.f32 %v4780, %v4792
    %v4794 = vpop.f32.mrf.mxu0
    %4795 = vdwg.mxu0
    %4796 = vmatpush.bf16.msra.mxu0 %v4655
    %4797 = vmatpush.bf16.msra.mxu0 %v4654
    %4798 = vmatpush.bf16.msra.mxu0 %v4653
    %4799 = vmatpush.bf16.msra.mxu0 %v4652
    %4800 = vmatpush.bf16.msra.mxu0 %v4651
    %4801 = vmatpush.bf16.msra.mxu0 %v4650
    %4802 = vmatpush.bf16.msra.mxu0 %v4649
    %4803 = vmatpush.bf16.msra.mxu0 %v4648
    %4804 = vmatmul.bf16.gmra.mxu0 %v4224
    %v4805 = vpop.f32.mrf.mxu0
    %v4806 = vadd.f32 %v4793, %v4805
    %v4807 = vpop.f32.mrf.mxu0
    %4808 = vdwg.mxu0
    %4809 = vmatpush.bf16.msra.mxu0 %v4663
    %4810 = vmatpush.bf16.msra.mxu0 %v4662
    %4811 = vmatpush.bf16.msra.mxu0 %v4661
    %4812 = vmatpush.bf16.msra.mxu0 %v4660
    %4813 = vmatpush.bf16.msra.mxu0 %v4659
    %4814 = vmatpush.bf16.msra.mxu0 %v4658
    %4815 = vmatpush.bf16.msra.mxu0 %v4657
    %4816 = vmatpush.bf16.msra.mxu0 %v4656
    %4817 = vmatmul.bf16.gmra.mxu0 %v4225
    %v4818 = vpop.f32.mrf.mxu0
    %v4819 = vadd.f32 %v4806, %v4818
    %v4820 = vpop.f32.mrf.mxu0
    %4821 = vdwg.mxu0
    %4822 = vmatpush.bf16.msra.mxu0 %v4671
    %4823 = vmatpush.bf16.msra.mxu0 %v4670
    %4824 = vmatpush.bf16.msra.mxu0 %v4669
    %4825 = vmatpush.bf16.msra.mxu0 %v4668
    %4826 = vmatpush.bf16.msra.mxu0 %v4667
    %4827 = vmatpush.bf16.msra.mxu0 %v4666
    %4828 = vmatpush.bf16.msra.mxu0 %v4665
    %4829 = vmatpush.bf16.msra.mxu0 %v4664
    %4830 = vmatmul.bf16.gmra.mxu0 %v4226
    %v4831 = vpop.f32.mrf.mxu0
    %v4832 = vadd.f32 %v4819, %v4831
    %v4833 = vpop.f32.mrf.mxu0
    %4834 = vdwg.mxu0
    %4835 = vmatpush.bf16.msra.mxu0 %v4679
    %4836 = vmatpush.bf16.msra.mxu0 %v4678
    %4837 = vmatpush.bf16.msra.mxu0 %v4677
    %4838 = vmatpush.bf16.msra.mxu0 %v4676
    %4839 = vmatpush.bf16.msra.mxu0 %v4675
    %4840 = vmatpush.bf16.msra.mxu0 %v4674
    %4841 = vmatpush.bf16.msra.mxu0 %v4673
    %4842 = vmatpush.bf16.msra.mxu0 %v4672
    %4843 = vmatmul.bf16.gmra.mxu0 %v4227
    %v4844 = vpop.f32.mrf.mxu0
    %v4845 = vadd.f32 %v4832, %v4844
    %v4846 = vpop.f32.mrf.mxu0
    %4847 = vdwg.mxu0
    %v4848 = vsub.f32 0.0, %v4845
    %v4849 = vmul.f32 %v4848, 1.442695
    %v4850 = vpow.pop %v4849
    %v4851 = vadd.f32 %v4850, 1.0
    %v4852 = vrcp.pop %v4851
    %v4853 = vmul.f32 %v4851, %v4852
    %v4854 = vsub.f32 1.0, %v4853
    %v4855 = vmul.f32 %v4852, %v4854
    %v4856 = vadd.f32 %v4852, %v4855
    %vm4857 = vweird.f32 %v4851
    %vm4858 = vweird.f32 %v4852
    %vm4859 = vmor %vm4857, %vm4858
    %v4860 = vsel %vm4859, %v4852, %v4856
    %v4861 = vand.u32 2147483647, %v4851
    %vm4862 = vcmp.eq.f32.partialorder %v4861, 8.507059e+37
    %v4863 = vand.u32 %v4851, 2147483648
    %v4864 = vor.u32 1.1754944e-38, %v4863
    %v4865 = vsel %vm4862, %v4864, %v4860
    %v4866 = vmul.f32 1.0, %v4865
    %4867 = vst.msk [vmem:[%s7] sm:$0xff] %vm141, %v4866
    // Predicated region
    $region50: #{discriminator_forward.1} parent=1 // pred_check
      _
    $region51: #{discriminator_forward.1} parent=1 // pred_check_branch
      %4869 = sbr.rel (0) target = $region53
    $region52: #{discriminator_forward.1} parent=1 // pred_region
      _
    $region53: #{discriminator_forward.1} parent=1 // pred_fallthru
      _
    // Predicated region
    $region54: #{discriminator_forward.1} parent=1 // pred_check
      _
    $region55: #{discriminator_forward.1} parent=1 // pred_check_branch
      %4871 = sbr.rel (0) target = $region57
    $region56: #{discriminator_forward.1} parent=1 // pred_region
      _
    $region57: #{discriminator_forward.1} parent=1 // pred_fallthru
      _
    %4872 = vsyncpa [#allocation3], 1
    %4873 = vsyncpa [#allocation5], 1
    %4874 = vsyncpa [#allocation8], 1

</llo_original>
